<compile_context>
chip_gen: v7x
topology: tpu7x:2x2x1
jax: 0.10.0
libtpu: 0.0.40
codegen_flags: <defaults>
</compile_context>

<pallas_src>
import functools

import jax
import jax.numpy as jnp
from jax import lax
from jax.experimental import pallas as pl
from jax.experimental.pallas import tpu as pltpu

FEATURE = 64          # hidden feature channels (from the PyTorch module)
NEG_SLOPE = 0.2       # LeakyReLU negative slope
LANE = 128            # TPU lane width
_VMEM_BUDGET = 20 * 1024 * 1024   # per-step working-set budget (v7x-safe)


def _leaky(v):
    return jnp.where(v >= 0, v, NEG_SLOPE * v)


def _resblock_kernel(W, F,
                     xcol_ref, w1_ref, b1_ref, w2_ref, b2_ref,
                     w3x_ref, w3r_ref, b3_ref,
                     out_ref, r_ref, col_ref):
    """One (batch, strip) grid step.

    xcol_ref : ((TH+4)*W, 9*Cin) bf16  im2col of x over the halo-extended strip
    r_ref    : ((TH+4)*W, F)     f32   flat residual scratch (r1, then r2)
    col_ref  : ((TH+2)*W, 9*F)   bf16  im2col slab for conv2 / conv3
    out_ref  : (TH*W, CoutP)     f32   lane-dense output block
    """
    s = pl.program_id(1)
    ns = pl.num_programs(1)

    n_r1 = xcol_ref.shape[0]          # (TH+4)*W : rows carrying conv1 output
    n_r2 = n_r1 - 2 * W               # (TH+2)*W : rows carrying conv2 output
    n_out = out_ref.shape[0]          # TH*W     : rows written this step

    # ---- conv1 + LeakyReLU over the halo-extended strip (K = 9*Cin) --------
    r1 = _leaky(jnp.dot(xcol_ref[...], w1_ref[...],
                        preferred_element_type=jnp.float32) + b1_ref[...])
    r_ref[...] = r1

    # Halo rows that fall outside the image must be zero so the downstream
    # convs see proper zero padding (only the first / last strip has them).
    @pl.when(s == 0)
    def _():
        r_ref[0:2 * W, :] = jnp.zeros((2 * W, F), r_ref.dtype)

    @pl.when(s == ns - 1)
    def _():
        r_ref[n_r1 - 2 * W:n_r1, :] = jnp.zeros((2 * W, F), r_ref.dtype)

    # ---- flat im2col: vertical taps = aligned sublane slices (offset dy*W),
    #      horizontal taps = pltpu.roll(+/-1 row) + column masks. ------------
    def build_col(n_pix):
        colid = lax.broadcasted_iota(jnp.int32, (n_pix, 1), 0) % W
        not_left = colid != 0            # dx = 0 taps read column x-1
        not_right = colid != (W - 1)     # dx = 2 taps read column x+1
        taps = []
        for dy in range(3):
            base = r_ref[dy * W:dy * W + n_pix, :]      # aligned sublane slice
            for dx in range(3):
                if dx == 1:
                    t = base
                elif dx == 0:
                    # t[p] = base[p-1]; the wrapped element lands on a masked
                    # (column 0) pixel, so the circular wrap is harmless.
                    t = jnp.where(not_left, pltpu.roll(base, 1, 0), 0.0)
                else:
                    # t[p] = base[p+1]; wrap lands on a masked (column W-1) px.
                    t = jnp.where(not_right,
                                  pltpu.roll(base, n_pix - 1, 0), 0.0)
                taps.append(t.astype(col_ref.dtype))
        # 128-lane-aligned stores: 4 dense tap pairs + one 64-lane tail.
        for p in range(4):
            col_ref[0:n_pix, 2 * p * F:(2 * p + 2) * F] = jnp.concatenate(
                [taps[2 * p], taps[2 * p + 1]], axis=1)
        col_ref[0:n_pix, 8 * F:9 * F] = taps[8]

    # ---- conv2 + LeakyReLU over the 1-row-halo rows (K = 9*F) --------------
    build_col(n_r2)
    r2 = _leaky(jnp.dot(col_ref[0:n_r2, :], w2_ref[...],
                        preferred_element_type=jnp.float32) + b2_ref[...])
    r_ref[0:n_r2, :] = r2

    @pl.when(s == 0)
    def _():
        r_ref[0:W, :] = jnp.zeros((W, F), r_ref.dtype)

    @pl.when(s == ns - 1)
    def _():
        r_ref[n_r2 - W:n_r2, :] = jnp.zeros((W, F), r_ref.dtype)

    # ---- conv3(concat(x, r2)) == conv3_r(r2) + conv3_x(x) -------------------
    build_col(n_out)
    y = jnp.dot(col_ref[0:n_out, :], w3r_ref[...],
                preferred_element_type=jnp.float32)
    y = y + jnp.dot(xcol_ref[2 * W:2 * W + n_out, :], w3x_ref[...],
                    preferred_element_type=jnp.float32)
    out_ref[...] = (y + b3_ref[...]).astype(out_ref.dtype)


def _tpu_kind():
    try:
        return jax.devices()[0].device_kind.lower()
    except Exception:
        return ""


def _choose_strip_rows(H, W, Cin, F, CoutP):
    """Largest divisor of H whose per-step working set fits the VMEM budget."""
    per_px = (2 * 9 * Cin * 2      # xcol input block, bf16, double-buffered
              + 2 * CoutP * 4      # output block, f32, double-buffered
              + 9 * F * 2          # im2col slab, bf16
              + F * 4)             # flat residual scratch, f32
    max_rows = max(1, _VMEM_BUDGET // (per_px * max(W, 1)))
    target = min(H, max_rows)
    th = 1
    for d in range(1, H + 1):
        if H % d == 0 and d <= target:
            th = d
    return th


def resblock_pallas(x_nhwc, params, *, strip_rows=None):
    """x_nhwc: (B, H, W, Cin) f32; params = (w1, b1, w2, b2, w3, b3) in HWIO.

    Returns (B, H, W, Cout), matching the PyTorch ResBlock forward.
    """
    w1, b1, w2, b2, w3, b3 = params
    B, H, W, Cin = x_nhwc.shape
    F = w1.shape[-1]
    Cout = w3.shape[-1]
    CoutP = ((Cout + LANE - 1) // LANE) * LANE

    TH = strip_rows if strip_rows is not None else _choose_strip_rows(
        H, W, Cin, F, CoutP)
    if W % 8 != 0 or H % TH != 0:
        TH = H                                   # whole-frame fallback
    NS = H // TH

    # ---- weights -> dense bf16 2D slabs (row order (ky, kx, cin)), biases f32.
    w3x = w3[:, :, :Cin, :]                      # forward concat order: (x, r)
    w3r = w3[:, :, Cin:, :]
    padc = ((0, 0), (0, 0), (0, 0), (0, CoutP - Cout))
    w1f = w1.reshape(9 * Cin, F).astype(jnp.bfloat16)
    w2f = w2.reshape(9 * F, F).astype(jnp.bfloat16)
    w3xf = jnp.pad(w3x, padc).reshape(9 * Cin, CoutP).astype(jnp.bfloat16)
    w3rf = jnp.pad(w3r, padc).reshape(9 * F, CoutP).astype(jnp.bfloat16)
    b1r = b1.reshape(1, F).astype(jnp.float32)
    b2r = b2.reshape(1, F).astype(jnp.float32)
    b3r = jnp.pad(b3, (0, CoutP - Cout)).reshape(1, CoutP).astype(jnp.float32)

    # ---- x-path im2col in XLA (Cin is tiny); each strip carries a 2-row
    #      recompute halo, duplicated in HBM so every block is rectangular.
    xpad3 = jnp.pad(x_nhwc, ((0, 0), (3, 3), (1, 1), (0, 0)))
    taps = [xpad3[:, dy:dy + H + 4, dx:dx + W, :]
            for dy in range(3) for dx in range(3)]
    xcol = jnp.concatenate(taps, axis=-1)                 # (B, H+4, W, 9*Cin)
    xcol_s = jnp.stack([xcol[:, s * TH:s * TH + TH + 4] for s in range(NS)],
                       axis=1)                            # (B, NS, TH+4, W, 9Cin)
    xcol_s = xcol_s.reshape(B, NS, (TH + 4) * W, 9 * Cin).astype(jnp.bfloat16)

    # ---- per-generation knobs ----------------------------------------------
    kind = _tpu_kind()
    is_v7 = ("v7" in kind) or ("7x" in kind)
    vmem_limit = (48 if is_v7 else 96) * 1024 * 1024
    dim_sem = ((pltpu.CORE_PARALLEL, pltpu.ARBITRARY) if is_v7
               else (pltpu.PARALLEL, pltpu.PARALLEL))

    def const_spec(arr):
        nd = arr.ndim
        return pl.BlockSpec(arr.shape, lambda b, s, _nd=nd: (0,) * _nd)

    kernel = functools.partial(_resblock_kernel, W, F)

    out_flat = pl.pallas_call(
        kernel,
        out_shape=jax.ShapeDtypeStruct((B, H * W, CoutP), x_nhwc.dtype),
        grid_spec=pltpu.PrefetchScalarGridSpec(
            num_scalar_prefetch=0,
            grid=(B, NS),
            in_specs=[
                pl.BlockSpec((None, None, (TH + 4) * W, 9 * Cin),
                             lambda b, s: (b, s, 0, 0)),
                const_spec(w1f), const_spec(b1r),
                const_spec(w2f), const_spec(b2r),
                const_spec(w3xf), const_spec(w3rf), const_spec(b3r),
            ],
            out_specs=pl.BlockSpec((None, TH * W, CoutP),
                                   lambda b, s: (b, s, 0)),
            scratch_shapes=[
                pltpu.VMEM(((TH + 4) * W, F), jnp.float32),       # r1 / r2
                pltpu.VMEM(((TH + 2) * W, 9 * F), jnp.bfloat16),  # im2col slab
            ],
        ),
        compiler_params=pltpu.CompilerParams(
            dimension_semantics=dim_sem,
            vmem_limit_bytes=vmem_limit),
    )(xcol_s, w1f, b1r, w2f, b2r, w3xf, w3rf, b3r)

    # TODO(synk): on bandwidth-bound v5e deployments keep the lane-padded (or
    # bf16) output layout end-to-end instead of slicing back to Cout here.
    return out_flat[:, :, :Cout].reshape(B, H, W, Cout)


def resblock_ref(x_nhwc, params):
    """Plain-JAX reference matching the PyTorch forward."""
    w1, b1, w2, b2, w3, b3 = params

    def conv(x, w, b):
        y = lax.conv_general_dilated(
            x, w, window_strides=(1, 1), padding="SAME",
            dimension_numbers=("NHWC", "HWIO", "NHWC"))
        return y + b

    r = _leaky(conv(x_nhwc, w1, b1))
    r = _leaky(conv(r, w2, b2))
    return conv(jnp.concatenate([x_nhwc, r], axis=-1), w3, b3)


if __name__ == "__main__":
    B, Cin, H, W, Cout = 2, 4, 16, 16, 8
    key = jax.random.PRNGKey(0)
    ks = jax.random.split(key, 7)

    # PyTorch-style NCHW input, transposed to the kernel's NHWC layout.
    x_nchw = jax.random.normal(ks[0], (B, Cin, H, W), jnp.float32)
    x = jnp.transpose(x_nchw, (0, 2, 3, 1))

    # Deterministic synthetic parameters (HWIO), shapes from the module.
    w1 = jax.random.normal(ks[1], (3, 3, Cin, FEATURE), jnp.float32) * 0.10
    b1 = jax.random.normal(ks[2], (FEATURE,), jnp.float32) * 0.10
    w2 = jax.random.normal(ks[3], (3, 3, FEATURE, FEATURE), jnp.float32) * 0.05
    b2 = jax.random.normal(ks[4], (FEATURE,), jnp.float32) * 0.10
    w3 = jax.random.normal(ks[5], (3, 3, FEATURE + Cin, Cout), jnp.float32) * 0.05
    b3 = jax.random.normal(ks[6], (Cout,), jnp.float32) * 0.10
    params = (w1, b1, w2, b2, w3, b3)

    ref = resblock_ref(x, params)
    run = jax.jit(resblock_pallas, static_argnames=("strip_rows",))

    # Exercise both the auto-sized (single-strip at this size) path and an
    # explicit 2-strip tiling (halo recompute + boundary masking).
    for strip in (None, 8):
        out = run(x, params, strip_rows=strip)
        jax.block_until_ready(out)
        assert out.shape == (B, H, W, Cout), out.shape
        max_err = float(jnp.max(jnp.abs(out - ref)))
        if not jnp.allclose(out, ref, atol=2e-2, rtol=2e-2):
            raise AssertionError(
                f"Pallas/reference mismatch (strip_rows={strip}), "
                f"max abs err = {max_err}")
    print("KERNEL_OK")
</pallas_src>

<mosaic_0001>
module attributes {stable_mosaic.version = 11 : i64} {
  func.func @_resblock_kernel(%arg0: i32, %arg1: i32, %arg2: memref<1x1x320x36xbf16, #tpu.memory_space<vmem>>, %arg3: memref<36x64xbf16, #tpu.memory_space<vmem>>, %arg4: memref<1x64xf32, #tpu.memory_space<vmem>>, %arg5: memref<576x64xbf16, #tpu.memory_space<vmem>>, %arg6: memref<1x64xf32, #tpu.memory_space<vmem>>, %arg7: memref<36x128xbf16, #tpu.memory_space<vmem>>, %arg8: memref<576x128xbf16, #tpu.memory_space<vmem>>, %arg9: memref<1x128xf32, #tpu.memory_space<vmem>>, %arg10: memref<1x256x128xf32, #tpu.memory_space<vmem>>, %arg11: memref<320x64xf32, #tpu.memory_space<vmem>>, %arg12: memref<288x576xbf16, #tpu.memory_space<vmem>>) attributes {dimension_semantics = [#tpu.dimension_semantics<parallel>, #tpu.dimension_semantics<parallel>], iteration_bounds = array<i64: 2, 1>, scalar_prefetch = 0 : i64, scratch_operands = 2 : i64, tpu.core_type = #tpu.core_type<tc>, window_params = [{transform_indices = @transform_0, window_bounds = array<i64: 1, 1, 320, 36>}, {pipeline_mode = #tpu.pipeline_mode<synchronous>, transform_indices = @transform_1, window_bounds = array<i64: 36, 64>}, {pipeline_mode = #tpu.pipeline_mode<synchronous>, transform_indices = @transform_2, window_bounds = array<i64: 1, 64>}, {pipeline_mode = #tpu.pipeline_mode<synchronous>, transform_indices = @transform_3, window_bounds = array<i64: 576, 64>}, {pipeline_mode = #tpu.pipeline_mode<synchronous>, transform_indices = @transform_4, window_bounds = array<i64: 1, 64>}, {pipeline_mode = #tpu.pipeline_mode<synchronous>, transform_indices = @transform_5, window_bounds = array<i64: 36, 128>}, {pipeline_mode = #tpu.pipeline_mode<synchronous>, transform_indices = @transform_6, window_bounds = array<i64: 576, 128>}, {pipeline_mode = #tpu.pipeline_mode<synchronous>, transform_indices = @transform_7, window_bounds = array<i64: 1, 128>}, {transform_indices = @transform_8, window_bounds = array<i64: 1, 256, 128>}]} {
    %c0 = arith.constant 0 : index
    %c0_0 = arith.constant 0 : index
    %c0_1 = arith.constant 0 : index
    %c0_2 = arith.constant 0 : index
    %0 = vector.load %arg2[%c0, %c0_0, %c0_1, %c0_2] : memref<1x1x320x36xbf16, #tpu.memory_space<vmem>>, vector<1x1x320x36xbf16>
    %1 = vector.shape_cast %0 : vector<1x1x320x36xbf16> to vector<320x36xbf16>
    %c0_3 = arith.constant 0 : index
    %c0_4 = arith.constant 0 : index
    %2 = vector.load %arg3[%c0_3, %c0_4] : memref<36x64xbf16, #tpu.memory_space<vmem>>, vector<36x64xbf16>
    %cst = arith.constant dense<0.000000e+00> : vector<320x64xf32>
    %3 = tpu.matmul %1, %2, %cst {dimension_numbers = #tpu.dot_dimension_numbers<[1], [0], [0], [1], [0, 0, 1, 1], [], []>} : vector<320x36xbf16>, vector<36x64xbf16>, vector<320x64xf32> -> vector<320x64xf32>
    %c0_5 = arith.constant 0 : index
    %c0_6 = arith.constant 0 : index
    %4 = vector.load %arg4[%c0_5, %c0_6] : memref<1x64xf32, #tpu.memory_space<vmem>>, vector<1x64xf32>
    %5 = vector.broadcast %4 : vector<1x64xf32> to vector<320x64xf32>
    %6 = arith.addf %3, %5 : vector<320x64xf32>
    %cst_7 = arith.constant 0.000000e+00 : f32
    %7 = vector.broadcast %cst_7 : f32 to vector<320x64xf32>
    %8 = arith.cmpf oge, %6, %7 : vector<320x64xf32>
    %cst_8 = arith.constant 2.000000e-01 : f32
    %9 = vector.broadcast %cst_8 : f32 to vector<320x64xf32>
    %10 = arith.mulf %9, %6 : vector<320x64xf32>
    %11 = arith.select %8, %6, %10 : vector<320x64xi1>, vector<320x64xf32>
    %c0_9 = arith.constant 0 : index
    %c0_10 = arith.constant 0 : index
    %12 = vector.load %arg11[%c0_9, %c0_10] : memref<320x64xf32, #tpu.memory_space<vmem>>, vector<320x64xf32>
    tpu.vector_store %arg11[%c0_9, %c0_10], %11 {strides = array<i32>} : memref<320x64xf32, #tpu.memory_space<vmem>>, vector<320x64xf32>,
    %c0_i32 = arith.constant 0 : i32
    %13 = arith.cmpi eq, %arg1, %c0_i32 : i32
    %14 = arith.extui %13 : i1 to i32
    %c0_i32_11 = arith.constant 0 : i32
    %15 = arith.cmpi ne, %14, %c0_i32_11 : i32
    scf.if %15 {
      %cst_107 = arith.constant 0.000000e+00 : f32
      %195 = vector.broadcast %cst_107 : f32 to vector<32x64xf32>
      %c0_108 = arith.constant 0 : index
      %c0_109 = arith.constant 0 : index
      %196 = vector.load %arg11[%c0_108, %c0_109] : memref<320x64xf32, #tpu.memory_space<vmem>>, vector<32x64xf32>
      tpu.vector_store %arg11[%c0_108, %c0_109], %195 {strides = array<i32>} : memref<320x64xf32, #tpu.memory_space<vmem>>, vector<32x64xf32>,
    } else {
    }
    %c0_i32_12 = arith.constant 0 : i32
    %16 = arith.cmpi eq, %arg1, %c0_i32_12 : i32
    %17 = arith.extui %16 : i1 to i32
    %c0_i32_13 = arith.constant 0 : i32
    %18 = arith.cmpi ne, %17, %c0_i32_13 : i32
    scf.if %18 {
      %cst_107 = arith.constant 0.000000e+00 : f32
      %195 = vector.broadcast %cst_107 : f32 to vector<32x64xf32>
      %c288 = arith.constant 288 : index
      %c0_108 = arith.constant 0 : index
      %196 = vector.load %arg11[%c288, %c0_108] : memref<320x64xf32, #tpu.memory_space<vmem>>, vector<32x64xf32>
      tpu.vector_store %arg11[%c288, %c0_108], %195 {strides = array<i32>} : memref<320x64xf32, #tpu.memory_space<vmem>>, vector<32x64xf32>,
    } else {
    }
    %19 = tpu.iota {dimensions = array<i32: 0>} : vector<288x1xi32>
    %c16_i32 = arith.constant 16 : i32
    %c0_i32_14 = arith.constant 0 : i32
    %20 = arith.cmpi eq, %c16_i32, %c0_i32_14 : i32
    %c1_i32 = arith.constant 1 : i32
    %21 = arith.select %20, %c1_i32, %c16_i32 : i32
    %22 = vector.broadcast %21 : i32 to vector<288x1xi32>
    %23 = arith.remsi %19, %22 : vector<288x1xi32>
    %c0_i32_15 = arith.constant 0 : i32
    %24 = vector.broadcast %c0_i32_15 : i32 to vector<288x1xi32>
    %25 = arith.cmpi ne, %23, %24 : vector<288x1xi32>
    %c0_i32_16 = arith.constant 0 : i32
    %26 = vector.broadcast %c0_i32_16 : i32 to vector<288x1xi32>
    %27 = arith.cmpi slt, %23, %26 : vector<288x1xi32>
    %c0_i32_17 = arith.constant 0 : i32
    %28 = arith.cmpi slt, %21, %c0_i32_17 : i32
    %29 = vector.broadcast %28 : i1 to vector<288x1xi1>
    %30 = vector.broadcast %29 : vector<288x1xi1> to vector<288x1xi1>
    %31 = arith.xori %27, %30 : vector<288x1xi1>
    %32 = arith.andi %31, %25 : vector<288x1xi1>
    %33 = vector.broadcast %21 : i32 to vector<288x1xi32>
    %34 = arith.addi %23, %33 : vector<288x1xi32>
    %35 = arith.select %32, %34, %23 : vector<288x1xi1>, vector<288x1xi32>
    %c0_i32_18 = arith.constant 0 : i32
    %36 = vector.broadcast %c0_i32_18 : i32 to vector<288x1xi32>
    %37 = arith.cmpi ne, %35, %36 : vector<288x1xi32>
    %c15_i32 = arith.constant 15 : i32
    %38 = vector.broadcast %c15_i32 : i32 to vector<288x1xi32>
    %39 = arith.cmpi ne, %35, %38 : vector<288x1xi32>
    %c0_19 = arith.constant 0 : index
    %c0_20 = arith.constant 0 : index
    %40 = vector.load %arg11[%c0_19, %c0_20] : memref<320x64xf32, #tpu.memory_space<vmem>>, vector<288x64xf32>
    %c1_i32_21 = arith.constant 1 : i32
    %41 = tpu.dynamic_rotate %40 by %c1_i32_21 dim 0 : vector<288x64xf32>, i32 -> vector<288x64xf32>
    %cst_22 = arith.constant 0.000000e+00 : f32
    %42 = vector.shape_cast %37 : vector<288x1xi1> to vector<288x1xi1>
    %43 = vector.broadcast %42 : vector<288x1xi1> to vector<288x64xi1>
    %44 = vector.broadcast %cst_22 : f32 to vector<288x64xf32>
    %45 = arith.select %43, %41, %44 : vector<288x64xi1>, vector<288x64xf32>
    %46 = arith.truncf %45 : vector<288x64xf32> to vector<288x64xbf16>
    %47 = arith.truncf %40 : vector<288x64xf32> to vector<288x64xbf16>
    %c287_i32 = arith.constant 287 : i32
    %48 = tpu.dynamic_rotate %40 by %c287_i32 dim 0 : vector<288x64xf32>, i32 -> vector<288x64xf32>
    %cst_23 = arith.constant 0.000000e+00 : f32
    %49 = vector.shape_cast %39 : vector<288x1xi1> to vector<288x1xi1>
    %50 = vector.broadcast %49 : vector<288x1xi1> to vector<288x64xi1>
    %51 = vector.broadcast %cst_23 : f32 to vector<288x64xf32>
    %52 = arith.select %50, %48, %51 : vector<288x64xi1>, vector<288x64xf32>
    %53 = arith.truncf %52 : vector<288x64xf32> to vector<288x64xbf16>
    %c16 = arith.constant 16 : index
    %c0_24 = arith.constant 0 : index
    %54 = vector.load %arg11[%c16, %c0_24] : memref<320x64xf32, #tpu.memory_space<vmem>>, vector<288x64xf32>
    %c1_i32_25 = arith.constant 1 : i32
    %55 = tpu.dynamic_rotate %54 by %c1_i32_25 dim 0 : vector<288x64xf32>, i32 -> vector<288x64xf32>
    %cst_26 = arith.constant 0.000000e+00 : f32
    %56 = vector.shape_cast %37 : vector<288x1xi1> to vector<288x1xi1>
    %57 = vector.broadcast %56 : vector<288x1xi1> to vector<288x64xi1>
    %58 = vector.broadcast %cst_26 : f32 to vector<288x64xf32>
    %59 = arith.select %57, %55, %58 : vector<288x64xi1>, vector<288x64xf32>
    %60 = arith.truncf %59 : vector<288x64xf32> to vector<288x64xbf16>
    %61 = arith.truncf %54 : vector<288x64xf32> to vector<288x64xbf16>
    %c287_i32_27 = arith.constant 287 : i32
    %62 = tpu.dynamic_rotate %54 by %c287_i32_27 dim 0 : vector<288x64xf32>, i32 -> vector<288x64xf32>
    %cst_28 = arith.constant 0.000000e+00 : f32
    %63 = vector.shape_cast %39 : vector<288x1xi1> to vector<288x1xi1>
    %64 = vector.broadcast %63 : vector<288x1xi1> to vector<288x64xi1>
    %65 = vector.broadcast %cst_28 : f32 to vector<288x64xf32>
    %66 = arith.select %64, %62, %65 : vector<288x64xi1>, vector<288x64xf32>
    %67 = arith.truncf %66 : vector<288x64xf32> to vector<288x64xbf16>
    %c32 = arith.constant 32 : index
    %c0_29 = arith.constant 0 : index
    %68 = vector.load %arg11[%c32, %c0_29] : memref<320x64xf32, #tpu.memory_space<vmem>>, vector<288x64xf32>
    %c1_i32_30 = arith.constant 1 : i32
    %69 = tpu.dynamic_rotate %68 by %c1_i32_30 dim 0 : vector<288x64xf32>, i32 -> vector<288x64xf32>
    %cst_31 = arith.constant 0.000000e+00 : f32
    %70 = vector.shape_cast %37 : vector<288x1xi1> to vector<288x1xi1>
    %71 = vector.broadcast %70 : vector<288x1xi1> to vector<288x64xi1>
    %72 = vector.broadcast %cst_31 : f32 to vector<288x64xf32>
    %73 = arith.select %71, %69, %72 : vector<288x64xi1>, vector<288x64xf32>
    %74 = arith.truncf %73 : vector<288x64xf32> to vector<288x64xbf16>
    %75 = arith.truncf %68 : vector<288x64xf32> to vector<288x64xbf16>
    %c287_i32_32 = arith.constant 287 : i32
    %76 = tpu.dynamic_rotate %68 by %c287_i32_32 dim 0 : vector<288x64xf32>, i32 -> vector<288x64xf32>
    %cst_33 = arith.constant 0.000000e+00 : f32
    %77 = vector.shape_cast %39 : vector<288x1xi1> to vector<288x1xi1>
    %78 = vector.broadcast %77 : vector<288x1xi1> to vector<288x64xi1>
    %79 = vector.broadcast %cst_33 : f32 to vector<288x64xf32>
    %80 = arith.select %78, %76, %79 : vector<288x64xi1>, vector<288x64xf32>
    %81 = arith.truncf %80 : vector<288x64xf32> to vector<288x64xbf16>
    %82 = tpu.concatenate %46, %47 in 1 : vector<288x64xbf16>, vector<288x64xbf16> -> vector<288x128xbf16>
    %c0_34 = arith.constant 0 : index
    %c0_35 = arith.constant 0 : index
    %83 = vector.load %arg12[%c0_34, %c0_35] : memref<288x576xbf16, #tpu.memory_space<vmem>>, vector<288x128xbf16>
    tpu.vector_store %arg12[%c0_34, %c0_35], %82 {strides = array<i32>} : memref<288x576xbf16, #tpu.memory_space<vmem>>, vector<288x128xbf16>,
    %84 = tpu.concatenate %53, %60 in 1 : vector<288x64xbf16>, vector<288x64xbf16> -> vector<288x128xbf16>
    %c0_36 = arith.constant 0 : index
    %c128 = arith.constant 128 : index
    %85 = vector.load %arg12[%c0_36, %c128] : memref<288x576xbf16, #tpu.memory_space<vmem>>, vector<288x128xbf16>
    tpu.vector_store %arg12[%c0_36, %c128], %84 {strides = array<i32>} : memref<288x576xbf16, #tpu.memory_space<vmem>>, vector<288x128xbf16>,
    %86 = tpu.concatenate %61, %67 in 1 : vector<288x64xbf16>, vector<288x64xbf16> -> vector<288x128xbf16>
    %c0_37 = arith.constant 0 : index
    %c256 = arith.constant 256 : index
    %87 = vector.load %arg12[%c0_37, %c256] : memref<288x576xbf16, #tpu.memory_space<vmem>>, vector<288x128xbf16>
    tpu.vector_store %arg12[%c0_37, %c256], %86 {strides = array<i32>} : memref<288x576xbf16, #tpu.memory_space<vmem>>, vector<288x128xbf16>,
    %88 = tpu.concatenate %74, %75 in 1 : vector<288x64xbf16>, vector<288x64xbf16> -> vector<288x128xbf16>
    %c0_38 = arith.constant 0 : index
    %c384 = arith.constant 384 : index
    %89 = vector.load %arg12[%c0_38, %c384] : memref<288x576xbf16, #tpu.memory_space<vmem>>, vector<288x128xbf16>
    tpu.vector_store %arg12[%c0_38, %c384], %88 {strides = array<i32>} : memref<288x576xbf16, #tpu.memory_space<vmem>>, vector<288x128xbf16>,
    %c0_39 = arith.constant 0 : index
    %c512 = arith.constant 512 : index
    %90 = vector.load %arg12[%c0_39, %c512] : memref<288x576xbf16, #tpu.memory_space<vmem>>, vector<288x64xbf16>
    tpu.vector_store %arg12[%c0_39, %c512], %81 {strides = array<i32>} : memref<288x576xbf16, #tpu.memory_space<vmem>>, vector<288x64xbf16>,
    %c0_40 = arith.constant 0 : index
    %c0_41 = arith.constant 0 : index
    %91 = vector.load %arg12[%c0_40, %c0_41] : memref<288x576xbf16, #tpu.memory_space<vmem>>, vector<288x576xbf16>
    %c0_42 = arith.constant 0 : index
    %c0_43 = arith.constant 0 : index
    %92 = vector.load %arg5[%c0_42, %c0_43] : memref<576x64xbf16, #tpu.memory_space<vmem>>, vector<576x64xbf16>
    %cst_44 = arith.constant dense<0.000000e+00> : vector<288x64xf32>
    %93 = tpu.matmul %91, %92, %cst_44 {dimension_numbers = #tpu.dot_dimension_numbers<[1], [0], [0], [1], [0, 0, 1, 1], [], []>} : vector<288x576xbf16>, vector<576x64xbf16>, vector<288x64xf32> -> vector<288x64xf32>
    %c0_45 = arith.constant 0 : index
    %c0_46 = arith.constant 0 : index
    %94 = vector.load %arg6[%c0_45, %c0_46] : memref<1x64xf32, #tpu.memory_space<vmem>>, vector<1x64xf32>
    %95 = vector.broadcast %94 : vector<1x64xf32> to vector<288x64xf32>
    %96 = arith.addf %93, %95 : vector<288x64xf32>
    %cst_47 = arith.constant 0.000000e+00 : f32
    %97 = vector.broadcast %cst_47 : f32 to vector<288x64xf32>
    %98 = arith.cmpf oge, %96, %97 : vector<288x64xf32>
    %cst_48 = arith.constant 2.000000e-01 : f32
    %99 = vector.broadcast %cst_48 : f32 to vector<288x64xf32>
    %100 = arith.mulf %99, %96 : vector<288x64xf32>
    %101 = arith.select %98, %96, %100 : vector<288x64xi1>, vector<288x64xf32>
    %c0_49 = arith.constant 0 : index
    %c0_50 = arith.constant 0 : index
    %102 = vector.load %arg11[%c0_49, %c0_50] : memref<320x64xf32, #tpu.memory_space<vmem>>, vector<288x64xf32>
    tpu.vector_store %arg11[%c0_49, %c0_50], %101 {strides = array<i32>} : memref<320x64xf32, #tpu.memory_space<vmem>>, vector<288x64xf32>,
    %c0_i32_51 = arith.constant 0 : i32
    %103 = arith.cmpi eq, %arg1, %c0_i32_51 : i32
    %104 = arith.extui %103 : i1 to i32
    %c0_i32_52 = arith.constant 0 : i32
    %105 = arith.cmpi ne, %104, %c0_i32_52 : i32
    scf.if %105 {
      %cst_107 = arith.constant 0.000000e+00 : f32
      %195 = vector.broadcast %cst_107 : f32 to vector<16x64xf32>
      %c0_108 = arith.constant 0 : index
      %c0_109 = arith.constant 0 : index
      %196 = vector.load %arg11[%c0_108, %c0_109] : memref<320x64xf32, #tpu.memory_space<vmem>>, vector<16x64xf32>
      tpu.vector_store %arg11[%c0_108, %c0_109], %195 {strides = array<i32>} : memref<320x64xf32, #tpu.memory_space<vmem>>, vector<16x64xf32>,
    } else {
    }
    %c0_i32_53 = arith.constant 0 : i32
    %106 = arith.cmpi eq, %arg1, %c0_i32_53 : i32
    %107 = arith.extui %106 : i1 to i32
    %c0_i32_54 = arith.constant 0 : i32
    %108 = arith.cmpi ne, %107, %c0_i32_54 : i32
    scf.if %108 {
      %cst_107 = arith.constant 0.000000e+00 : f32
      %195 = vector.broadcast %cst_107 : f32 to vector<16x64xf32>
      %c272 = arith.constant 272 : index
      %c0_108 = arith.constant 0 : index
      %196 = vector.load %arg11[%c272, %c0_108] : memref<320x64xf32, #tpu.memory_space<vmem>>, vector<16x64xf32>
      tpu.vector_store %arg11[%c272, %c0_108], %195 {strides = array<i32>} : memref<320x64xf32, #tpu.memory_space<vmem>>, vector<16x64xf32>,
    } else {
    }
    %109 = tpu.iota {dimensions = array<i32: 0>} : vector<256x1xi32>
    %c16_i32_55 = arith.constant 16 : i32
    %c0_i32_56 = arith.constant 0 : i32
    %110 = arith.cmpi eq, %c16_i32_55, %c0_i32_56 : i32
    %c1_i32_57 = arith.constant 1 : i32
    %111 = arith.select %110, %c1_i32_57, %c16_i32_55 : i32
    %112 = vector.broadcast %111 : i32 to vector<256x1xi32>
    %113 = arith.remsi %109, %112 : vector<256x1xi32>
    %c0_i32_58 = arith.constant 0 : i32
    %114 = vector.broadcast %c0_i32_58 : i32 to vector<256x1xi32>
    %115 = arith.cmpi ne, %113, %114 : vector<256x1xi32>
    %c0_i32_59 = arith.constant 0 : i32
    %116 = vector.broadcast %c0_i32_59 : i32 to vector<256x1xi32>
    %117 = arith.cmpi slt, %113, %116 : vector<256x1xi32>
    %c0_i32_60 = arith.constant 0 : i32
    %118 = arith.cmpi slt, %111, %c0_i32_60 : i32
    %119 = vector.broadcast %118 : i1 to vector<256x1xi1>
    %120 = vector.broadcast %119 : vector<256x1xi1> to vector<256x1xi1>
    %121 = arith.xori %117, %120 : vector<256x1xi1>
    %122 = arith.andi %121, %115 : vector<256x1xi1>
    %123 = vector.broadcast %111 : i32 to vector<256x1xi32>
    %124 = arith.addi %113, %123 : vector<256x1xi32>
    %125 = arith.select %122, %124, %113 : vector<256x1xi1>, vector<256x1xi32>
    %c0_i32_61 = arith.constant 0 : i32
    %126 = vector.broadcast %c0_i32_61 : i32 to vector<256x1xi32>
    %127 = arith.cmpi ne, %125, %126 : vector<256x1xi32>
    %c15_i32_62 = arith.constant 15 : i32
    %128 = vector.broadcast %c15_i32_62 : i32 to vector<256x1xi32>
    %129 = arith.cmpi ne, %125, %128 : vector<256x1xi32>
    %c0_63 = arith.constant 0 : index
    %c0_64 = arith.constant 0 : index
    %130 = vector.load %arg11[%c0_63, %c0_64] : memref<320x64xf32, #tpu.memory_space<vmem>>, vector<256x64xf32>
    %c1_i32_65 = arith.constant 1 : i32
    %131 = tpu.dynamic_rotate %130 by %c1_i32_65 dim 0 : vector<256x64xf32>, i32 -> vector<256x64xf32>
    %cst_66 = arith.constant 0.000000e+00 : f32
    %132 = vector.shape_cast %127 : vector<256x1xi1> to vector<256x1xi1>
    %133 = vector.broadcast %132 : vector<256x1xi1> to vector<256x64xi1>
    %134 = vector.broadcast %cst_66 : f32 to vector<256x64xf32>
    %135 = arith.select %133, %131, %134 : vector<256x64xi1>, vector<256x64xf32>
    %136 = arith.truncf %135 : vector<256x64xf32> to vector<256x64xbf16>
    %137 = arith.truncf %130 : vector<256x64xf32> to vector<256x64xbf16>
    %c255_i32 = arith.constant 255 : i32
    %138 = tpu.dynamic_rotate %130 by %c255_i32 dim 0 : vector<256x64xf32>, i32 -> vector<256x64xf32>
    %cst_67 = arith.constant 0.000000e+00 : f32
    %139 = vector.shape_cast %129 : vector<256x1xi1> to vector<256x1xi1>
    %140 = vector.broadcast %139 : vector<256x1xi1> to vector<256x64xi1>
    %141 = vector.broadcast %cst_67 : f32 to vector<256x64xf32>
    %142 = arith.select %140, %138, %141 : vector<256x64xi1>, vector<256x64xf32>
    %143 = arith.truncf %142 : vector<256x64xf32> to vector<256x64xbf16>
    %c16_68 = arith.constant 16 : index
    %c0_69 = arith.constant 0 : index
    %144 = vector.load %arg11[%c16_68, %c0_69] : memref<320x64xf32, #tpu.memory_space<vmem>>, vector<256x64xf32>
    %c1_i32_70 = arith.constant 1 : i32
    %145 = tpu.dynamic_rotate %144 by %c1_i32_70 dim 0 : vector<256x64xf32>, i32 -> vector<256x64xf32>
    %cst_71 = arith.constant 0.000000e+00 : f32
    %146 = vector.shape_cast %127 : vector<256x1xi1> to vector<256x1xi1>
    %147 = vector.broadcast %146 : vector<256x1xi1> to vector<256x64xi1>
    %148 = vector.broadcast %cst_71 : f32 to vector<256x64xf32>
    %149 = arith.select %147, %145, %148 : vector<256x64xi1>, vector<256x64xf32>
    %150 = arith.truncf %149 : vector<256x64xf32> to vector<256x64xbf16>
    %151 = arith.truncf %144 : vector<256x64xf32> to vector<256x64xbf16>
    %c255_i32_72 = arith.constant 255 : i32
    %152 = tpu.dynamic_rotate %144 by %c255_i32_72 dim 0 : vector<256x64xf32>, i32 -> vector<256x64xf32>
    %cst_73 = arith.constant 0.000000e+00 : f32
    %153 = vector.shape_cast %129 : vector<256x1xi1> to vector<256x1xi1>
    %154 = vector.broadcast %153 : vector<256x1xi1> to vector<256x64xi1>
    %155 = vector.broadcast %cst_73 : f32 to vector<256x64xf32>
    %156 = arith.select %154, %152, %155 : vector<256x64xi1>, vector<256x64xf32>
    %157 = arith.truncf %156 : vector<256x64xf32> to vector<256x64xbf16>
    %c32_74 = arith.constant 32 : index
    %c0_75 = arith.constant 0 : index
    %158 = vector.load %arg11[%c32_74, %c0_75] : memref<320x64xf32, #tpu.memory_space<vmem>>, vector<256x64xf32>
    %c1_i32_76 = arith.constant 1 : i32
    %159 = tpu.dynamic_rotate %158 by %c1_i32_76 dim 0 : vector<256x64xf32>, i32 -> vector<256x64xf32>
    %cst_77 = arith.constant 0.000000e+00 : f32
    %160 = vector.shape_cast %127 : vector<256x1xi1> to vector<256x1xi1>
    %161 = vector.broadcast %160 : vector<256x1xi1> to vector<256x64xi1>
    %162 = vector.broadcast %cst_77 : f32 to vector<256x64xf32>
    %163 = arith.select %161, %159, %162 : vector<256x64xi1>, vector<256x64xf32>
    %164 = arith.truncf %163 : vector<256x64xf32> to vector<256x64xbf16>
    %165 = arith.truncf %158 : vector<256x64xf32> to vector<256x64xbf16>
    %c255_i32_78 = arith.constant 255 : i32
    %166 = tpu.dynamic_rotate %158 by %c255_i32_78 dim 0 : vector<256x64xf32>, i32 -> vector<256x64xf32>
    %cst_79 = arith.constant 0.000000e+00 : f32
    %167 = vector.shape_cast %129 : vector<256x1xi1> to vector<256x1xi1>
    %168 = vector.broadcast %167 : vector<256x1xi1> to vector<256x64xi1>
    %169 = vector.broadcast %cst_79 : f32 to vector<256x64xf32>
    %170 = arith.select %168, %166, %169 : vector<256x64xi1>, vector<256x64xf32>
    %171 = arith.truncf %170 : vector<256x64xf32> to vector<256x64xbf16>
    %172 = tpu.concatenate %136, %137 in 1 : vector<256x64xbf16>, vector<256x64xbf16> -> vector<256x128xbf16>
    %c0_80 = arith.constant 0 : index
    %c0_81 = arith.constant 0 : index
    %173 = vector.load %arg12[%c0_80, %c0_81] : memref<288x576xbf16, #tpu.memory_space<vmem>>, vector<256x128xbf16>
    tpu.vector_store %arg12[%c0_80, %c0_81], %172 {strides = array<i32>} : memref<288x576xbf16, #tpu.memory_space<vmem>>, vector<256x128xbf16>,
    %174 = tpu.concatenate %143, %150 in 1 : vector<256x64xbf16>, vector<256x64xbf16> -> vector<256x128xbf16>
    %c0_82 = arith.constant 0 : index
    %c128_83 = arith.constant 128 : index
    %175 = vector.load %arg12[%c0_82, %c128_83] : memref<288x576xbf16, #tpu.memory_space<vmem>>, vector<256x128xbf16>
    tpu.vector_store %arg12[%c0_82, %c128_83], %174 {strides = array<i32>} : memref<288x576xbf16, #tpu.memory_space<vmem>>, vector<256x128xbf16>,
    %176 = tpu.concatenate %151, %157 in 1 : vector<256x64xbf16>, vector<256x64xbf16> -> vector<256x128xbf16>
    %c0_84 = arith.constant 0 : index
    %c256_85 = arith.constant 256 : index
    %177 = vector.load %arg12[%c0_84, %c256_85] : memref<288x576xbf16, #tpu.memory_space<vmem>>, vector<256x128xbf16>
    tpu.vector_store %arg12[%c0_84, %c256_85], %176 {strides = array<i32>} : memref<288x576xbf16, #tpu.memory_space<vmem>>, vector<256x128xbf16>,
    %178 = tpu.concatenate %164, %165 in 1 : vector<256x64xbf16>, vector<256x64xbf16> -> vector<256x128xbf16>
    %c0_86 = arith.constant 0 : index
    %c384_87 = arith.constant 384 : index
    %179 = vector.load %arg12[%c0_86, %c384_87] : memref<288x576xbf16, #tpu.memory_space<vmem>>, vector<256x128xbf16>
    tpu.vector_store %arg12[%c0_86, %c384_87], %178 {strides = array<i32>} : memref<288x576xbf16, #tpu.memory_space<vmem>>, vector<256x128xbf16>,
    %c0_88 = arith.constant 0 : index
    %c512_89 = arith.constant 512 : index
    %180 = vector.load %arg12[%c0_88, %c512_89] : memref<288x576xbf16, #tpu.memory_space<vmem>>, vector<256x64xbf16>
    tpu.vector_store %arg12[%c0_88, %c512_89], %171 {strides = array<i32>} : memref<288x576xbf16, #tpu.memory_space<vmem>>, vector<256x64xbf16>,
    %c0_90 = arith.constant 0 : index
    %c0_91 = arith.constant 0 : index
    %181 = vector.load %arg12[%c0_90, %c0_91] : memref<288x576xbf16, #tpu.memory_space<vmem>>, vector<256x576xbf16>
    %c0_92 = arith.constant 0 : index
    %c0_93 = arith.constant 0 : index
    %182 = vector.load %arg8[%c0_92, %c0_93] : memref<576x128xbf16, #tpu.memory_space<vmem>>, vector<576x128xbf16>
    %cst_94 = arith.constant dense<0.000000e+00> : vector<256x128xf32>
    %183 = tpu.matmul %181, %182, %cst_94 {dimension_numbers = #tpu.dot_dimension_numbers<[1], [0], [0], [1], [0, 0, 1, 1], [], []>} : vector<256x576xbf16>, vector<576x128xbf16>, vector<256x128xf32> -> vector<256x128xf32>
    %c0_95 = arith.constant 0 : index
    %c0_96 = arith.constant 0 : index
    %c32_97 = arith.constant 32 : index
    %c0_98 = arith.constant 0 : index
    %184 = vector.load %arg2[%c0_95, %c0_96, %c32_97, %c0_98] : memref<1x1x320x36xbf16, #tpu.memory_space<vmem>>, vector<1x1x256x36xbf16>
    %185 = vector.shape_cast %184 : vector<1x1x256x36xbf16> to vector<256x36xbf16>
    %c0_99 = arith.constant 0 : index
    %c0_100 = arith.constant 0 : index
    %186 = vector.load %arg7[%c0_99, %c0_100] : memref<36x128xbf16, #tpu.memory_space<vmem>>, vector<36x128xbf16>
    %cst_101 = arith.constant dense<0.000000e+00> : vector<256x128xf32>
    %187 = tpu.matmul %185, %186, %cst_101 {dimension_numbers = #tpu.dot_dimension_numbers<[1], [0], [0], [1], [0, 0, 1, 1], [], []>} : vector<256x36xbf16>, vector<36x128xbf16>, vector<256x128xf32> -> vector<256x128xf32>
    %188 = arith.addf %183, %187 : vector<256x128xf32>
    %c0_102 = arith.constant 0 : index
    %c0_103 = arith.constant 0 : index
    %189 = vector.load %arg9[%c0_102, %c0_103] : memref<1x128xf32, #tpu.memory_space<vmem>>, vector<1x128xf32>
    %190 = vector.broadcast %189 : vector<1x128xf32> to vector<256x128xf32>
    %191 = arith.addf %188, %190 : vector<256x128xf32>
    %c0_104 = arith.constant 0 : index
    %c0_105 = arith.constant 0 : index
    %c0_106 = arith.constant 0 : index
    %192 = vector.load %arg10[%c0_104, %c0_105, %c0_106] : memref<1x256x128xf32, #tpu.memory_space<vmem>>, vector<1x256x128xf32>
    %193 = vector.shape_cast %192 : vector<1x256x128xf32> to vector<256x128xf32>
    %194 = vector.shape_cast %191 : vector<256x128xf32> to vector<1x256x128xf32>
    tpu.vector_store %arg10[%c0_104, %c0_105, %c0_106], %194 {strides = array<i32>} : memref<1x256x128xf32, #tpu.memory_space<vmem>>, vector<1x256x128xf32>,
    return
  }
  func.func @transform_0(%arg0: i32, %arg1: i32) -> (i32, i32, i32, i32) {
    %c0_i32 = arith.constant 0 : i32
    %c0_i32_0 = arith.constant 0 : i32
    %c0_i32_1 = arith.constant 0 : i32
    return %arg0, %arg1, %c0_i32, %c0_i32_0 : i32, i32, i32, i32
  }
  func.func @transform_1(%arg0: i32, %arg1: i32) -> (i32, i32) {
    %c0_i32 = arith.constant 0 : i32
    %c0_i32_0 = arith.constant 0 : i32
    %c0_i32_1 = arith.constant 0 : i32
    return %c0_i32, %c0_i32_0 : i32, i32
  }
  func.func @transform_2(%arg0: i32, %arg1: i32) -> (i32, i32) {
    %c0_i32 = arith.constant 0 : i32
    %c0_i32_0 = arith.constant 0 : i32
    %c0_i32_1 = arith.constant 0 : i32
    return %c0_i32, %c0_i32_0 : i32, i32
  }
  func.func @transform_3(%arg0: i32, %arg1: i32) -> (i32, i32) {
    %c0_i32 = arith.constant 0 : i32
    %c0_i32_0 = arith.constant 0 : i32
    %c0_i32_1 = arith.constant 0 : i32
    return %c0_i32, %c0_i32_0 : i32, i32
  }
  func.func @transform_4(%arg0: i32, %arg1: i32) -> (i32, i32) {
    %c0_i32 = arith.constant 0 : i32
    %c0_i32_0 = arith.constant 0 : i32
    %c0_i32_1 = arith.constant 0 : i32
    return %c0_i32, %c0_i32_0 : i32, i32
  }
  func.func @transform_5(%arg0: i32, %arg1: i32) -> (i32, i32) {
    %c0_i32 = arith.constant 0 : i32
    %c0_i32_0 = arith.constant 0 : i32
    %c0_i32_1 = arith.constant 0 : i32
    return %c0_i32, %c0_i32_0 : i32, i32
  }
  func.func @transform_6(%arg0: i32, %arg1: i32) -> (i32, i32) {
    %c0_i32 = arith.constant 0 : i32
    %c0_i32_0 = arith.constant 0 : i32
    %c0_i32_1 = arith.constant 0 : i32
    return %c0_i32, %c0_i32_0 : i32, i32
  }
  func.func @transform_7(%arg0: i32, %arg1: i32) -> (i32, i32) {
    %c0_i32 = arith.constant 0 : i32
    %c0_i32_0 = arith.constant 0 : i32
    %c0_i32_1 = arith.constant 0 : i32
    return %c0_i32, %c0_i32_0 : i32, i32
  }
  func.func @transform_8(%arg0: i32, %arg1: i32) -> (i32, i32, i32) {
    %c0_i32 = arith.constant 0 : i32
    %c0_i32_0 = arith.constant 0 : i32
    return %arg0, %arg1, %c0_i32 : i32, i32, i32
  }
}

</mosaic_0001>

<llo_original>
// kernel: resblock_pallas.1
$region0: #{resblock_pallas.1}
  #allocation0 [shape = 'u32[]', space=smem, size = 0x4, offset = 0x4, fixed_abs, tag = 'smem constant byte address 0x4 - core index']
  #allocation1 [shape = 'u32[144,128]{1,0:T(1,128)}', space=vmem, size = 0x12000, scoped, tag = 'internal scratch']
  #allocation2 [shape = 'f32[320,64]{1,0:T(8,128)}', space=vmem, size = 0x28000, scoped, tag = 'scratch operand']
  #allocation3 [shape = 'bf16[288,576]{1,0:T(16,128)(2,1)}', space=vmem, size = 0x5a000, scoped, tag = 'scratch operand']
  %s0 = inlined_call_operand.hbm [shape: bf16[2,1,320,36], index: 0, kind: input, shape index: {}]
  %s1 = inlined_call_operand.hbm [shape: bf16[36,64], index: 1, kind: input, shape index: {}]
  %s2 = inlined_call_operand.hbm [shape: f32[1,64], index: 2, kind: input, shape index: {}]
  %s3 = inlined_call_operand.hbm [shape: bf16[576,64], index: 3, kind: input, shape index: {}]
  %s4 = inlined_call_operand.hbm [shape: f32[1,64], index: 4, kind: input, shape index: {}]
  %s5 = inlined_call_operand.hbm [shape: bf16[36,128], index: 5, kind: input, shape index: {}]
  %s6 = inlined_call_operand.hbm [shape: bf16[576,128], index: 6, kind: input, shape index: {}]
  %s7 = inlined_call_operand.hbm [shape: f32[1,128], index: 7, kind: input, shape index: {}]
  %s8 = inlined_call_operand.hbm [shape: f32[2,256,128], index: 8, kind: output, shape index: {}]
  %s9 = sld [smem:[#allocation0]]
  $region105: #{resblock_pallas.1} parent=0
    _
  %s11 = ssub.s32 1, %s9
  %s12 = scalar_select 0, %s11, %s9
  $region1: #{resblock_pallas.1} parent=0
    #allocation4 [shape = 'u8[163840]{0}', space=vmem, size = 0x28000, scoped, tag = 'input window, operand 0']
    #allocation5 [shape = 's32[2]{0}', space=sflag, size = 0x8, scoped, tag = 'scoped memory for resblock_pallas.1']
    #allocation6 [shape = 's32[2]{0}', space=sflag, size = 0x8, scoped, tag = 'scoped memory for resblock_pallas.1']
    #allocation7 [shape = 'u8[10240]{0}', space=vmem, size = 0x2800, scoped, tag = 'input window, operand 1, single buffered']
    #allocation8 [shape = 's32[1]{0}', space=sflag, size = 0x4, scoped, tag = 'scoped memory for resblock_pallas.1']
    #allocation9 [shape = 'u8[512]{0}', space=vmem, size = 0x400, scoped, tag = 'input window, operand 2, single buffered']
    #allocation10 [shape = 'u8[147456]{0}', space=vmem, size = 0x24000, scoped, tag = 'input window, operand 3, single buffered']
    #allocation11 [shape = 's32[1]{0}', space=sflag, size = 0x4, scoped, tag = 'scoped memory for resblock_pallas.1']
    #allocation12 [shape = 'u8[512]{0}', space=vmem, size = 0x400, scoped, tag = 'input window, operand 4, single buffered']
    #allocation13 [shape = 'u8[10240]{0}', space=vmem, size = 0x2800, scoped, tag = 'input window, operand 5, single buffered']
    #allocation14 [shape = 's32[1]{0}', space=sflag, size = 0x4, scoped, tag = 'scoped memory for resblock_pallas.1']
    #allocation15 [shape = 'u8[147456]{0}', space=vmem, size = 0x24000, scoped, tag = 'input window, operand 6, single buffered']
    #allocation16 [shape = 'u8[512]{0}', space=vmem, size = 0x400, scoped, tag = 'input window, operand 7, single buffered']
    #allocation17 [shape = 's32[1]{0}', space=sflag, size = 0x4, scoped, tag = 'scoped memory for resblock_pallas.1']
    #allocation18 [shape = 'u8[262144]{0}', space=vmem, size = 0x40000, scoped, tag = 'output window, operand 0']
    %13 = vsyncpa [#allocation5], 0
    %s14 = scalar_lea.sflag [#allocation5], 1
    %15 = vsyncpa %s14, 0
    %16 = vsyncpa [#allocation8], 0
    %17 = vsyncpa [#allocation11], 0
    %18 = vsyncpa [#allocation14], 0
    %19 = vsyncpa [#allocation17], 0
    %20 = vsyncpa [#allocation6], 0
    %s21 = scalar_lea.sflag [#allocation6], 1
    %22 = vsyncpa %s21, 0
    loop: start=0, step=1, limit=4
    $region2: #{resblock_pallas.1} parent=1 // loop_pre_header
      _
    $region3: #{resblock_pallas.1} parent=1 // loop_header
      %s24 = sphi 0, %s28
      %p25 = scmp.ge.s32.totalorder %s24, 4
      %s31 = sphi 0, %s43
      %s32 = sphi 0, %s39
      %s33 = sphi 0, %s31
      %s34 = sphi 0, %s32
      %s35 = sphi 0, %s33
      %s36 = sphi 0, %s34
      %s48 = sphi 0, %s50
      %s51 = sphi 0, %s48
      %s52 = sphi 0, %s51
      %s68 = sphi 0, %s52
      %s72 = sphi 0, %s72
      %s74 = sphi 0, %s72
      %s75 = sphi 0, %s74
      %s89 = sphi 0, %s75
      %s93 = sphi 0, %s93
      %s95 = sphi 0, %s93
      %s96 = sphi 0, %s95
      %s110 = sphi 0, %s96
      %s114 = sphi 0, %s114
      %s116 = sphi 0, %s114
      %s117 = sphi 0, %s116
      %s131 = sphi 0, %s117
      %s135 = sphi 0, %s135
      %s137 = sphi 0, %s135
      %s138 = sphi 0, %s137
      %s152 = sphi 0, %s138
      %s156 = sphi 0, %s156
      %s158 = sphi 0, %s156
      %s159 = sphi 0, %s158
      %s173 = sphi 0, %s159
      %s177 = sphi 0, %s177
      %s179 = sphi 0, %s177
      %s180 = sphi 0, %s179
      %s194 = sphi 0, %s180
      %s198 = sphi 0, %s198
      %s200 = sphi 0, %s198
      %s201 = sphi 0, %s200
      %s215 = sphi 0, %s201
      %s223 = sphi 0, %s225
      %s226 = sphi 0, %s223
      %s227 = sphi 0, %s226
      %s243 = sphi 0, %s227
    $region4: #{resblock_pallas.1} parent=1 // loop_header_branch
      %27 = sbr.rel (%p25) target = $region8
    $region5: #{resblock_pallas.1} parent=1 // loop_body
      %s29 = ssub.s32 %s24, 1
      %s30 = ssub.s32 %s24, 2
      %s37 = sadd.s32 1, %s32
      %p38 = scmp.ge.s32.totalorder %s37, 1
      %s39 = scalar_select %p38, 0, %s37
      %s40 = sadd.s32 1, %s31
      %s41 = scalar_select %p38, %s40, %s31
      %p42 = scmp.ge.s32.totalorder %s41, 2
      %s43 = scalar_select %p42, 0, %s41
      %s44 = ssub.s32 %s31, %s43
      %s45 = ssub.s32 %s32, %s39
      %s46 = sor.u32 %s44, %s45
      %p47 = scmp.eq.s32.totalorder %s46, 0
      %s49 = sadd.s32 %s48, 1
      %s50 = scalar_select %p47, %s48, %s49
      %p53 = pneg %p47
      %p54 = scmp.eq.s32.totalorder %s24, 1
      %p55 = por %p53, %p54
      %p56 = scmp.ne.s32.totalorder %s48, %s51
      %p57 = scmp.eq.s32.totalorder %s24, 0
      %p58 = por %p56, %p57
      %p59 = scmp.ne.s32.totalorder %s48, %s51
      %p60 = scmp.eq.s32.totalorder %s29, 1
      %p61 = por %p59, %p60
      %p62 = scmp.ne.s32.totalorder %s51, %s52
      %p63 = scmp.eq.s32.totalorder %s29, 0
      %p64 = por %p62, %p63
      %p65 = scmp.ne.s32.totalorder %s51, %s52
      %p66 = scmp.eq.s32.totalorder %s30, 1
      %p67 = por %p65, %p66
      %p69 = scmp.ne.s32.totalorder %s52, %s68
      %p70 = scmp.eq.s32.totalorder %s30, 0
      %p71 = por %p69, %p70
      %s73 = sadd.s32 %s72, 1
      %p76 = scmp.eq.s32.totalorder %s24, 1
      %p77 = scmp.ne.s32.totalorder %s72, %s74
      %p78 = scmp.eq.s32.totalorder %s24, 0
      %p79 = por %p77, %p78
      %p80 = scmp.ne.s32.totalorder %s72, %s74
      %p81 = scmp.eq.s32.totalorder %s29, 1
      %p82 = por %p80, %p81
      %p83 = scmp.ne.s32.totalorder %s74, %s75
      %p84 = scmp.eq.s32.totalorder %s29, 0
      %p85 = por %p83, %p84
      %p86 = scmp.ne.s32.totalorder %s74, %s75
      %p87 = scmp.eq.s32.totalorder %s30, 1
      %p88 = por %p86, %p87
      %p90 = scmp.ne.s32.totalorder %s75, %s89
      %p91 = scmp.eq.s32.totalorder %s30, 0
      %p92 = por %p90, %p91
      %s94 = sadd.s32 %s93, 1
      %p97 = scmp.eq.s32.totalorder %s24, 1
      %p98 = scmp.ne.s32.totalorder %s93, %s95
      %p99 = scmp.eq.s32.totalorder %s24, 0
      %p100 = por %p98, %p99
      %p101 = scmp.ne.s32.totalorder %s93, %s95
      %p102 = scmp.eq.s32.totalorder %s29, 1
      %p103 = por %p101, %p102
      %p104 = scmp.ne.s32.totalorder %s95, %s96
      %p105 = scmp.eq.s32.totalorder %s29, 0
      %p106 = por %p104, %p105
      %p107 = scmp.ne.s32.totalorder %s95, %s96
      %p108 = scmp.eq.s32.totalorder %s30, 1
      %p109 = por %p107, %p108
      %p111 = scmp.ne.s32.totalorder %s96, %s110
      %p112 = scmp.eq.s32.totalorder %s30, 0
      %p113 = por %p111, %p112
      %s115 = sadd.s32 %s114, 1
      %p118 = scmp.eq.s32.totalorder %s24, 1
      %p119 = scmp.ne.s32.totalorder %s114, %s116
      %p120 = scmp.eq.s32.totalorder %s24, 0
      %p121 = por %p119, %p120
      %p122 = scmp.ne.s32.totalorder %s114, %s116
      %p123 = scmp.eq.s32.totalorder %s29, 1
      %p124 = por %p122, %p123
      %p125 = scmp.ne.s32.totalorder %s116, %s117
      %p126 = scmp.eq.s32.totalorder %s29, 0
      %p127 = por %p125, %p126
      %p128 = scmp.ne.s32.totalorder %s116, %s117
      %p129 = scmp.eq.s32.totalorder %s30, 1
      %p130 = por %p128, %p129
      %p132 = scmp.ne.s32.totalorder %s117, %s131
      %p133 = scmp.eq.s32.totalorder %s30, 0
      %p134 = por %p132, %p133
      %s136 = sadd.s32 %s135, 1
      %p139 = scmp.eq.s32.totalorder %s24, 1
      %p140 = scmp.ne.s32.totalorder %s135, %s137
      %p141 = scmp.eq.s32.totalorder %s24, 0
      %p142 = por %p140, %p141
      %p143 = scmp.ne.s32.totalorder %s135, %s137
      %p144 = scmp.eq.s32.totalorder %s29, 1
      %p145 = por %p143, %p144
      %p146 = scmp.ne.s32.totalorder %s137, %s138
      %p147 = scmp.eq.s32.totalorder %s29, 0
      %p148 = por %p146, %p147
      %p149 = scmp.ne.s32.totalorder %s137, %s138
      %p150 = scmp.eq.s32.totalorder %s30, 1
      %p151 = por %p149, %p150
      %p153 = scmp.ne.s32.totalorder %s138, %s152
      %p154 = scmp.eq.s32.totalorder %s30, 0
      %p155 = por %p153, %p154
      %s157 = sadd.s32 %s156, 1
      %p160 = scmp.eq.s32.totalorder %s24, 1
      %p161 = scmp.ne.s32.totalorder %s156, %s158
      %p162 = scmp.eq.s32.totalorder %s24, 0
      %p163 = por %p161, %p162
      %p164 = scmp.ne.s32.totalorder %s156, %s158
      %p165 = scmp.eq.s32.totalorder %s29, 1
      %p166 = por %p164, %p165
      %p167 = scmp.ne.s32.totalorder %s158, %s159
      %p168 = scmp.eq.s32.totalorder %s29, 0
      %p169 = por %p167, %p168
      %p170 = scmp.ne.s32.totalorder %s158, %s159
      %p171 = scmp.eq.s32.totalorder %s30, 1
      %p172 = por %p170, %p171
      %p174 = scmp.ne.s32.totalorder %s159, %s173
      %p175 = scmp.eq.s32.totalorder %s30, 0
      %p176 = por %p174, %p175
      %s178 = sadd.s32 %s177, 1
      %p181 = scmp.eq.s32.totalorder %s24, 1
      %p182 = scmp.ne.s32.totalorder %s177, %s179
      %p183 = scmp.eq.s32.totalorder %s24, 0
      %p184 = por %p182, %p183
      %p185 = scmp.ne.s32.totalorder %s177, %s179
      %p186 = scmp.eq.s32.totalorder %s29, 1
      %p187 = por %p185, %p186
      %p188 = scmp.ne.s32.totalorder %s179, %s180
      %p189 = scmp.eq.s32.totalorder %s29, 0
      %p190 = por %p188, %p189
      %p191 = scmp.ne.s32.totalorder %s179, %s180
      %p192 = scmp.eq.s32.totalorder %s30, 1
      %p193 = por %p191, %p192
      %p195 = scmp.ne.s32.totalorder %s180, %s194
      %p196 = scmp.eq.s32.totalorder %s30, 0
      %p197 = por %p195, %p196
      %s199 = sadd.s32 %s198, 1
      %p202 = scmp.eq.s32.totalorder %s24, 1
      %p203 = scmp.ne.s32.totalorder %s198, %s200
      %p204 = scmp.eq.s32.totalorder %s24, 0
      %p205 = por %p203, %p204
      %p206 = scmp.ne.s32.totalorder %s198, %s200
      %p207 = scmp.eq.s32.totalorder %s29, 1
      %p208 = por %p206, %p207
      %p209 = scmp.ne.s32.totalorder %s200, %s201
      %p210 = scmp.eq.s32.totalorder %s29, 0
      %p211 = por %p209, %p210
      %p212 = scmp.ne.s32.totalorder %s200, %s201
      %p213 = scmp.eq.s32.totalorder %s30, 1
      %p214 = por %p212, %p213
      %p216 = scmp.ne.s32.totalorder %s201, %s215
      %p217 = scmp.eq.s32.totalorder %s30, 0
      %p218 = por %p216, %p217
      %s219 = ssub.s32 %s31, %s43
      %s220 = ssub.s32 %s32, %s39
      %s221 = sor.u32 %s219, %s220
      %p222 = scmp.eq.s32.totalorder %s221, 0
      %s224 = sadd.s32 %s223, 1
      %s225 = scalar_select %p222, %s223, %s224
      %p228 = pneg %p222
      %p229 = scmp.eq.s32.totalorder %s24, 1
      %p230 = por %p228, %p229
      %p231 = scmp.ne.s32.totalorder %s223, %s226
      %p232 = scmp.eq.s32.totalorder %s24, 0
      %p233 = por %p231, %p232
      %p234 = scmp.ne.s32.totalorder %s223, %s226
      %p235 = scmp.eq.s32.totalorder %s29, 1
      %p236 = por %p234, %p235
      %p237 = scmp.ne.s32.totalorder %s226, %s227
      %p238 = scmp.eq.s32.totalorder %s29, 0
      %p239 = por %p237, %p238
      %p240 = scmp.ne.s32.totalorder %s226, %s227
      %p241 = scmp.eq.s32.totalorder %s30, 1
      %p242 = por %p240, %p241
      %p244 = scmp.ne.s32.totalorder %s227, %s243
      %p245 = scmp.eq.s32.totalorder %s30, 0
      %p246 = por %p244, %p245
      %p247 = scmp.le.s32.totalorder 1, %s24
      %p248 = scmp.lt.s32.totalorder %s24, 3
      %p249 = pnand %p247, %p248
      %p250 = pneg %p249
      // Predicated region
      $region9: #{resblock_pallas.1} parent=5 // pred_check
        _
      $region10: #{resblock_pallas.1} parent=5 // pred_check_branch
        %252 = sbr.rel (%p249) target = $region12
      $region11: #{resblock_pallas.1} parent=5 // pred_region
        %s253 = ssub.s32 %s24, 1
        // Predicated region
        $region13: #{resblock_pallas.1} parent=11 // pred_check
          %p254 = pneg %p85
        $region14: #{resblock_pallas.1} parent=11 // pred_check_branch
          %256 = sbr.rel (%p254) target = $region16
        $region15: #{resblock_pallas.1} parent=11 // pred_region
          %s258 = ssub.s32 320, 320
          %259 = vsyncadd [#allocation8], %s258
          %s260 = sshll.u32 [#allocation7], 4
          %s261 = int_to_ptr.vmem [resolvable:$true] %s260
          %266 = dma.hbm_to_vmem [thread:$0]  %s1, 320, %s261, [#allocation8], 64, 64, 4
        $region16: #{resblock_pallas.1} parent=11 // pred_fallthru
          _
        // Predicated region
        $region17: #{resblock_pallas.1} parent=11 // pred_check
          %p267 = pneg %p106
        $region18: #{resblock_pallas.1} parent=11 // pred_check_branch
          %269 = sbr.rel (%p267) target = $region20
        $region19: #{resblock_pallas.1} parent=11 // pred_region
          %s271 = ssub.s32 16, 16
          %272 = vsyncadd [#allocation8], %s271
          %s274 = sshll.u32 [#allocation9], 4
          %s275 = int_to_ptr.vmem [resolvable:$true] %s274
          %277 = dma.hbm_to_vmem [thread:$0]  %s2, 16, %s275, [#allocation8]
        $region20: #{resblock_pallas.1} parent=11 // pred_fallthru
          _
        // Predicated region
        $region21: #{resblock_pallas.1} parent=11 // pred_check
          %p278 = pneg %p127
        $region22: #{resblock_pallas.1} parent=11 // pred_check_branch
          %280 = sbr.rel (%p278) target = $region24
        $region23: #{resblock_pallas.1} parent=11 // pred_region
          %s282 = ssub.s32 4608, 4608
          %283 = vsyncadd [#allocation11], %s282
          %s284 = sshll.u32 [#allocation10], 4
          %s285 = int_to_ptr.vmem [resolvable:$true] %s284
          %290 = dma.hbm_to_vmem [thread:$0]  %s3, 4608, %s285, [#allocation11], 64, 64, 4
        $region24: #{resblock_pallas.1} parent=11 // pred_fallthru
          _
        // Predicated region
        $region25: #{resblock_pallas.1} parent=11 // pred_check
          %p291 = pneg %p148
        $region26: #{resblock_pallas.1} parent=11 // pred_check_branch
          %293 = sbr.rel (%p291) target = $region28
        $region27: #{resblock_pallas.1} parent=11 // pred_region
          %s295 = ssub.s32 16, 16
          %296 = vsyncadd [#allocation11], %s295
          %s298 = sshll.u32 [#allocation12], 4
          %s299 = int_to_ptr.vmem [resolvable:$true] %s298
          %301 = dma.hbm_to_vmem [thread:$0]  %s4, 16, %s299, [#allocation11]
        $region28: #{resblock_pallas.1} parent=11 // pred_fallthru
          _
        // Predicated region
        $region29: #{resblock_pallas.1} parent=11 // pred_check
          %p302 = pneg %p169
        $region30: #{resblock_pallas.1} parent=11 // pred_check_branch
          %304 = sbr.rel (%p302) target = $region32
        $region31: #{resblock_pallas.1} parent=11 // pred_region
          %s306 = ssub.s32 320, 320
          %307 = vsyncadd [#allocation14], %s306
          %s308 = sshll.u32 [#allocation13], 4
          %s309 = int_to_ptr.vmem [resolvable:$true] %s308
          %314 = dma.hbm_to_vmem [thread:$0]  %s5, 320, %s309, [#allocation14], 64, 64, 4
        $region32: #{resblock_pallas.1} parent=11 // pred_fallthru
          _
        // Predicated region
        $region33: #{resblock_pallas.1} parent=11 // pred_check
          %p315 = pneg %p190
        $region34: #{resblock_pallas.1} parent=11 // pred_check_branch
          %317 = sbr.rel (%p315) target = $region36
        $region35: #{resblock_pallas.1} parent=11 // pred_region
          %s319 = ssub.s32 4608, 4608
          %320 = vsyncadd [#allocation14], %s319
          %s321 = sshll.u32 [#allocation15], 4
          %s322 = int_to_ptr.vmem [resolvable:$true] %s321
          %327 = dma.hbm_to_vmem [thread:$0]  %s6, 4608, %s322, [#allocation14], 64, 64, 4
        $region36: #{resblock_pallas.1} parent=11 // pred_fallthru
          _
        // Predicated region
        $region37: #{resblock_pallas.1} parent=11 // pred_check
          %p328 = pneg %p211
        $region38: #{resblock_pallas.1} parent=11 // pred_check_branch
          %330 = sbr.rel (%p328) target = $region40
        $region39: #{resblock_pallas.1} parent=11 // pred_region
          %s332 = ssub.s32 16, 16
          %333 = vsyncadd [#allocation17], %s332
          %s335 = sshll.u32 [#allocation16], 4
          %s336 = int_to_ptr.vmem [resolvable:$true] %s335
          %338 = dma.hbm_to_vmem [thread:$0]  %s7, 16, %s336, [#allocation17]
        $region40: #{resblock_pallas.1} parent=11 // pred_fallthru
          _
      $region12: #{resblock_pallas.1} parent=5 // pred_fallthru
        _
      %p339 = scmp.lt.s32.totalorder %s24, 2
      // Predicated region
      $region41: #{resblock_pallas.1} parent=5 // pred_check
        %p340 = pneg %p339
      $region42: #{resblock_pallas.1} parent=5 // pred_check_branch
        %342 = sbr.rel (%p340) target = $region44
      $region43: #{resblock_pallas.1} parent=5 // pred_region
        // Predicated region
        $region45: #{resblock_pallas.1} parent=43 // pred_check
          %p343 = pneg %p58
        $region46: #{resblock_pallas.1} parent=43 // pred_check_branch
          %345 = sbr.rel (%p343) target = $region48
        $region47: #{resblock_pallas.1} parent=43 // pred_region
          %s346 = sand.u32 %s48, 1
          %s347 = scalar_lea.sflag [#allocation5], %s346
          %s348 = sand.u32 %s48, 1
          %s349 = smul.addr %s348, 160
          %s350 = scalar_lea.vmem [#allocation4], %s349
          %s352 = ssub.s32 2560, 2560
          %353 = vsyncadd %s347, %s352
          %s354 = smul.addr %s32, 40
          %s355 = smul.addr %s31, 40
          %s356 = sadd.s32 %s354, %s355
          %s357 = smul.addr %s356, 64
          %s358 = scalar_lea.hbm %s0, %s357
          %s359 = sshll.u32 %s350, 4
          %s360 = int_to_ptr.vmem [resolvable:$true] %s359
          %365 = dma.hbm_to_vmem [thread:$0]  %s358, 2560, %s360, %s347, 64, 64, 4
        $region48: #{resblock_pallas.1} parent=43 // pred_fallthru
          _
      $region44: #{resblock_pallas.1} parent=5 // pred_fallthru
        _
      %p366 = scmp.le.s32.totalorder 1, %s24
      %p367 = scmp.lt.s32.totalorder %s24, 3
      %p368 = pnand %p366, %p367
      %p369 = pneg %p368
      // Predicated region
      $region49: #{resblock_pallas.1} parent=5 // pred_check
        _
      $region50: #{resblock_pallas.1} parent=5 // pred_check_branch
        %371 = sbr.rel (%p368) target = $region52
      $region51: #{resblock_pallas.1} parent=5 // pred_region
        %s372 = ssub.s32 %s24, 1
        %s373 = sand.u32 %s51, 1
        %s374 = scalar_lea.sflag [#allocation5], %s373
        %s375 = sand.u32 %s51, 1
        %s376 = smul.addr %s375, 160
        %s377 = scalar_lea.vmem [#allocation4], %s376
        // Predicated region
        $region53: #{resblock_pallas.1} parent=51 // pred_check
          %p378 = pneg %p64
        $region54: #{resblock_pallas.1} parent=51 // pred_check_branch
          %380 = sbr.rel (%p378) target = $region56
        $region55: #{resblock_pallas.1} parent=51 // pred_region
          %381 = dma.done %s374, 2560
        $region56: #{resblock_pallas.1} parent=51 // pred_fallthru
          _
        // Predicated region
        $region57: #{resblock_pallas.1} parent=51 // pred_check
          %p382 = pneg %p85
        $region58: #{resblock_pallas.1} parent=51 // pred_check_branch
          %384 = sbr.rel (%p382) target = $region60
        $region59: #{resblock_pallas.1} parent=51 // pred_region
          %385 = dma.done [#allocation8], 320
        $region60: #{resblock_pallas.1} parent=51 // pred_fallthru
          _
        // Predicated region
        $region61: #{resblock_pallas.1} parent=51 // pred_check
          %p386 = pneg %p106
        $region62: #{resblock_pallas.1} parent=51 // pred_check_branch
          %388 = sbr.rel (%p386) target = $region64
        $region63: #{resblock_pallas.1} parent=51 // pred_region
          %389 = dma.done [#allocation8], 16
        $region64: #{resblock_pallas.1} parent=51 // pred_fallthru
          _
        // Predicated region
        $region65: #{resblock_pallas.1} parent=51 // pred_check
          %p390 = pneg %p127
        $region66: #{resblock_pallas.1} parent=51 // pred_check_branch
          %392 = sbr.rel (%p390) target = $region68
        $region67: #{resblock_pallas.1} parent=51 // pred_region
          %393 = dma.done [#allocation11], 4608
        $region68: #{resblock_pallas.1} parent=51 // pred_fallthru
          _
        // Predicated region
        $region69: #{resblock_pallas.1} parent=51 // pred_check
          %p394 = pneg %p148
        $region70: #{resblock_pallas.1} parent=51 // pred_check_branch
          %396 = sbr.rel (%p394) target = $region72
        $region71: #{resblock_pallas.1} parent=51 // pred_region
          %397 = dma.done [#allocation11], 16
        $region72: #{resblock_pallas.1} parent=51 // pred_fallthru
          _
        // Predicated region
        $region73: #{resblock_pallas.1} parent=51 // pred_check
          %p398 = pneg %p169
        $region74: #{resblock_pallas.1} parent=51 // pred_check_branch
          %400 = sbr.rel (%p398) target = $region76
        $region75: #{resblock_pallas.1} parent=51 // pred_region
          %401 = dma.done [#allocation14], 320
        $region76: #{resblock_pallas.1} parent=51 // pred_fallthru
          _
        // Predicated region
        $region77: #{resblock_pallas.1} parent=51 // pred_check
          %p402 = pneg %p190
        $region78: #{resblock_pallas.1} parent=51 // pred_check_branch
          %404 = sbr.rel (%p402) target = $region80
        $region79: #{resblock_pallas.1} parent=51 // pred_region
          %405 = dma.done [#allocation14], 4608
        $region80: #{resblock_pallas.1} parent=51 // pred_fallthru
          _
        // Predicated region
        $region81: #{resblock_pallas.1} parent=51 // pred_check
          %p406 = pneg %p211
        $region82: #{resblock_pallas.1} parent=51 // pred_check_branch
          %408 = sbr.rel (%p406) target = $region84
        $region83: #{resblock_pallas.1} parent=51 // pred_region
          %409 = dma.done [#allocation17], 16
        $region84: #{resblock_pallas.1} parent=51 // pred_fallthru
          _
        %s410 = sand.u32 %s51, 1
        %s411 = scalar_lea.sflag [#allocation5], %s410
        %s412 = sand.u32 %s51, 1
        %s413 = smul.addr %s412, 160
        %s414 = scalar_lea.vmem [#allocation4], %s413
        %p415 = pneg %p64
        %p416 = pneg %p61
        %p417 = pneg %p85
        %p418 = pneg %p82
        %p419 = pneg %p106
        %p420 = pneg %p103
        %p421 = pneg %p127
        %p422 = pneg %p124
        %p423 = pneg %p148
        %p424 = pneg %p145
        %p425 = pneg %p169
        %p426 = pneg %p166
        %p427 = pneg %p190
        %p428 = pneg %p187
        %p429 = pneg %p211
        %p430 = pneg %p208
        %p431 = pneg %p239
        %p432 = pneg %p236
        %s433 = sand.u32 %s226, 1
        %s434 = scalar_lea.sflag [#allocation6], %s433
        %s435 = sand.u32 %s226, 1
        %s436 = smul.addr %s435, 256
        %s437 = scalar_lea.vmem [#allocation18], %s436
        %s438 = smul.u32 32, %s34
        %v440 = vld [vmem:[%s377] sm:$0xf]
        %v441 = vld [vmem:[%s377 + $0x4] sm:$0xf]
        %v442 = vld [vmem:[%s377 + $0x8] sm:$0xf]
        %v443 = vld [vmem:[%s377 + $0xc] sm:$0xf]
        %v444 = vld [vmem:[%s377 + $0x10] sm:$0xf]
        %v445 = vld [vmem:[%s377 + $0x14] sm:$0xf]
        %v446 = vld [vmem:[%s377 + $0x18] sm:$0xf]
        %v447 = vld [vmem:[%s377 + $0x1c] sm:$0xf]
        %v448 = vld [vmem:[%s377 + $0x20] sm:$0xf]
        %v449 = vld [vmem:[%s377 + $0x24] sm:$0xf]
        %v450 = vld [vmem:[%s377 + $0x28] sm:$0xf]
        %v451 = vld [vmem:[%s377 + $0x2c] sm:$0xf]
        %v452 = vld [vmem:[%s377 + $0x30] sm:$0xf]
        %v453 = vld [vmem:[%s377 + $0x34] sm:$0xf]
        %v454 = vld [vmem:[%s377 + $0x38] sm:$0xf]
        %v455 = vld [vmem:[%s377 + $0x3c] sm:$0xf]
        %v456 = vld [vmem:[%s377 + $0x40] sm:$0xf]
        %v457 = vld [vmem:[%s377 + $0x44] sm:$0xf]
        %v458 = vld [vmem:[%s377 + $0x48] sm:$0xf]
        %v459 = vld [vmem:[%s377 + $0x4c] sm:$0xf]
        %v460 = vld [vmem:[%s377 + $0x50] sm:$0xf]
        %v461 = vld [vmem:[%s377 + $0x54] sm:$0xf]
        %v462 = vld [vmem:[%s377 + $0x58] sm:$0xf]
        %v463 = vld [vmem:[%s377 + $0x5c] sm:$0xf]
        %v464 = vld [vmem:[%s377 + $0x60] sm:$0xf]
        %v465 = vld [vmem:[%s377 + $0x64] sm:$0xf]
        %v466 = vld [vmem:[%s377 + $0x68] sm:$0xf]
        %v467 = vld [vmem:[%s377 + $0x6c] sm:$0xf]
        %v468 = vld [vmem:[%s377 + $0x70] sm:$0xf]
        %v469 = vld [vmem:[%s377 + $0x74] sm:$0xf]
        %v470 = vld [vmem:[%s377 + $0x78] sm:$0xf]
        %v471 = vld [vmem:[%s377 + $0x7c] sm:$0xf]
        %v472 = vld [vmem:[%s377 + $0x80] sm:$0xf]
        %v473 = vld [vmem:[%s377 + $0x84] sm:$0xf]
        %v474 = vld [vmem:[%s377 + $0x88] sm:$0xf]
        %v475 = vld [vmem:[%s377 + $0x8c] sm:$0xf]
        %v476 = vld [vmem:[%s377 + $0x90] sm:$0xf]
        %v477 = vld [vmem:[%s377 + $0x94] sm:$0xf]
        %v478 = vld [vmem:[%s377 + $0x98] sm:$0xf]
        %v479 = vld [vmem:[%s377 + $0x9c] sm:$0xf]
        %v480 = vld [vmem:[#allocation7] sm:$0xf]
        %v481 = vld [vmem:[#allocation7 + $0x4] sm:$0xf]
        %v482 = vld [vmem:[#allocation7 + $0x8] sm:$0xf]
        %v483 = vld [vmem:[#allocation7 + $0xc] sm:$0xf]
        %v484 = vld [vmem:[#allocation7 + $0x10] sm:$0x3]
        %v485 = vld [vmem:[#allocation9] sm:$0x1]
        %v487 = vlaneseq
        %v488 = vshrl.u32 %v487, 7
        %v489 = vsub.s32 0, %v488
        %v490 = vrot.slane %v485, %v489
        %v532 = vunpack.c.l.b16 %v440
        %v533 = vunpack.c.l.b16 %v441
        %v534 = vunpack.c.l.b16 %v442
        %v535 = vunpack.c.l.b16 %v443
        %v536 = vunpack.c.l.b16 %v444
        %v537 = vunpack.c.l.b16 %v445
        %v538 = vunpack.c.l.b16 %v446
        %v539 = vunpack.c.l.b16 %v447
        %v540 = vunpack.c.l.b16 %v448
        %v541 = vunpack.c.l.b16 %v449
        %v542 = vunpack.c.l.b16 %v450
        %v543 = vunpack.c.l.b16 %v451
        %v544 = vunpack.c.l.b16 %v452
        %v545 = vunpack.c.l.b16 %v453
        %v546 = vunpack.c.l.b16 %v454
        %v547 = vunpack.c.l.b16 %v455
        %v548 = vunpack.c.l.b16 %v456
        %v549 = vunpack.c.l.b16 %v457
        %v550 = vunpack.c.l.b16 %v458
        %v551 = vunpack.c.l.b16 %v459
        %v552 = vunpack.c.l.b16 %v460
        %v553 = vunpack.c.l.b16 %v461
        %v554 = vunpack.c.l.b16 %v462
        %v555 = vunpack.c.l.b16 %v463
        %v556 = vunpack.c.l.b16 %v464
        %v557 = vunpack.c.l.b16 %v465
        %v558 = vunpack.c.l.b16 %v466
        %v559 = vunpack.c.l.b16 %v467
        %v560 = vunpack.c.l.b16 %v468
        %v561 = vunpack.c.l.b16 %v469
        %v562 = vunpack.c.l.b16 %v470
        %v563 = vunpack.c.l.b16 %v471
        %v564 = vunpack.c.l.b16 %v472
        %v565 = vunpack.c.l.b16 %v473
        %v566 = vunpack.c.l.b16 %v474
        %v567 = vunpack.c.l.b16 %v475
        %v568 = vunpack.c.l.b16 %v476
        %v569 = vunpack.c.l.b16 %v477
        %v570 = vunpack.c.l.b16 %v478
        %v571 = vunpack.c.l.b16 %v479
        %v572 = vpack.c.b16 %v533, %v532
        %v573 = vpack.c.b16 %v535, %v534
        %v574 = vpack.c.b16 %v537, %v536
        %v575 = vpack.c.b16 %v539, %v538
        %v576 = vpack.c.b16 %v541, %v540
        %v577 = vpack.c.b16 %v543, %v542
        %v578 = vpack.c.b16 %v545, %v544
        %v579 = vpack.c.b16 %v547, %v546
        %v580 = vpack.c.b16 %v549, %v548
        %v581 = vpack.c.b16 %v551, %v550
        %v582 = vpack.c.b16 %v553, %v552
        %v583 = vpack.c.b16 %v555, %v554
        %v584 = vpack.c.b16 %v557, %v556
        %v585 = vpack.c.b16 %v559, %v558
        %v586 = vpack.c.b16 %v561, %v560
        %v587 = vpack.c.b16 %v563, %v562
        %v588 = vpack.c.b16 %v565, %v564
        %v589 = vpack.c.b16 %v567, %v566
        %v590 = vpack.c.b16 %v569, %v568
        %v591 = vpack.c.b16 %v571, %v570
        %v597 = vunpack.c.l.b16 %v480
        %v598 = vunpack.c.l.b16 %v481
        %v599 = vunpack.c.l.b16 %v482
        %v600 = vunpack.c.l.b16 %v483
        %v601 = vunpack.c.l.b16 %v484
        %v602 = vpack.c.b16 %v598, %v597
        %v603 = vpack.c.b16 %v600, %v599
        %v604 = vpack.c.b16 %v601, %v601
        %vm607 = vcmask 293888
        %v609 = vsel %vm607, %v572, 0
        %v612 = vsel %vm607, %v573, 0
        %v615 = vsel %vm607, %v574, 0
        %v618 = vsel %vm607, %v575, 0
        %v621 = vsel %vm607, %v576, 0
        %v624 = vsel %vm607, %v577, 0
        %v627 = vsel %vm607, %v578, 0
        %v630 = vsel %vm607, %v579, 0
        %v633 = vsel %vm607, %v580, 0
        %v636 = vsel %vm607, %v581, 0
        %v639 = vsel %vm607, %v582, 0
        %v642 = vsel %vm607, %v583, 0
        %v645 = vsel %vm607, %v584, 0
        %v648 = vsel %vm607, %v585, 0
        %v651 = vsel %vm607, %v586, 0
        %v654 = vsel %vm607, %v587, 0
        %v657 = vsel %vm607, %v588, 0
        %v660 = vsel %vm607, %v589, 0
        %v663 = vsel %vm607, %v590, 0
        %v666 = vsel %vm607, %v591, 0
        %vm668 = vcmask 1041408
        %v670 = vsel %vm668, %v604, 0
        %672 = vmatprep.subr.bf16.mxu0 0
        %673 = vmatpush1.bf16.msra.mxu0 %v602
        %674 = vmatprep.subr.bf16.mxu0 0
        %675 = vmatpush1.bf16.msra.mxu0 %v603
        %676 = vmatprep.subr.bf16.mxu0 0
        %677 = vmatpush1.bf16.msra.mxu0 %v670
        %678 = vmatprep.subr.bf16.mxu0 0
        %679 = vmatpush1.bf16.msra.mxu0 0
        %680 = vmatprep.subr.bf16.mxu0 0
        %681 = vmatpush1.bf16.msra.mxu0 0
        %682 = vmatprep.subr.bf16.mxu0 0
        %683 = vmatpush1.bf16.msra.mxu0 0
        %684 = vmatprep.subr.bf16.mxu0 0
        %685 = vmatpush1.bf16.msra.mxu0 0
        %686 = vmatprep.subr.bf16.mxu0 0
        %687 = vmatpush1.bf16.msra.mxu0 0
        %688 = vmatprep.subr.bf16.mxu0 0
        %689 = vmatpush1.bf16.msra.mxu0 0
        %690 = vmatprep.subr.bf16.mxu0 0
        %691 = vmatpush1.bf16.msra.mxu0 0
        %692 = vmatprep.subr.bf16.mxu0 0
        %693 = vmatpush1.bf16.msra.mxu0 0
        %694 = vmatprep.subr.bf16.mxu0 0
        %695 = vmatpush1.bf16.msra.mxu0 0
        %696 = vmatprep.subr.bf16.mxu0 0
        %697 = vmatpush1.bf16.msra.mxu0 0
        %698 = vmatprep.subr.bf16.mxu0 0
        %699 = vmatpush1.bf16.msra.mxu0 0
        %700 = vmatprep.subr.bf16.mxu0 0
        %701 = vmatpush1.bf16.msra.mxu0 0
        %702 = vmatprep.subr.bf16.mxu0 0
        %703 = vmatpush1.bf16.msra.mxu0 0
        %704 = vmatprep.mubr.bf16.mxu0 0
        %705 = vmatmul.mubr.bf16.gmra.mrb[0].mxu0 %v609
        %v706 = vpop.f32.mrb[0].mxu0
        %v707 = vadd.f32 %v490, %v706
        %v708 = vpop.f32.mrb[0].mxu0
        %v709 = vpop.f32.mrb[0].mxu0
        %v710 = vadd.f32 %v490, %v709
        %v711 = vpop.f32.mrb[0].mxu0
        %712 = vmatprep.mubr.bf16.mxu0 0
        %713 = vmatmul.mubr.bf16.gmra.mrb[0].mxu0 %v612
        %v714 = vpop.f32.mrb[0].mxu0
        %v715 = vadd.f32 %v490, %v714
        %v716 = vpop.f32.mrb[0].mxu0
        %v717 = vpop.f32.mrb[0].mxu0
        %v718 = vadd.f32 %v490, %v717
        %v719 = vpop.f32.mrb[0].mxu0
        %720 = vmatprep.mubr.bf16.mxu0 0
        %721 = vmatmul.mubr.bf16.gmra.mrb[0].mxu0 %v615
        %v722 = vpop.f32.mrb[0].mxu0
        %v723 = vadd.f32 %v490, %v722
        %v724 = vpop.f32.mrb[0].mxu0
        %v725 = vpop.f32.mrb[0].mxu0
        %v726 = vadd.f32 %v490, %v725
        %v727 = vpop.f32.mrb[0].mxu0
        %728 = vmatprep.mubr.bf16.mxu0 0
        %729 = vmatmul.mubr.bf16.gmra.mrb[0].mxu0 %v618
        %v730 = vpop.f32.mrb[0].mxu0
        %v731 = vadd.f32 %v490, %v730
        %v732 = vpop.f32.mrb[0].mxu0
        %v733 = vpop.f32.mrb[0].mxu0
        %v734 = vadd.f32 %v490, %v733
        %v735 = vpop.f32.mrb[0].mxu0
        %736 = vmatprep.mubr.bf16.mxu0 0
        %737 = vmatmul.mubr.bf16.gmra.mrb[0].mxu0 %v621
        %v738 = vpop.f32.mrb[0].mxu0
        %v739 = vadd.f32 %v490, %v738
        %v740 = vpop.f32.mrb[0].mxu0
        %v741 = vpop.f32.mrb[0].mxu0
        %v742 = vadd.f32 %v490, %v741
        %v743 = vpop.f32.mrb[0].mxu0
        %744 = vmatprep.mubr.bf16.mxu0 0
        %745 = vmatmul.mubr.bf16.gmra.mrb[0].mxu0 %v624
        %v746 = vpop.f32.mrb[0].mxu0
        %v747 = vadd.f32 %v490, %v746
        %v748 = vpop.f32.mrb[0].mxu0
        %v749 = vpop.f32.mrb[0].mxu0
        %v750 = vadd.f32 %v490, %v749
        %v751 = vpop.f32.mrb[0].mxu0
        %752 = vmatprep.mubr.bf16.mxu0 0
        %753 = vmatmul.mubr.bf16.gmra.mrb[0].mxu0 %v627
        %v754 = vpop.f32.mrb[0].mxu0
        %v755 = vadd.f32 %v490, %v754
        %v756 = vpop.f32.mrb[0].mxu0
        %v757 = vpop.f32.mrb[0].mxu0
        %v758 = vadd.f32 %v490, %v757
        %v759 = vpop.f32.mrb[0].mxu0
        %760 = vmatprep.mubr.bf16.mxu0 0
        %761 = vmatmul.mubr.bf16.gmra.mrb[0].mxu0 %v630
        %v762 = vpop.f32.mrb[0].mxu0
        %v763 = vadd.f32 %v490, %v762
        %v764 = vpop.f32.mrb[0].mxu0
        %v765 = vpop.f32.mrb[0].mxu0
        %v766 = vadd.f32 %v490, %v765
        %v767 = vpop.f32.mrb[0].mxu0
        %768 = vmatprep.mubr.bf16.mxu0 0
        %769 = vmatmul.mubr.bf16.gmra.mrb[0].mxu0 %v633
        %v770 = vpop.f32.mrb[0].mxu0
        %v771 = vadd.f32 %v490, %v770
        %v772 = vpop.f32.mrb[0].mxu0
        %v773 = vpop.f32.mrb[0].mxu0
        %v774 = vadd.f32 %v490, %v773
        %v775 = vpop.f32.mrb[0].mxu0
        %776 = vmatprep.mubr.bf16.mxu0 0
        %777 = vmatmul.mubr.bf16.gmra.mrb[0].mxu0 %v636
        %v778 = vpop.f32.mrb[0].mxu0
        %v779 = vadd.f32 %v490, %v778
        %v780 = vpop.f32.mrb[0].mxu0
        %v781 = vpop.f32.mrb[0].mxu0
        %v782 = vadd.f32 %v490, %v781
        %v783 = vpop.f32.mrb[0].mxu0
        %784 = vmatprep.mubr.bf16.mxu0 0
        %785 = vmatmul.mubr.bf16.gmra.mrb[0].mxu0 %v639
        %v786 = vpop.f32.mrb[0].mxu0
        %v787 = vadd.f32 %v490, %v786
        %v788 = vpop.f32.mrb[0].mxu0
        %v789 = vpop.f32.mrb[0].mxu0
        %v790 = vadd.f32 %v490, %v789
        %v791 = vpop.f32.mrb[0].mxu0
        %792 = vmatprep.mubr.bf16.mxu0 0
        %793 = vmatmul.mubr.bf16.gmra.mrb[0].mxu0 %v642
        %v794 = vpop.f32.mrb[0].mxu0
        %v795 = vadd.f32 %v490, %v794
        %v796 = vpop.f32.mrb[0].mxu0
        %v797 = vpop.f32.mrb[0].mxu0
        %v798 = vadd.f32 %v490, %v797
        %v799 = vpop.f32.mrb[0].mxu0
        %800 = vmatprep.mubr.bf16.mxu0 0
        %801 = vmatmul.mubr.bf16.gmra.mrb[0].mxu0 %v645
        %v802 = vpop.f32.mrb[0].mxu0
        %v803 = vadd.f32 %v490, %v802
        %v804 = vpop.f32.mrb[0].mxu0
        %v805 = vpop.f32.mrb[0].mxu0
        %v806 = vadd.f32 %v490, %v805
        %v807 = vpop.f32.mrb[0].mxu0
        %808 = vmatprep.mubr.bf16.mxu0 0
        %809 = vmatmul.mubr.bf16.gmra.mrb[0].mxu0 %v648
        %v810 = vpop.f32.mrb[0].mxu0
        %v811 = vadd.f32 %v490, %v810
        %v812 = vpop.f32.mrb[0].mxu0
        %v813 = vpop.f32.mrb[0].mxu0
        %v814 = vadd.f32 %v490, %v813
        %v815 = vpop.f32.mrb[0].mxu0
        %816 = vmatprep.mubr.bf16.mxu0 0
        %817 = vmatmul.mubr.bf16.gmra.mrb[0].mxu0 %v651
        %v818 = vpop.f32.mrb[0].mxu0
        %v819 = vadd.f32 %v490, %v818
        %v820 = vpop.f32.mrb[0].mxu0
        %v821 = vpop.f32.mrb[0].mxu0
        %v822 = vadd.f32 %v490, %v821
        %v823 = vpop.f32.mrb[0].mxu0
        %824 = vmatprep.mubr.bf16.mxu0 0
        %825 = vmatmul.mubr.bf16.gmra.mrb[0].mxu0 %v654
        %v826 = vpop.f32.mrb[0].mxu0
        %v827 = vadd.f32 %v490, %v826
        %v828 = vpop.f32.mrb[0].mxu0
        %v829 = vpop.f32.mrb[0].mxu0
        %v830 = vadd.f32 %v490, %v829
        %v831 = vpop.f32.mrb[0].mxu0
        %832 = vmatprep.mubr.bf16.mxu0 0
        %833 = vmatmul.mubr.bf16.gmra.mrb[0].mxu0 %v657
        %v834 = vpop.f32.mrb[0].mxu0
        %v835 = vadd.f32 %v490, %v834
        %v836 = vpop.f32.mrb[0].mxu0
        %v837 = vpop.f32.mrb[0].mxu0
        %v838 = vadd.f32 %v490, %v837
        %v839 = vpop.f32.mrb[0].mxu0
        %840 = vmatprep.mubr.bf16.mxu0 0
        %841 = vmatmul.mubr.bf16.gmra.mrb[0].mxu0 %v660
        %v842 = vpop.f32.mrb[0].mxu0
        %v843 = vadd.f32 %v490, %v842
        %v844 = vpop.f32.mrb[0].mxu0
        %v845 = vpop.f32.mrb[0].mxu0
        %v846 = vadd.f32 %v490, %v845
        %v847 = vpop.f32.mrb[0].mxu0
        %848 = vmatprep.mubr.bf16.mxu0 0
        %849 = vmatmul.mubr.bf16.gmra.mrb[0].mxu0 %v663
        %v850 = vpop.f32.mrb[0].mxu0
        %v851 = vadd.f32 %v490, %v850
        %v852 = vpop.f32.mrb[0].mxu0
        %v853 = vpop.f32.mrb[0].mxu0
        %v854 = vadd.f32 %v490, %v853
        %v855 = vpop.f32.mrb[0].mxu0
        %856 = vmatprep.mubr.bf16.mxu0 0
        %857 = vmatmul.mubr.bf16.gmra.mrb[0].mxu0 %v666
        %v858 = vpop.f32.mrb[0].mxu0
        %v859 = vadd.f32 %v490, %v858
        %v860 = vpop.f32.mrb[0].mxu0
        %v861 = vpop.f32.mrb[0].mxu0
        %v862 = vadd.f32 %v490, %v861
        %v863 = vpop.f32.mrb[0].mxu0
        %864 = vdwg.mxu0
        %vm865 = vcmp.ge.f32.partialorder %v707, 0.0
        %vm866 = vcmp.ge.f32.partialorder %v710, 0.0
        %vm867 = vcmp.ge.f32.partialorder %v715, 0.0
        %vm868 = vcmp.ge.f32.partialorder %v718, 0.0
        %vm869 = vcmp.ge.f32.partialorder %v723, 0.0
        %vm870 = vcmp.ge.f32.partialorder %v726, 0.0
        %vm871 = vcmp.ge.f32.partialorder %v731, 0.0
        %vm872 = vcmp.ge.f32.partialorder %v734, 0.0
        %vm873 = vcmp.ge.f32.partialorder %v739, 0.0
        %vm874 = vcmp.ge.f32.partialorder %v742, 0.0
        %vm875 = vcmp.ge.f32.partialorder %v747, 0.0
        %vm876 = vcmp.ge.f32.partialorder %v750, 0.0
        %vm877 = vcmp.ge.f32.partialorder %v755, 0.0
        %vm878 = vcmp.ge.f32.partialorder %v758, 0.0
        %vm879 = vcmp.ge.f32.partialorder %v763, 0.0
        %vm880 = vcmp.ge.f32.partialorder %v766, 0.0
        %vm881 = vcmp.ge.f32.partialorder %v771, 0.0
        %vm882 = vcmp.ge.f32.partialorder %v774, 0.0
        %vm883 = vcmp.ge.f32.partialorder %v779, 0.0
        %vm884 = vcmp.ge.f32.partialorder %v782, 0.0
        %vm885 = vcmp.ge.f32.partialorder %v787, 0.0
        %vm886 = vcmp.ge.f32.partialorder %v790, 0.0
        %vm887 = vcmp.ge.f32.partialorder %v795, 0.0
        %vm888 = vcmp.ge.f32.partialorder %v798, 0.0
        %vm889 = vcmp.ge.f32.partialorder %v803, 0.0
        %vm890 = vcmp.ge.f32.partialorder %v806, 0.0
        %vm891 = vcmp.ge.f32.partialorder %v811, 0.0
        %vm892 = vcmp.ge.f32.partialorder %v814, 0.0
        %vm893 = vcmp.ge.f32.partialorder %v819, 0.0
        %vm894 = vcmp.ge.f32.partialorder %v822, 0.0
        %vm895 = vcmp.ge.f32.partialorder %v827, 0.0
        %vm896 = vcmp.ge.f32.partialorder %v830, 0.0
        %vm897 = vcmp.ge.f32.partialorder %v835, 0.0
        %vm898 = vcmp.ge.f32.partialorder %v838, 0.0
        %vm899 = vcmp.ge.f32.partialorder %v843, 0.0
        %vm900 = vcmp.ge.f32.partialorder %v846, 0.0
        %vm901 = vcmp.ge.f32.partialorder %v851, 0.0
        %vm902 = vcmp.ge.f32.partialorder %v854, 0.0
        %vm903 = vcmp.ge.f32.partialorder %v859, 0.0
        %vm904 = vcmp.ge.f32.partialorder %v862, 0.0
        %v905 = vmul.f32 %v707, 0.2
        %v906 = vmul.f32 %v710, 0.2
        %v907 = vmul.f32 %v715, 0.2
        %v908 = vmul.f32 %v718, 0.2
        %v909 = vmul.f32 %v723, 0.2
        %v910 = vmul.f32 %v726, 0.2
        %v911 = vmul.f32 %v731, 0.2
        %v912 = vmul.f32 %v734, 0.2
        %v913 = vmul.f32 %v739, 0.2
        %v914 = vmul.f32 %v742, 0.2
        %v915 = vmul.f32 %v747, 0.2
        %v916 = vmul.f32 %v750, 0.2
        %v917 = vmul.f32 %v755, 0.2
        %v918 = vmul.f32 %v758, 0.2
        %v919 = vmul.f32 %v763, 0.2
        %v920 = vmul.f32 %v766, 0.2
        %v921 = vmul.f32 %v771, 0.2
        %v922 = vmul.f32 %v774, 0.2
        %v923 = vmul.f32 %v779, 0.2
        %v924 = vmul.f32 %v782, 0.2
        %v925 = vmul.f32 %v787, 0.2
        %v926 = vmul.f32 %v790, 0.2
        %v927 = vmul.f32 %v795, 0.2
        %v928 = vmul.f32 %v798, 0.2
        %v929 = vmul.f32 %v803, 0.2
        %v930 = vmul.f32 %v806, 0.2
        %v931 = vmul.f32 %v811, 0.2
        %v932 = vmul.f32 %v814, 0.2
        %v933 = vmul.f32 %v819, 0.2
        %v934 = vmul.f32 %v822, 0.2
        %v935 = vmul.f32 %v827, 0.2
        %v936 = vmul.f32 %v830, 0.2
        %v937 = vmul.f32 %v835, 0.2
        %v938 = vmul.f32 %v838, 0.2
        %v939 = vmul.f32 %v843, 0.2
        %v940 = vmul.f32 %v846, 0.2
        %v941 = vmul.f32 %v851, 0.2
        %v942 = vmul.f32 %v854, 0.2
        %v943 = vmul.f32 %v859, 0.2
        %v944 = vmul.f32 %v862, 0.2
        %v945 = vsel %vm865, %v707, %v905
        %v946 = vsel %vm866, %v710, %v906
        %v947 = vsel %vm867, %v715, %v907
        %v948 = vsel %vm868, %v718, %v908
        %v949 = vsel %vm869, %v723, %v909
        %v950 = vsel %vm870, %v726, %v910
        %v951 = vsel %vm871, %v731, %v911
        %v952 = vsel %vm872, %v734, %v912
        %v953 = vsel %vm873, %v739, %v913
        %v954 = vsel %vm874, %v742, %v914
        %v955 = vsel %vm875, %v747, %v915
        %v956 = vsel %vm876, %v750, %v916
        %v957 = vsel %vm877, %v755, %v917
        %v958 = vsel %vm878, %v758, %v918
        %v959 = vsel %vm879, %v763, %v919
        %v960 = vsel %vm880, %v766, %v920
        %v961 = vsel %vm881, %v771, %v921
        %v962 = vsel %vm882, %v774, %v922
        %v963 = vsel %vm883, %v779, %v923
        %v964 = vsel %vm884, %v782, %v924
        %v965 = vsel %vm885, %v787, %v925
        %v966 = vsel %vm886, %v790, %v926
        %v967 = vsel %vm887, %v795, %v927
        %v968 = vsel %vm888, %v798, %v928
        %v969 = vsel %vm889, %v803, %v929
        %v970 = vsel %vm890, %v806, %v930
        %v971 = vsel %vm891, %v811, %v931
        %v972 = vsel %vm892, %v814, %v932
        %v973 = vsel %vm893, %v819, %v933
        %v974 = vsel %vm894, %v822, %v934
        %v975 = vsel %vm895, %v827, %v935
        %v976 = vsel %vm896, %v830, %v936
        %v977 = vsel %vm897, %v835, %v937
        %v978 = vsel %vm898, %v838, %v938
        %v979 = vsel %vm899, %v843, %v939
        %v980 = vsel %vm900, %v846, %v940
        %v981 = vsel %vm901, %v851, %v941
        %v982 = vsel %vm902, %v854, %v942
        %v983 = vsel %vm903, %v859, %v943
        %v984 = vsel %vm904, %v862, %v944
        %vm985 = vcmask 523264
        %986 = vst.msk [vmem:[#allocation2] sm:$0xff] %vm985, %v945
        %987 = vst.msk [vmem:[#allocation2 + $0x8] sm:$0xff] %vm985, %v946
        %988 = vst.msk [vmem:[#allocation2 + $0x10] sm:$0xff] %vm985, %v947
        %989 = vst.msk [vmem:[#allocation2 + $0x18] sm:$0xff] %vm985, %v948
        %990 = vst.msk [vmem:[#allocation2 + $0x20] sm:$0xff] %vm985, %v949
        %991 = vst.msk [vmem:[#allocation2 + $0x28] sm:$0xff] %vm985, %v950
        %992 = vst.msk [vmem:[#allocation2 + $0x30] sm:$0xff] %vm985, %v951
        %993 = vst.msk [vmem:[#allocation2 + $0x38] sm:$0xff] %vm985, %v952
        %994 = vst.msk [vmem:[#allocation2 + $0x40] sm:$0xff] %vm985, %v953
        %995 = vst.msk [vmem:[#allocation2 + $0x48] sm:$0xff] %vm985, %v954
        %996 = vst.msk [vmem:[#allocation2 + $0x50] sm:$0xff] %vm985, %v955
        %997 = vst.msk [vmem:[#allocation2 + $0x58] sm:$0xff] %vm985, %v956
        %998 = vst.msk [vmem:[#allocation2 + $0x60] sm:$0xff] %vm985, %v957
        %999 = vst.msk [vmem:[#allocation2 + $0x68] sm:$0xff] %vm985, %v958
        %1000 = vst.msk [vmem:[#allocation2 + $0x70] sm:$0xff] %vm985, %v959
        %1001 = vst.msk [vmem:[#allocation2 + $0x78] sm:$0xff] %vm985, %v960
        %1002 = vst.msk [vmem:[#allocation2 + $0x80] sm:$0xff] %vm985, %v961
        %1003 = vst.msk [vmem:[#allocation2 + $0x88] sm:$0xff] %vm985, %v962
        %1004 = vst.msk [vmem:[#allocation2 + $0x90] sm:$0xff] %vm985, %v963
        %1005 = vst.msk [vmem:[#allocation2 + $0x98] sm:$0xff] %vm985, %v964
        %1006 = vst.msk [vmem:[#allocation2 + $0xa0] sm:$0xff] %vm985, %v965
        %1007 = vst.msk [vmem:[#allocation2 + $0xa8] sm:$0xff] %vm985, %v966
        %1008 = vst.msk [vmem:[#allocation2 + $0xb0] sm:$0xff] %vm985, %v967
        %1009 = vst.msk [vmem:[#allocation2 + $0xb8] sm:$0xff] %vm985, %v968
        %1010 = vst.msk [vmem:[#allocation2 + $0xc0] sm:$0xff] %vm985, %v969
        %1011 = vst.msk [vmem:[#allocation2 + $0xc8] sm:$0xff] %vm985, %v970
        %1012 = vst.msk [vmem:[#allocation2 + $0xd0] sm:$0xff] %vm985, %v971
        %1013 = vst.msk [vmem:[#allocation2 + $0xd8] sm:$0xff] %vm985, %v972
        %1014 = vst.msk [vmem:[#allocation2 + $0xe0] sm:$0xff] %vm985, %v973
        %1015 = vst.msk [vmem:[#allocation2 + $0xe8] sm:$0xff] %vm985, %v974
        %1016 = vst.msk [vmem:[#allocation2 + $0xf0] sm:$0xff] %vm985, %v975
        %1017 = vst.msk [vmem:[#allocation2 + $0xf8] sm:$0xff] %vm985, %v976
        %1018 = vst.msk [vmem:[#allocation2 + $0x100] sm:$0xff] %vm985, %v977
        %1019 = vst.msk [vmem:[#allocation2 + $0x108] sm:$0xff] %vm985, %v978
        %1020 = vst.msk [vmem:[#allocation2 + $0x110] sm:$0xff] %vm985, %v979
        %1021 = vst.msk [vmem:[#allocation2 + $0x118] sm:$0xff] %vm985, %v980
        %1022 = vst.msk [vmem:[#allocation2 + $0x120] sm:$0xff] %vm985, %v981
        %1023 = vst.msk [vmem:[#allocation2 + $0x128] sm:$0xff] %vm985, %v982
        %1024 = vst.msk [vmem:[#allocation2 + $0x130] sm:$0xff] %vm985, %v983
        %1025 = vst.msk [vmem:[#allocation2 + $0x138] sm:$0xff] %vm985, %v984
        %p1026 = scmp.eq.s32.totalorder %s34, 0
        // Predicated region
        $region85: #{resblock_pallas.1} parent=51 // pred_check
          %p1027 = pneg %p1026
        $region86: #{resblock_pallas.1} parent=51 // pred_check_branch
          %1029 = sbr.rel (%p1027) target = $region88
        $region87: #{resblock_pallas.1} parent=51 // pred_region
          %1030 = vst.msk [vmem:[#allocation2] sm:$0xff] %vm985, 0.0
          %1031 = vst.msk [vmem:[#allocation2 + $0x8] sm:$0xff] %vm985, 0.0
          %1032 = vst.msk [vmem:[#allocation2 + $0x10] sm:$0xff] %vm985, 0.0
          %1033 = vst.msk [vmem:[#allocation2 + $0x18] sm:$0xff] %vm985, 0.0
          %1034 = vst.msk [vmem:[#allocation2 + $0x120] sm:$0xff] %vm985, 0.0
          %1035 = vst.msk [vmem:[#allocation2 + $0x128] sm:$0xff] %vm985, 0.0
          %1036 = vst.msk [vmem:[#allocation2 + $0x130] sm:$0xff] %vm985, 0.0
          %1037 = vst.msk [vmem:[#allocation2 + $0x138] sm:$0xff] %vm985, 0.0
        $region88: #{resblock_pallas.1} parent=51 // pred_fallthru
          _
        %v1038 = vlaneseq
        %v1039 = vshrl.u32 %v1038, 7
        %v1040 = vadd.s32 %v1039, 8
        %v1041 = vadd.s32 %v1039, 16
        %v1042 = vadd.s32 %v1039, 24
        %v1043 = vadd.s32 %v1039, 32
        %v1044 = vadd.s32 %v1039, 40
        %v1045 = vadd.s32 %v1039, 48
        %v1046 = vadd.s32 %v1039, 56
        %v1047 = vadd.s32 %v1039, 64
        %v1048 = vadd.s32 %v1039, 72
        %v1049 = vadd.s32 %v1039, 80
        %v1050 = vadd.s32 %v1039, 88
        %v1051 = vadd.s32 %v1039, 96
        %v1052 = vadd.s32 %v1039, 104
        %v1053 = vadd.s32 %v1039, 112
        %v1054 = vadd.s32 %v1039, 120
        %v1055 = vadd.s32 %v1039, 128
        %v1056 = vadd.s32 %v1039, 136
        %v1057 = vadd.s32 %v1039, 144
        %v1058 = vadd.s32 %v1039, 152
        %v1059 = vadd.s32 %v1039, 160
        %v1060 = vadd.s32 %v1039, 168
        %v1061 = vadd.s32 %v1039, 176
        %v1062 = vadd.s32 %v1039, 184
        %v1063 = vadd.s32 %v1039, 192
        %v1064 = vadd.s32 %v1039, 200
        %v1065 = vadd.s32 %v1039, 208
        %v1066 = vadd.s32 %v1039, 216
        %v1067 = vadd.s32 %v1039, 224
        %v1068 = vadd.s32 %v1039, 232
        %v1069 = vadd.s32 %v1039, 240
        %v1070 = vadd.s32 %v1039, 248
        %v1071 = vadd.s32 %v1039, 256
        %v1072 = vadd.s32 %v1039, 264
        %v1073 = vadd.s32 %v1039, 272
        %v1074 = vadd.s32 %v1039, 280
        %vm1075 = vcmp.lt.s32.totalorder %v1039, 0
        %v1076 = vsub.s32 0, %v1039
        %v1077 = vsel %vm1075, %v1076, %v1039
        %v1078 = vshrl.u32 %v1077, 4
        %v1079 = vand.u32 %v1077, 15
        %v1080 = vsub.s32 0, %v1079
        %v1081 = vsel %vm1075, %v1080, %v1079
        %vm1082 = vcmp.lt.s32.totalorder %v1040, 0
        %v1083 = vsub.s32 0, %v1040
        %v1084 = vsel %vm1082, %v1083, %v1040
        %v1085 = vshrl.u32 %v1084, 4
        %v1086 = vand.u32 %v1084, 15
        %v1087 = vsub.s32 0, %v1086
        %v1088 = vsel %vm1082, %v1087, %v1086
        %vm1089 = vcmp.lt.s32.totalorder %v1041, 0
        %v1090 = vsub.s32 0, %v1041
        %v1091 = vsel %vm1089, %v1090, %v1041
        %v1092 = vshrl.u32 %v1091, 4
        %v1093 = vand.u32 %v1091, 15
        %v1094 = vsub.s32 0, %v1093
        %v1095 = vsel %vm1089, %v1094, %v1093
        %vm1096 = vcmp.lt.s32.totalorder %v1042, 0
        %v1097 = vsub.s32 0, %v1042
        %v1098 = vsel %vm1096, %v1097, %v1042
        %v1099 = vshrl.u32 %v1098, 4
        %v1100 = vand.u32 %v1098, 15
        %v1101 = vsub.s32 0, %v1100
        %v1102 = vsel %vm1096, %v1101, %v1100
        %vm1103 = vcmp.lt.s32.totalorder %v1043, 0
        %v1104 = vsub.s32 0, %v1043
        %v1105 = vsel %vm1103, %v1104, %v1043
        %v1106 = vshrl.u32 %v1105, 4
        %v1107 = vand.u32 %v1105, 15
        %v1108 = vsub.s32 0, %v1107
        %v1109 = vsel %vm1103, %v1108, %v1107
        %vm1110 = vcmp.lt.s32.totalorder %v1044, 0
        %v1111 = vsub.s32 0, %v1044
        %v1112 = vsel %vm1110, %v1111, %v1044
        %v1113 = vshrl.u32 %v1112, 4
        %v1114 = vand.u32 %v1112, 15
        %v1115 = vsub.s32 0, %v1114
        %v1116 = vsel %vm1110, %v1115, %v1114
        %vm1117 = vcmp.lt.s32.totalorder %v1045, 0
        %v1118 = vsub.s32 0, %v1045
        %v1119 = vsel %vm1117, %v1118, %v1045
        %v1120 = vshrl.u32 %v1119, 4
        %v1121 = vand.u32 %v1119, 15
        %v1122 = vsub.s32 0, %v1121
        %v1123 = vsel %vm1117, %v1122, %v1121
        %vm1124 = vcmp.lt.s32.totalorder %v1046, 0
        %v1125 = vsub.s32 0, %v1046
        %v1126 = vsel %vm1124, %v1125, %v1046
        %v1127 = vshrl.u32 %v1126, 4
        %v1128 = vand.u32 %v1126, 15
        %v1129 = vsub.s32 0, %v1128
        %v1130 = vsel %vm1124, %v1129, %v1128
        %vm1131 = vcmp.lt.s32.totalorder %v1047, 0
        %v1132 = vsub.s32 0, %v1047
        %v1133 = vsel %vm1131, %v1132, %v1047
        %v1134 = vshrl.u32 %v1133, 4
        %v1135 = vand.u32 %v1133, 15
        %v1136 = vsub.s32 0, %v1135
        %v1137 = vsel %vm1131, %v1136, %v1135
        %vm1138 = vcmp.lt.s32.totalorder %v1048, 0
        %v1139 = vsub.s32 0, %v1048
        %v1140 = vsel %vm1138, %v1139, %v1048
        %v1141 = vshrl.u32 %v1140, 4
        %v1142 = vand.u32 %v1140, 15
        %v1143 = vsub.s32 0, %v1142
        %v1144 = vsel %vm1138, %v1143, %v1142
        %vm1145 = vcmp.lt.s32.totalorder %v1049, 0
        %v1146 = vsub.s32 0, %v1049
        %v1147 = vsel %vm1145, %v1146, %v1049
        %v1148 = vshrl.u32 %v1147, 4
        %v1149 = vand.u32 %v1147, 15
        %v1150 = vsub.s32 0, %v1149
        %v1151 = vsel %vm1145, %v1150, %v1149
        %vm1152 = vcmp.lt.s32.totalorder %v1050, 0
        %v1153 = vsub.s32 0, %v1050
        %v1154 = vsel %vm1152, %v1153, %v1050
        %v1155 = vshrl.u32 %v1154, 4
        %v1156 = vand.u32 %v1154, 15
        %v1157 = vsub.s32 0, %v1156
        %v1158 = vsel %vm1152, %v1157, %v1156
        %vm1159 = vcmp.lt.s32.totalorder %v1051, 0
        %v1160 = vsub.s32 0, %v1051
        %v1161 = vsel %vm1159, %v1160, %v1051
        %v1162 = vshrl.u32 %v1161, 4
        %v1163 = vand.u32 %v1161, 15
        %v1164 = vsub.s32 0, %v1163
        %v1165 = vsel %vm1159, %v1164, %v1163
        %vm1166 = vcmp.lt.s32.totalorder %v1052, 0
        %v1167 = vsub.s32 0, %v1052
        %v1168 = vsel %vm1166, %v1167, %v1052
        %v1169 = vshrl.u32 %v1168, 4
        %v1170 = vand.u32 %v1168, 15
        %v1171 = vsub.s32 0, %v1170
        %v1172 = vsel %vm1166, %v1171, %v1170
        %vm1173 = vcmp.lt.s32.totalorder %v1053, 0
        %v1174 = vsub.s32 0, %v1053
        %v1175 = vsel %vm1173, %v1174, %v1053
        %v1176 = vshrl.u32 %v1175, 4
        %v1177 = vand.u32 %v1175, 15
        %v1178 = vsub.s32 0, %v1177
        %v1179 = vsel %vm1173, %v1178, %v1177
        %vm1180 = vcmp.lt.s32.totalorder %v1054, 0
        %v1181 = vsub.s32 0, %v1054
        %v1182 = vsel %vm1180, %v1181, %v1054
        %v1183 = vshrl.u32 %v1182, 4
        %v1184 = vand.u32 %v1182, 15
        %v1185 = vsub.s32 0, %v1184
        %v1186 = vsel %vm1180, %v1185, %v1184
        %vm1187 = vcmp.lt.s32.totalorder %v1055, 0
        %v1188 = vsub.s32 0, %v1055
        %v1189 = vsel %vm1187, %v1188, %v1055
        %v1190 = vshrl.u32 %v1189, 4
        %v1191 = vand.u32 %v1189, 15
        %v1192 = vsub.s32 0, %v1191
        %v1193 = vsel %vm1187, %v1192, %v1191
        %vm1194 = vcmp.lt.s32.totalorder %v1056, 0
        %v1195 = vsub.s32 0, %v1056
        %v1196 = vsel %vm1194, %v1195, %v1056
        %v1197 = vshrl.u32 %v1196, 4
        %v1198 = vand.u32 %v1196, 15
        %v1199 = vsub.s32 0, %v1198
        %v1200 = vsel %vm1194, %v1199, %v1198
        %vm1201 = vcmp.lt.s32.totalorder %v1057, 0
        %v1202 = vsub.s32 0, %v1057
        %v1203 = vsel %vm1201, %v1202, %v1057
        %v1204 = vshrl.u32 %v1203, 4
        %v1205 = vand.u32 %v1203, 15
        %v1206 = vsub.s32 0, %v1205
        %v1207 = vsel %vm1201, %v1206, %v1205
        %vm1208 = vcmp.lt.s32.totalorder %v1058, 0
        %v1209 = vsub.s32 0, %v1058
        %v1210 = vsel %vm1208, %v1209, %v1058
        %v1211 = vshrl.u32 %v1210, 4
        %v1212 = vand.u32 %v1210, 15
        %v1213 = vsub.s32 0, %v1212
        %v1214 = vsel %vm1208, %v1213, %v1212
        %vm1215 = vcmp.lt.s32.totalorder %v1059, 0
        %v1216 = vsub.s32 0, %v1059
        %v1217 = vsel %vm1215, %v1216, %v1059
        %v1218 = vshrl.u32 %v1217, 4
        %v1219 = vand.u32 %v1217, 15
        %v1220 = vsub.s32 0, %v1219
        %v1221 = vsel %vm1215, %v1220, %v1219
        %vm1222 = vcmp.lt.s32.totalorder %v1060, 0
        %v1223 = vsub.s32 0, %v1060
        %v1224 = vsel %vm1222, %v1223, %v1060
        %v1225 = vshrl.u32 %v1224, 4
        %v1226 = vand.u32 %v1224, 15
        %v1227 = vsub.s32 0, %v1226
        %v1228 = vsel %vm1222, %v1227, %v1226
        %vm1229 = vcmp.lt.s32.totalorder %v1061, 0
        %v1230 = vsub.s32 0, %v1061
        %v1231 = vsel %vm1229, %v1230, %v1061
        %v1232 = vshrl.u32 %v1231, 4
        %v1233 = vand.u32 %v1231, 15
        %v1234 = vsub.s32 0, %v1233
        %v1235 = vsel %vm1229, %v1234, %v1233
        %vm1236 = vcmp.lt.s32.totalorder %v1062, 0
        %v1237 = vsub.s32 0, %v1062
        %v1238 = vsel %vm1236, %v1237, %v1062
        %v1239 = vshrl.u32 %v1238, 4
        %v1240 = vand.u32 %v1238, 15
        %v1241 = vsub.s32 0, %v1240
        %v1242 = vsel %vm1236, %v1241, %v1240
        %vm1243 = vcmp.lt.s32.totalorder %v1063, 0
        %v1244 = vsub.s32 0, %v1063
        %v1245 = vsel %vm1243, %v1244, %v1063
        %v1246 = vshrl.u32 %v1245, 4
        %v1247 = vand.u32 %v1245, 15
        %v1248 = vsub.s32 0, %v1247
        %v1249 = vsel %vm1243, %v1248, %v1247
        %vm1250 = vcmp.lt.s32.totalorder %v1064, 0
        %v1251 = vsub.s32 0, %v1064
        %v1252 = vsel %vm1250, %v1251, %v1064
        %v1253 = vshrl.u32 %v1252, 4
        %v1254 = vand.u32 %v1252, 15
        %v1255 = vsub.s32 0, %v1254
        %v1256 = vsel %vm1250, %v1255, %v1254
        %vm1257 = vcmp.lt.s32.totalorder %v1065, 0
        %v1258 = vsub.s32 0, %v1065
        %v1259 = vsel %vm1257, %v1258, %v1065
        %v1260 = vshrl.u32 %v1259, 4
        %v1261 = vand.u32 %v1259, 15
        %v1262 = vsub.s32 0, %v1261
        %v1263 = vsel %vm1257, %v1262, %v1261
        %vm1264 = vcmp.lt.s32.totalorder %v1066, 0
        %v1265 = vsub.s32 0, %v1066
        %v1266 = vsel %vm1264, %v1265, %v1066
        %v1267 = vshrl.u32 %v1266, 4
        %v1268 = vand.u32 %v1266, 15
        %v1269 = vsub.s32 0, %v1268
        %v1270 = vsel %vm1264, %v1269, %v1268
        %vm1271 = vcmp.lt.s32.totalorder %v1067, 0
        %v1272 = vsub.s32 0, %v1067
        %v1273 = vsel %vm1271, %v1272, %v1067
        %v1274 = vshrl.u32 %v1273, 4
        %v1275 = vand.u32 %v1273, 15
        %v1276 = vsub.s32 0, %v1275
        %v1277 = vsel %vm1271, %v1276, %v1275
        %vm1278 = vcmp.lt.s32.totalorder %v1068, 0
        %v1279 = vsub.s32 0, %v1068
        %v1280 = vsel %vm1278, %v1279, %v1068
        %v1281 = vshrl.u32 %v1280, 4
        %v1282 = vand.u32 %v1280, 15
        %v1283 = vsub.s32 0, %v1282
        %v1284 = vsel %vm1278, %v1283, %v1282
        %vm1285 = vcmp.lt.s32.totalorder %v1069, 0
        %v1286 = vsub.s32 0, %v1069
        %v1287 = vsel %vm1285, %v1286, %v1069
        %v1288 = vshrl.u32 %v1287, 4
        %v1289 = vand.u32 %v1287, 15
        %v1290 = vsub.s32 0, %v1289
        %v1291 = vsel %vm1285, %v1290, %v1289
        %vm1292 = vcmp.lt.s32.totalorder %v1070, 0
        %v1293 = vsub.s32 0, %v1070
        %v1294 = vsel %vm1292, %v1293, %v1070
        %v1295 = vshrl.u32 %v1294, 4
        %v1296 = vand.u32 %v1294, 15
        %v1297 = vsub.s32 0, %v1296
        %v1298 = vsel %vm1292, %v1297, %v1296
        %vm1299 = vcmp.lt.s32.totalorder %v1071, 0
        %v1300 = vsub.s32 0, %v1071
        %v1301 = vsel %vm1299, %v1300, %v1071
        %v1302 = vshrl.u32 %v1301, 4
        %v1303 = vand.u32 %v1301, 15
        %v1304 = vsub.s32 0, %v1303
        %v1305 = vsel %vm1299, %v1304, %v1303
        %vm1306 = vcmp.lt.s32.totalorder %v1072, 0
        %v1307 = vsub.s32 0, %v1072
        %v1308 = vsel %vm1306, %v1307, %v1072
        %v1309 = vshrl.u32 %v1308, 4
        %v1310 = vand.u32 %v1308, 15
        %v1311 = vsub.s32 0, %v1310
        %v1312 = vsel %vm1306, %v1311, %v1310
        %vm1313 = vcmp.lt.s32.totalorder %v1073, 0
        %v1314 = vsub.s32 0, %v1073
        %v1315 = vsel %vm1313, %v1314, %v1073
        %v1316 = vshrl.u32 %v1315, 4
        %v1317 = vand.u32 %v1315, 15
        %v1318 = vsub.s32 0, %v1317
        %v1319 = vsel %vm1313, %v1318, %v1317
        %vm1320 = vcmp.lt.s32.totalorder %v1074, 0
        %v1321 = vsub.s32 0, %v1074
        %v1322 = vsel %vm1320, %v1321, %v1074
        %v1323 = vshrl.u32 %v1322, 4
        %v1324 = vand.u32 %v1322, 15
        %v1325 = vsub.s32 0, %v1324
        %v1326 = vsel %vm1320, %v1325, %v1324
        %vm1327 = vcmp.ne.s32.totalorder %v1081, 0
        %vm1328 = vcmp.ne.s32.totalorder %v1088, 0
        %vm1329 = vcmp.ne.s32.totalorder %v1095, 0
        %vm1330 = vcmp.ne.s32.totalorder %v1102, 0
        %vm1331 = vcmp.ne.s32.totalorder %v1109, 0
        %vm1332 = vcmp.ne.s32.totalorder %v1116, 0
        %vm1333 = vcmp.ne.s32.totalorder %v1123, 0
        %vm1334 = vcmp.ne.s32.totalorder %v1130, 0
        %vm1335 = vcmp.ne.s32.totalorder %v1137, 0
        %vm1336 = vcmp.ne.s32.totalorder %v1144, 0
        %vm1337 = vcmp.ne.s32.totalorder %v1151, 0
        %vm1338 = vcmp.ne.s32.totalorder %v1158, 0
        %vm1339 = vcmp.ne.s32.totalorder %v1165, 0
        %vm1340 = vcmp.ne.s32.totalorder %v1172, 0
        %vm1341 = vcmp.ne.s32.totalorder %v1179, 0
        %vm1342 = vcmp.ne.s32.totalorder %v1186, 0
        %vm1343 = vcmp.ne.s32.totalorder %v1193, 0
        %vm1344 = vcmp.ne.s32.totalorder %v1200, 0
        %vm1345 = vcmp.ne.s32.totalorder %v1207, 0
        %vm1346 = vcmp.ne.s32.totalorder %v1214, 0
        %vm1347 = vcmp.ne.s32.totalorder %v1221, 0
        %vm1348 = vcmp.ne.s32.totalorder %v1228, 0
        %vm1349 = vcmp.ne.s32.totalorder %v1235, 0
        %vm1350 = vcmp.ne.s32.totalorder %v1242, 0
        %vm1351 = vcmp.ne.s32.totalorder %v1249, 0
        %vm1352 = vcmp.ne.s32.totalorder %v1256, 0
        %vm1353 = vcmp.ne.s32.totalorder %v1263, 0
        %vm1354 = vcmp.ne.s32.totalorder %v1270, 0
        %vm1355 = vcmp.ne.s32.totalorder %v1277, 0
        %vm1356 = vcmp.ne.s32.totalorder %v1284, 0
        %vm1357 = vcmp.ne.s32.totalorder %v1291, 0
        %vm1358 = vcmp.ne.s32.totalorder %v1298, 0
        %vm1359 = vcmp.ne.s32.totalorder %v1305, 0
        %vm1360 = vcmp.ne.s32.totalorder %v1312, 0
        %vm1361 = vcmp.ne.s32.totalorder %v1319, 0
        %vm1362 = vcmp.ne.s32.totalorder %v1326, 0
        %vm1363 = vcmp.lt.s32.totalorder %v1081, 0
        %vm1364 = vcmp.lt.s32.totalorder %v1088, 0
        %vm1365 = vcmp.lt.s32.totalorder %v1095, 0
        %vm1366 = vcmp.lt.s32.totalorder %v1102, 0
        %vm1367 = vcmp.lt.s32.totalorder %v1109, 0
        %vm1368 = vcmp.lt.s32.totalorder %v1116, 0
        %vm1369 = vcmp.lt.s32.totalorder %v1123, 0
        %vm1370 = vcmp.lt.s32.totalorder %v1130, 0
        %vm1371 = vcmp.lt.s32.totalorder %v1137, 0
        %vm1372 = vcmp.lt.s32.totalorder %v1144, 0
        %vm1373 = vcmp.lt.s32.totalorder %v1151, 0
        %vm1374 = vcmp.lt.s32.totalorder %v1158, 0
        %vm1375 = vcmp.lt.s32.totalorder %v1165, 0
        %vm1376 = vcmp.lt.s32.totalorder %v1172, 0
        %vm1377 = vcmp.lt.s32.totalorder %v1179, 0
        %vm1378 = vcmp.lt.s32.totalorder %v1186, 0
        %vm1379 = vcmp.lt.s32.totalorder %v1193, 0
        %vm1380 = vcmp.lt.s32.totalorder %v1200, 0
        %vm1381 = vcmp.lt.s32.totalorder %v1207, 0
        %vm1382 = vcmp.lt.s32.totalorder %v1214, 0
        %vm1383 = vcmp.lt.s32.totalorder %v1221, 0
        %vm1384 = vcmp.lt.s32.totalorder %v1228, 0
        %vm1385 = vcmp.lt.s32.totalorder %v1235, 0
        %vm1386 = vcmp.lt.s32.totalorder %v1242, 0
        %vm1387 = vcmp.lt.s32.totalorder %v1249, 0
        %vm1388 = vcmp.lt.s32.totalorder %v1256, 0
        %vm1389 = vcmp.lt.s32.totalorder %v1263, 0
        %vm1390 = vcmp.lt.s32.totalorder %v1270, 0
        %vm1391 = vcmp.lt.s32.totalorder %v1277, 0
        %vm1392 = vcmp.lt.s32.totalorder %v1284, 0
        %vm1393 = vcmp.lt.s32.totalorder %v1291, 0
        %vm1394 = vcmp.lt.s32.totalorder %v1298, 0
        %vm1395 = vcmp.lt.s32.totalorder %v1305, 0
        %vm1396 = vcmp.lt.s32.totalorder %v1312, 0
        %vm1397 = vcmp.lt.s32.totalorder %v1319, 0
        %vm1398 = vcmp.lt.s32.totalorder %v1326, 0
        %vm1399 = vmand %vm1363, %vm1327
        %vm1400 = vmand %vm1364, %vm1328
        %vm1401 = vmand %vm1365, %vm1329
        %vm1402 = vmand %vm1366, %vm1330
        %vm1403 = vmand %vm1367, %vm1331
        %vm1404 = vmand %vm1368, %vm1332
        %vm1405 = vmand %vm1369, %vm1333
        %vm1406 = vmand %vm1370, %vm1334
        %vm1407 = vmand %vm1371, %vm1335
        %vm1408 = vmand %vm1372, %vm1336
        %vm1409 = vmand %vm1373, %vm1337
        %vm1410 = vmand %vm1374, %vm1338
        %vm1411 = vmand %vm1375, %vm1339
        %vm1412 = vmand %vm1376, %vm1340
        %vm1413 = vmand %vm1377, %vm1341
        %vm1414 = vmand %vm1378, %vm1342
        %vm1415 = vmand %vm1379, %vm1343
        %vm1416 = vmand %vm1380, %vm1344
        %vm1417 = vmand %vm1381, %vm1345
        %vm1418 = vmand %vm1382, %vm1346
        %vm1419 = vmand %vm1383, %vm1347
        %vm1420 = vmand %vm1384, %vm1348
        %vm1421 = vmand %vm1385, %vm1349
        %vm1422 = vmand %vm1386, %vm1350
        %vm1423 = vmand %vm1387, %vm1351
        %vm1424 = vmand %vm1388, %vm1352
        %vm1425 = vmand %vm1389, %vm1353
        %vm1426 = vmand %vm1390, %vm1354
        %vm1427 = vmand %vm1391, %vm1355
        %vm1428 = vmand %vm1392, %vm1356
        %vm1429 = vmand %vm1393, %vm1357
        %vm1430 = vmand %vm1394, %vm1358
        %vm1431 = vmand %vm1395, %vm1359
        %vm1432 = vmand %vm1396, %vm1360
        %vm1433 = vmand %vm1397, %vm1361
        %vm1434 = vmand %vm1398, %vm1362
        %v1435 = vadd.s32 %v1081, 16
        %v1436 = vadd.s32 %v1088, 16
        %v1437 = vadd.s32 %v1095, 16
        %v1438 = vadd.s32 %v1102, 16
        %v1439 = vadd.s32 %v1109, 16
        %v1440 = vadd.s32 %v1116, 16
        %v1441 = vadd.s32 %v1123, 16
        %v1442 = vadd.s32 %v1130, 16
        %v1443 = vadd.s32 %v1137, 16
        %v1444 = vadd.s32 %v1144, 16
        %v1445 = vadd.s32 %v1151, 16
        %v1446 = vadd.s32 %v1158, 16
        %v1447 = vadd.s32 %v1165, 16
        %v1448 = vadd.s32 %v1172, 16
        %v1449 = vadd.s32 %v1179, 16
        %v1450 = vadd.s32 %v1186, 16
        %v1451 = vadd.s32 %v1193, 16
        %v1452 = vadd.s32 %v1200, 16
        %v1453 = vadd.s32 %v1207, 16
        %v1454 = vadd.s32 %v1214, 16
        %v1455 = vadd.s32 %v1221, 16
        %v1456 = vadd.s32 %v1228, 16
        %v1457 = vadd.s32 %v1235, 16
        %v1458 = vadd.s32 %v1242, 16
        %v1459 = vadd.s32 %v1249, 16
        %v1460 = vadd.s32 %v1256, 16
        %v1461 = vadd.s32 %v1263, 16
        %v1462 = vadd.s32 %v1270, 16
        %v1463 = vadd.s32 %v1277, 16
        %v1464 = vadd.s32 %v1284, 16
        %v1465 = vadd.s32 %v1291, 16
        %v1466 = vadd.s32 %v1298, 16
        %v1467 = vadd.s32 %v1305, 16
        %v1468 = vadd.s32 %v1312, 16
        %v1469 = vadd.s32 %v1319, 16
        %v1470 = vadd.s32 %v1326, 16
        %v1471 = vsel %vm1399, %v1435, %v1081
        %v1472 = vsel %vm1400, %v1436, %v1088
        %v1473 = vsel %vm1401, %v1437, %v1095
        %v1474 = vsel %vm1402, %v1438, %v1102
        %v1475 = vsel %vm1403, %v1439, %v1109
        %v1476 = vsel %vm1404, %v1440, %v1116
        %v1477 = vsel %vm1405, %v1441, %v1123
        %v1478 = vsel %vm1406, %v1442, %v1130
        %v1479 = vsel %vm1407, %v1443, %v1137
        %v1480 = vsel %vm1408, %v1444, %v1144
        %v1481 = vsel %vm1409, %v1445, %v1151
        %v1482 = vsel %vm1410, %v1446, %v1158
        %v1483 = vsel %vm1411, %v1447, %v1165
        %v1484 = vsel %vm1412, %v1448, %v1172
        %v1485 = vsel %vm1413, %v1449, %v1179
        %v1486 = vsel %vm1414, %v1450, %v1186
        %v1487 = vsel %vm1415, %v1451, %v1193
        %v1488 = vsel %vm1416, %v1452, %v1200
        %v1489 = vsel %vm1417, %v1453, %v1207
        %v1490 = vsel %vm1418, %v1454, %v1214
        %v1491 = vsel %vm1419, %v1455, %v1221
        %v1492 = vsel %vm1420, %v1456, %v1228
        %v1493 = vsel %vm1421, %v1457, %v1235
        %v1494 = vsel %vm1422, %v1458, %v1242
        %v1495 = vsel %vm1423, %v1459, %v1249
        %v1496 = vsel %vm1424, %v1460, %v1256
        %v1497 = vsel %vm1425, %v1461, %v1263
        %v1498 = vsel %vm1426, %v1462, %v1270
        %v1499 = vsel %vm1427, %v1463, %v1277
        %v1500 = vsel %vm1428, %v1464, %v1284
        %v1501 = vsel %vm1429, %v1465, %v1291
        %v1502 = vsel %vm1430, %v1466, %v1298
        %v1503 = vsel %vm1431, %v1467, %v1305
        %v1504 = vsel %vm1432, %v1468, %v1312
        %v1505 = vsel %vm1433, %v1469, %v1319
        %v1506 = vsel %vm1434, %v1470, %v1326
        %vm1507 = vcmp.ne.s32.totalorder %v1471, 0
        %vm1508 = vcmp.ne.s32.totalorder %v1472, 0
        %vm1509 = vcmp.ne.s32.totalorder %v1473, 0
        %vm1510 = vcmp.ne.s32.totalorder %v1474, 0
        %vm1511 = vcmp.ne.s32.totalorder %v1475, 0
        %vm1512 = vcmp.ne.s32.totalorder %v1476, 0
        %vm1513 = vcmp.ne.s32.totalorder %v1477, 0
        %vm1514 = vcmp.ne.s32.totalorder %v1478, 0
        %vm1515 = vcmp.ne.s32.totalorder %v1479, 0
        %vm1516 = vcmp.ne.s32.totalorder %v1480, 0
        %vm1517 = vcmp.ne.s32.totalorder %v1481, 0
        %vm1518 = vcmp.ne.s32.totalorder %v1482, 0
        %vm1519 = vcmp.ne.s32.totalorder %v1483, 0
        %vm1520 = vcmp.ne.s32.totalorder %v1484, 0
        %vm1521 = vcmp.ne.s32.totalorder %v1485, 0
        %vm1522 = vcmp.ne.s32.totalorder %v1486, 0
        %vm1523 = vcmp.ne.s32.totalorder %v1487, 0
        %vm1524 = vcmp.ne.s32.totalorder %v1488, 0
        %vm1525 = vcmp.ne.s32.totalorder %v1489, 0
        %vm1526 = vcmp.ne.s32.totalorder %v1490, 0
        %vm1527 = vcmp.ne.s32.totalorder %v1491, 0
        %vm1528 = vcmp.ne.s32.totalorder %v1492, 0
        %vm1529 = vcmp.ne.s32.totalorder %v1493, 0
        %vm1530 = vcmp.ne.s32.totalorder %v1494, 0
        %vm1531 = vcmp.ne.s32.totalorder %v1495, 0
        %vm1532 = vcmp.ne.s32.totalorder %v1496, 0
        %vm1533 = vcmp.ne.s32.totalorder %v1497, 0
        %vm1534 = vcmp.ne.s32.totalorder %v1498, 0
        %vm1535 = vcmp.ne.s32.totalorder %v1499, 0
        %vm1536 = vcmp.ne.s32.totalorder %v1500, 0
        %vm1537 = vcmp.ne.s32.totalorder %v1501, 0
        %vm1538 = vcmp.ne.s32.totalorder %v1502, 0
        %vm1539 = vcmp.ne.s32.totalorder %v1503, 0
        %vm1540 = vcmp.ne.s32.totalorder %v1504, 0
        %vm1541 = vcmp.ne.s32.totalorder %v1505, 0
        %vm1542 = vcmp.ne.s32.totalorder %v1506, 0
        %vm1543 = vcmp.ne.s32.totalorder %v1471, 15
        %vm1544 = vcmp.ne.s32.totalorder %v1472, 15
        %vm1545 = vcmp.ne.s32.totalorder %v1473, 15
        %vm1546 = vcmp.ne.s32.totalorder %v1474, 15
        %vm1547 = vcmp.ne.s32.totalorder %v1475, 15
        %vm1548 = vcmp.ne.s32.totalorder %v1476, 15
        %vm1549 = vcmp.ne.s32.totalorder %v1477, 15
        %vm1550 = vcmp.ne.s32.totalorder %v1478, 15
        %vm1551 = vcmp.ne.s32.totalorder %v1479, 15
        %vm1552 = vcmp.ne.s32.totalorder %v1480, 15
        %vm1553 = vcmp.ne.s32.totalorder %v1481, 15
        %vm1554 = vcmp.ne.s32.totalorder %v1482, 15
        %vm1555 = vcmp.ne.s32.totalorder %v1483, 15
        %vm1556 = vcmp.ne.s32.totalorder %v1484, 15
        %vm1557 = vcmp.ne.s32.totalorder %v1485, 15
        %vm1558 = vcmp.ne.s32.totalorder %v1486, 15
        %vm1559 = vcmp.ne.s32.totalorder %v1487, 15
        %vm1560 = vcmp.ne.s32.totalorder %v1488, 15
        %vm1561 = vcmp.ne.s32.totalorder %v1489, 15
        %vm1562 = vcmp.ne.s32.totalorder %v1490, 15
        %vm1563 = vcmp.ne.s32.totalorder %v1491, 15
        %vm1564 = vcmp.ne.s32.totalorder %v1492, 15
        %vm1565 = vcmp.ne.s32.totalorder %v1493, 15
        %vm1566 = vcmp.ne.s32.totalorder %v1494, 15
        %vm1567 = vcmp.ne.s32.totalorder %v1495, 15
        %vm1568 = vcmp.ne.s32.totalorder %v1496, 15
        %vm1569 = vcmp.ne.s32.totalorder %v1497, 15
        %vm1570 = vcmp.ne.s32.totalorder %v1498, 15
        %vm1571 = vcmp.ne.s32.totalorder %v1499, 15
        %vm1572 = vcmp.ne.s32.totalorder %v1500, 15
        %vm1573 = vcmp.ne.s32.totalorder %v1501, 15
        %vm1574 = vcmp.ne.s32.totalorder %v1502, 15
        %vm1575 = vcmp.ne.s32.totalorder %v1503, 15
        %vm1576 = vcmp.ne.s32.totalorder %v1504, 15
        %vm1577 = vcmp.ne.s32.totalorder %v1505, 15
        %vm1578 = vcmp.ne.s32.totalorder %v1506, 15
        %v1579 = vld [vmem:[#allocation2] sm:$0xff]
        %v1580 = vld [vmem:[#allocation2 + $0x8] sm:$0xff]
        %v1581 = vld [vmem:[#allocation2 + $0x10] sm:$0xff]
        %v1582 = vld [vmem:[#allocation2 + $0x18] sm:$0xff]
        %v1583 = vld [vmem:[#allocation2 + $0x20] sm:$0xff]
        %v1584 = vld [vmem:[#allocation2 + $0x28] sm:$0xff]
        %v1585 = vld [vmem:[#allocation2 + $0x30] sm:$0xff]
        %v1586 = vld [vmem:[#allocation2 + $0x38] sm:$0xff]
        %v1587 = vld [vmem:[#allocation2 + $0x40] sm:$0xff]
        %v1588 = vld [vmem:[#allocation2 + $0x48] sm:$0xff]
        %v1589 = vld [vmem:[#allocation2 + $0x50] sm:$0xff]
        %v1590 = vld [vmem:[#allocation2 + $0x58] sm:$0xff]
        %v1591 = vld [vmem:[#allocation2 + $0x60] sm:$0xff]
        %v1592 = vld [vmem:[#allocation2 + $0x68] sm:$0xff]
        %v1593 = vld [vmem:[#allocation2 + $0x70] sm:$0xff]
        %v1594 = vld [vmem:[#allocation2 + $0x78] sm:$0xff]
        %v1595 = vld [vmem:[#allocation2 + $0x80] sm:$0xff]
        %v1596 = vld [vmem:[#allocation2 + $0x88] sm:$0xff]
        %v1597 = vld [vmem:[#allocation2 + $0x90] sm:$0xff]
        %v1598 = vld [vmem:[#allocation2 + $0x98] sm:$0xff]
        %v1599 = vld [vmem:[#allocation2 + $0xa0] sm:$0xff]
        %v1600 = vld [vmem:[#allocation2 + $0xa8] sm:$0xff]
        %v1601 = vld [vmem:[#allocation2 + $0xb0] sm:$0xff]
        %v1602 = vld [vmem:[#allocation2 + $0xb8] sm:$0xff]
        %v1603 = vld [vmem:[#allocation2 + $0xc0] sm:$0xff]
        %v1604 = vld [vmem:[#allocation2 + $0xc8] sm:$0xff]
        %v1605 = vld [vmem:[#allocation2 + $0xd0] sm:$0xff]
        %v1606 = vld [vmem:[#allocation2 + $0xd8] sm:$0xff]
        %v1607 = vld [vmem:[#allocation2 + $0xe0] sm:$0xff]
        %v1608 = vld [vmem:[#allocation2 + $0xe8] sm:$0xff]
        %v1609 = vld [vmem:[#allocation2 + $0xf0] sm:$0xff]
        %v1610 = vld [vmem:[#allocation2 + $0xf8] sm:$0xff]
        %v1611 = vld [vmem:[#allocation2 + $0x100] sm:$0xff]
        %v1612 = vld [vmem:[#allocation2 + $0x108] sm:$0xff]
        %v1613 = vld [vmem:[#allocation2 + $0x110] sm:$0xff]
        %v1614 = vld [vmem:[#allocation2 + $0x118] sm:$0xff]
        %v1615 = vrot.slane %v1579, 7
        %v1616 = vrot.slane %v1580, 7
        %v1617 = vrot.slane %v1581, 7
        %v1618 = vrot.slane %v1582, 7
        %v1619 = vrot.slane %v1583, 7
        %v1620 = vrot.slane %v1584, 7
        %v1621 = vrot.slane %v1585, 7
        %v1622 = vrot.slane %v1586, 7
        %v1623 = vrot.slane %v1587, 7
        %v1624 = vrot.slane %v1588, 7
        %v1625 = vrot.slane %v1589, 7
        %v1626 = vrot.slane %v1590, 7
        %v1627 = vrot.slane %v1591, 7
        %v1628 = vrot.slane %v1592, 7
        %v1629 = vrot.slane %v1593, 7
        %v1630 = vrot.slane %v1594, 7
        %v1631 = vrot.slane %v1595, 7
        %v1632 = vrot.slane %v1596, 7
        %v1633 = vrot.slane %v1597, 7
        %v1634 = vrot.slane %v1598, 7
        %v1635 = vrot.slane %v1599, 7
        %v1636 = vrot.slane %v1600, 7
        %v1637 = vrot.slane %v1601, 7
        %v1638 = vrot.slane %v1602, 7
        %v1639 = vrot.slane %v1603, 7
        %v1640 = vrot.slane %v1604, 7
        %v1641 = vrot.slane %v1605, 7
        %v1642 = vrot.slane %v1606, 7
        %v1643 = vrot.slane %v1607, 7
        %v1644 = vrot.slane %v1608, 7
        %v1645 = vrot.slane %v1609, 7
        %v1646 = vrot.slane %v1610, 7
        %v1647 = vrot.slane %v1611, 7
        %v1648 = vrot.slane %v1612, 7
        %v1649 = vrot.slane %v1613, 7
        %v1650 = vrot.slane %v1614, 7
        %vm1651 = vcmp.lt.s32.totalorder %v1039, 1
        %v1652 = vsel %vm1651, %v1649, %v1650
        %v1653 = vsel %vm1651, %v1648, %v1649
        %v1654 = vsel %vm1651, %v1647, %v1648
        %v1655 = vsel %vm1651, %v1646, %v1647
        %v1656 = vsel %vm1651, %v1645, %v1646
        %v1657 = vsel %vm1651, %v1644, %v1645
        %v1658 = vsel %vm1651, %v1643, %v1644
        %v1659 = vsel %vm1651, %v1642, %v1643
        %v1660 = vsel %vm1651, %v1641, %v1642
        %v1661 = vsel %vm1651, %v1640, %v1641
        %v1662 = vsel %vm1651, %v1639, %v1640
        %v1663 = vsel %vm1651, %v1638, %v1639
        %v1664 = vsel %vm1651, %v1637, %v1638
        %v1665 = vsel %vm1651, %v1636, %v1637
        %v1666 = vsel %vm1651, %v1635, %v1636
        %v1667 = vsel %vm1651, %v1634, %v1635
        %v1668 = vsel %vm1651, %v1633, %v1634
        %v1669 = vsel %vm1651, %v1632, %v1633
        %v1670 = vsel %vm1651, %v1631, %v1632
        %v1671 = vsel %vm1651, %v1630, %v1631
        %v1672 = vsel %vm1651, %v1629, %v1630
        %v1673 = vsel %vm1651, %v1628, %v1629
        %v1674 = vsel %vm1651, %v1627, %v1628
        %v1675 = vsel %vm1651, %v1626, %v1627
        %v1676 = vsel %vm1651, %v1625, %v1626
        %v1677 = vsel %vm1651, %v1624, %v1625
        %v1678 = vsel %vm1651, %v1623, %v1624
        %v1679 = vsel %vm1651, %v1622, %v1623
        %v1680 = vsel %vm1651, %v1621, %v1622
        %v1681 = vsel %vm1651, %v1620, %v1621
        %v1682 = vsel %vm1651, %v1619, %v1620
        %v1683 = vsel %vm1651, %v1618, %v1619
        %v1684 = vsel %vm1651, %v1617, %v1618
        %v1685 = vsel %vm1651, %v1616, %v1617
        %v1686 = vsel %vm1651, %v1615, %v1616
        %v1687 = vsel %vm1651, %v1650, %v1615
        %v1688 = vsel %vm1507, 1, 0
        %v1689 = vsel %vm1508, 1, 0
        %v1690 = vsel %vm1509, 1, 0
        %v1691 = vsel %vm1510, 1, 0
        %v1692 = vsel %vm1511, 1, 0
        %v1693 = vsel %vm1512, 1, 0
        %v1694 = vsel %vm1513, 1, 0
        %v1695 = vsel %vm1514, 1, 0
        %v1696 = vsel %vm1515, 1, 0
        %v1697 = vsel %vm1516, 1, 0
        %v1698 = vsel %vm1517, 1, 0
        %v1699 = vsel %vm1518, 1, 0
        %v1700 = vsel %vm1519, 1, 0
        %v1701 = vsel %vm1520, 1, 0
        %v1702 = vsel %vm1521, 1, 0
        %v1703 = vsel %vm1522, 1, 0
        %v1704 = vsel %vm1523, 1, 0
        %v1705 = vsel %vm1524, 1, 0
        %v1706 = vsel %vm1525, 1, 0
        %v1707 = vsel %vm1526, 1, 0
        %v1708 = vsel %vm1527, 1, 0
        %v1709 = vsel %vm1528, 1, 0
        %v1710 = vsel %vm1529, 1, 0
        %v1711 = vsel %vm1530, 1, 0
        %v1712 = vsel %vm1531, 1, 0
        %v1713 = vsel %vm1532, 1, 0
        %v1714 = vsel %vm1533, 1, 0
        %v1715 = vsel %vm1534, 1, 0
        %v1716 = vsel %vm1535, 1, 0
        %v1717 = vsel %vm1536, 1, 0
        %v1718 = vsel %vm1537, 1, 0
        %v1719 = vsel %vm1538, 1, 0
        %v1720 = vsel %vm1539, 1, 0
        %v1721 = vsel %vm1540, 1, 0
        %v1722 = vsel %vm1541, 1, 0
        %v1723 = vsel %vm1542, 1, 0
        %vm1724 = vcmp.eq.s32.totalorder %v1688, 1
        %vm1725 = vcmp.eq.s32.totalorder %v1689, 1
        %vm1726 = vcmp.eq.s32.totalorder %v1690, 1
        %vm1727 = vcmp.eq.s32.totalorder %v1691, 1
        %vm1728 = vcmp.eq.s32.totalorder %v1692, 1
        %vm1729 = vcmp.eq.s32.totalorder %v1693, 1
        %vm1730 = vcmp.eq.s32.totalorder %v1694, 1
        %vm1731 = vcmp.eq.s32.totalorder %v1695, 1
        %vm1732 = vcmp.eq.s32.totalorder %v1696, 1
        %vm1733 = vcmp.eq.s32.totalorder %v1697, 1
        %vm1734 = vcmp.eq.s32.totalorder %v1698, 1
        %vm1735 = vcmp.eq.s32.totalorder %v1699, 1
        %vm1736 = vcmp.eq.s32.totalorder %v1700, 1
        %vm1737 = vcmp.eq.s32.totalorder %v1701, 1
        %vm1738 = vcmp.eq.s32.totalorder %v1702, 1
        %vm1739 = vcmp.eq.s32.totalorder %v1703, 1
        %vm1740 = vcmp.eq.s32.totalorder %v1704, 1
        %vm1741 = vcmp.eq.s32.totalorder %v1705, 1
        %vm1742 = vcmp.eq.s32.totalorder %v1706, 1
        %vm1743 = vcmp.eq.s32.totalorder %v1707, 1
        %vm1744 = vcmp.eq.s32.totalorder %v1708, 1
        %vm1745 = vcmp.eq.s32.totalorder %v1709, 1
        %vm1746 = vcmp.eq.s32.totalorder %v1710, 1
        %vm1747 = vcmp.eq.s32.totalorder %v1711, 1
        %vm1748 = vcmp.eq.s32.totalorder %v1712, 1
        %vm1749 = vcmp.eq.s32.totalorder %v1713, 1
        %vm1750 = vcmp.eq.s32.totalorder %v1714, 1
        %vm1751 = vcmp.eq.s32.totalorder %v1715, 1
        %vm1752 = vcmp.eq.s32.totalorder %v1716, 1
        %vm1753 = vcmp.eq.s32.totalorder %v1717, 1
        %vm1754 = vcmp.eq.s32.totalorder %v1718, 1
        %vm1755 = vcmp.eq.s32.totalorder %v1719, 1
        %vm1756 = vcmp.eq.s32.totalorder %v1720, 1
        %vm1757 = vcmp.eq.s32.totalorder %v1721, 1
        %vm1758 = vcmp.eq.s32.totalorder %v1722, 1
        %vm1759 = vcmp.eq.s32.totalorder %v1723, 1
        %v1760 = vsel %vm1724, %v1687, 0.0
        %v1761 = vsel %vm1725, %v1686, 0.0
        %v1762 = vsel %vm1726, %v1685, 0.0
        %v1763 = vsel %vm1727, %v1684, 0.0
        %v1764 = vsel %vm1728, %v1683, 0.0
        %v1765 = vsel %vm1729, %v1682, 0.0
        %v1766 = vsel %vm1730, %v1681, 0.0
        %v1767 = vsel %vm1731, %v1680, 0.0
        %v1768 = vsel %vm1732, %v1679, 0.0
        %v1769 = vsel %vm1733, %v1678, 0.0
        %v1770 = vsel %vm1734, %v1677, 0.0
        %v1771 = vsel %vm1735, %v1676, 0.0
        %v1772 = vsel %vm1736, %v1675, 0.0
        %v1773 = vsel %vm1737, %v1674, 0.0
        %v1774 = vsel %vm1738, %v1673, 0.0
        %v1775 = vsel %vm1739, %v1672, 0.0
        %v1776 = vsel %vm1740, %v1671, 0.0
        %v1777 = vsel %vm1741, %v1670, 0.0
        %v1778 = vsel %vm1742, %v1669, 0.0
        %v1779 = vsel %vm1743, %v1668, 0.0
        %v1780 = vsel %vm1744, %v1667, 0.0
        %v1781 = vsel %vm1745, %v1666, 0.0
        %v1782 = vsel %vm1746, %v1665, 0.0
        %v1783 = vsel %vm1747, %v1664, 0.0
        %v1784 = vsel %vm1748, %v1663, 0.0
        %v1785 = vsel %vm1749, %v1662, 0.0
        %v1786 = vsel %vm1750, %v1661, 0.0
        %v1787 = vsel %vm1751, %v1660, 0.0
        %v1788 = vsel %vm1752, %v1659, 0.0
        %v1789 = vsel %vm1753, %v1658, 0.0
        %v1790 = vsel %vm1754, %v1657, 0.0
        %v1791 = vsel %vm1755, %v1656, 0.0
        %v1792 = vsel %vm1756, %v1655, 0.0
        %v1793 = vsel %vm1757, %v1654, 0.0
        %v1794 = vsel %vm1758, %v1653, 0.0
        %v1795 = vsel %vm1759, %v1652, 0.0
        %v1796 = vpack.c.bf16 %v1761, %v1760
        %v1797 = vpack.c.bf16 %v1763, %v1762
        %v1798 = vpack.c.bf16 %v1765, %v1764
        %v1799 = vpack.c.bf16 %v1767, %v1766
        %v1800 = vpack.c.bf16 %v1769, %v1768
        %v1801 = vpack.c.bf16 %v1771, %v1770
        %v1802 = vpack.c.bf16 %v1773, %v1772
        %v1803 = vpack.c.bf16 %v1775, %v1774
        %v1804 = vpack.c.bf16 %v1777, %v1776
        %v1805 = vpack.c.bf16 %v1779, %v1778
        %v1806 = vpack.c.bf16 %v1781, %v1780
        %v1807 = vpack.c.bf16 %v1783, %v1782
        %v1808 = vpack.c.bf16 %v1785, %v1784
        %v1809 = vpack.c.bf16 %v1787, %v1786
        %v1810 = vpack.c.bf16 %v1789, %v1788
        %v1811 = vpack.c.bf16 %v1791, %v1790
        %v1812 = vpack.c.bf16 %v1793, %v1792
        %v1813 = vpack.c.bf16 %v1795, %v1794
        %v1814 = vpack.c.bf16 %v1580, %v1579
        %v1815 = vpack.c.bf16 %v1582, %v1581
        %v1816 = vpack.c.bf16 %v1584, %v1583
        %v1817 = vpack.c.bf16 %v1586, %v1585
        %v1818 = vpack.c.bf16 %v1588, %v1587
        %v1819 = vpack.c.bf16 %v1590, %v1589
        %v1820 = vpack.c.bf16 %v1592, %v1591
        %v1821 = vpack.c.bf16 %v1594, %v1593
        %v1822 = vpack.c.bf16 %v1596, %v1595
        %v1823 = vpack.c.bf16 %v1598, %v1597
        %v1824 = vpack.c.bf16 %v1600, %v1599
        %v1825 = vpack.c.bf16 %v1602, %v1601
        %v1826 = vpack.c.bf16 %v1604, %v1603
        %v1827 = vpack.c.bf16 %v1606, %v1605
        %v1828 = vpack.c.bf16 %v1608, %v1607
        %v1829 = vpack.c.bf16 %v1610, %v1609
        %v1830 = vpack.c.bf16 %v1612, %v1611
        %v1831 = vpack.c.bf16 %v1614, %v1613
        %v1832 = vrot.slane %v1579, 1
        %v1833 = vrot.slane %v1580, 1
        %v1834 = vrot.slane %v1581, 1
        %v1835 = vrot.slane %v1582, 1
        %v1836 = vrot.slane %v1583, 1
        %v1837 = vrot.slane %v1584, 1
        %v1838 = vrot.slane %v1585, 1
        %v1839 = vrot.slane %v1586, 1
        %v1840 = vrot.slane %v1587, 1
        %v1841 = vrot.slane %v1588, 1
        %v1842 = vrot.slane %v1589, 1
        %v1843 = vrot.slane %v1590, 1
        %v1844 = vrot.slane %v1591, 1
        %v1845 = vrot.slane %v1592, 1
        %v1846 = vrot.slane %v1593, 1
        %v1847 = vrot.slane %v1594, 1
        %v1848 = vrot.slane %v1595, 1
        %v1849 = vrot.slane %v1596, 1
        %v1850 = vrot.slane %v1597, 1
        %v1851 = vrot.slane %v1598, 1
        %v1852 = vrot.slane %v1599, 1
        %v1853 = vrot.slane %v1600, 1
        %v1854 = vrot.slane %v1601, 1
        %v1855 = vrot.slane %v1602, 1
        %v1856 = vrot.slane %v1603, 1
        %v1857 = vrot.slane %v1604, 1
        %v1858 = vrot.slane %v1605, 1
        %v1859 = vrot.slane %v1606, 1
        %v1860 = vrot.slane %v1607, 1
        %v1861 = vrot.slane %v1608, 1
        %v1862 = vrot.slane %v1609, 1
        %v1863 = vrot.slane %v1610, 1
        %v1864 = vrot.slane %v1611, 1
        %v1865 = vrot.slane %v1612, 1
        %v1866 = vrot.slane %v1613, 1
        %v1867 = vrot.slane %v1614, 1
        %vm1868 = vcmp.lt.s32.totalorder %v1039, 7
        %v1869 = vsel %vm1868, %v1866, %v1867
        %v1870 = vsel %vm1868, %v1865, %v1866
        %v1871 = vsel %vm1868, %v1864, %v1865
        %v1872 = vsel %vm1868, %v1863, %v1864
        %v1873 = vsel %vm1868, %v1862, %v1863
        %v1874 = vsel %vm1868, %v1861, %v1862
        %v1875 = vsel %vm1868, %v1860, %v1861
        %v1876 = vsel %vm1868, %v1859, %v1860
        %v1877 = vsel %vm1868, %v1858, %v1859
        %v1878 = vsel %vm1868, %v1857, %v1858
        %v1879 = vsel %vm1868, %v1856, %v1857
        %v1880 = vsel %vm1868, %v1855, %v1856
        %v1881 = vsel %vm1868, %v1854, %v1855
        %v1882 = vsel %vm1868, %v1853, %v1854
        %v1883 = vsel %vm1868, %v1852, %v1853
        %v1884 = vsel %vm1868, %v1851, %v1852
        %v1885 = vsel %vm1868, %v1850, %v1851
        %v1886 = vsel %vm1868, %v1849, %v1850
        %v1887 = vsel %vm1868, %v1848, %v1849
        %v1888 = vsel %vm1868, %v1847, %v1848
        %v1889 = vsel %vm1868, %v1846, %v1847
        %v1890 = vsel %vm1868, %v1845, %v1846
        %v1891 = vsel %vm1868, %v1844, %v1845
        %v1892 = vsel %vm1868, %v1843, %v1844
        %v1893 = vsel %vm1868, %v1842, %v1843
        %v1894 = vsel %vm1868, %v1841, %v1842
        %v1895 = vsel %vm1868, %v1840, %v1841
        %v1896 = vsel %vm1868, %v1839, %v1840
        %v1897 = vsel %vm1868, %v1838, %v1839
        %v1898 = vsel %vm1868, %v1837, %v1838
        %v1899 = vsel %vm1868, %v1836, %v1837
        %v1900 = vsel %vm1868, %v1835, %v1836
        %v1901 = vsel %vm1868, %v1834, %v1835
        %v1902 = vsel %vm1868, %v1833, %v1834
        %v1903 = vsel %vm1868, %v1832, %v1833
        %v1904 = vsel %vm1868, %v1867, %v1832
        %v1905 = vsel %vm1543, 1, 0
        %v1906 = vsel %vm1544, 1, 0
        %v1907 = vsel %vm1545, 1, 0
        %v1908 = vsel %vm1546, 1, 0
        %v1909 = vsel %vm1547, 1, 0
        %v1910 = vsel %vm1548, 1, 0
        %v1911 = vsel %vm1549, 1, 0
        %v1912 = vsel %vm1550, 1, 0
        %v1913 = vsel %vm1551, 1, 0
        %v1914 = vsel %vm1552, 1, 0
        %v1915 = vsel %vm1553, 1, 0
        %v1916 = vsel %vm1554, 1, 0
        %v1917 = vsel %vm1555, 1, 0
        %v1918 = vsel %vm1556, 1, 0
        %v1919 = vsel %vm1557, 1, 0
        %v1920 = vsel %vm1558, 1, 0
        %v1921 = vsel %vm1559, 1, 0
        %v1922 = vsel %vm1560, 1, 0
        %v1923 = vsel %vm1561, 1, 0
        %v1924 = vsel %vm1562, 1, 0
        %v1925 = vsel %vm1563, 1, 0
        %v1926 = vsel %vm1564, 1, 0
        %v1927 = vsel %vm1565, 1, 0
        %v1928 = vsel %vm1566, 1, 0
        %v1929 = vsel %vm1567, 1, 0
        %v1930 = vsel %vm1568, 1, 0
        %v1931 = vsel %vm1569, 1, 0
        %v1932 = vsel %vm1570, 1, 0
        %v1933 = vsel %vm1571, 1, 0
        %v1934 = vsel %vm1572, 1, 0
        %v1935 = vsel %vm1573, 1, 0
        %v1936 = vsel %vm1574, 1, 0
        %v1937 = vsel %vm1575, 1, 0
        %v1938 = vsel %vm1576, 1, 0
        %v1939 = vsel %vm1577, 1, 0
        %v1940 = vsel %vm1578, 1, 0
        %vm1941 = vcmp.eq.s32.totalorder %v1905, 1
        %vm1942 = vcmp.eq.s32.totalorder %v1906, 1
        %vm1943 = vcmp.eq.s32.totalorder %v1907, 1
        %vm1944 = vcmp.eq.s32.totalorder %v1908, 1
        %vm1945 = vcmp.eq.s32.totalorder %v1909, 1
        %vm1946 = vcmp.eq.s32.totalorder %v1910, 1
        %vm1947 = vcmp.eq.s32.totalorder %v1911, 1
        %vm1948 = vcmp.eq.s32.totalorder %v1912, 1
        %vm1949 = vcmp.eq.s32.totalorder %v1913, 1
        %vm1950 = vcmp.eq.s32.totalorder %v1914, 1
        %vm1951 = vcmp.eq.s32.totalorder %v1915, 1
        %vm1952 = vcmp.eq.s32.totalorder %v1916, 1
        %vm1953 = vcmp.eq.s32.totalorder %v1917, 1
        %vm1954 = vcmp.eq.s32.totalorder %v1918, 1
        %vm1955 = vcmp.eq.s32.totalorder %v1919, 1
        %vm1956 = vcmp.eq.s32.totalorder %v1920, 1
        %vm1957 = vcmp.eq.s32.totalorder %v1921, 1
        %vm1958 = vcmp.eq.s32.totalorder %v1922, 1
        %vm1959 = vcmp.eq.s32.totalorder %v1923, 1
        %vm1960 = vcmp.eq.s32.totalorder %v1924, 1
        %vm1961 = vcmp.eq.s32.totalorder %v1925, 1
        %vm1962 = vcmp.eq.s32.totalorder %v1926, 1
        %vm1963 = vcmp.eq.s32.totalorder %v1927, 1
        %vm1964 = vcmp.eq.s32.totalorder %v1928, 1
        %vm1965 = vcmp.eq.s32.totalorder %v1929, 1
        %vm1966 = vcmp.eq.s32.totalorder %v1930, 1
        %vm1967 = vcmp.eq.s32.totalorder %v1931, 1
        %vm1968 = vcmp.eq.s32.totalorder %v1932, 1
        %vm1969 = vcmp.eq.s32.totalorder %v1933, 1
        %vm1970 = vcmp.eq.s32.totalorder %v1934, 1
        %vm1971 = vcmp.eq.s32.totalorder %v1935, 1
        %vm1972 = vcmp.eq.s32.totalorder %v1936, 1
        %vm1973 = vcmp.eq.s32.totalorder %v1937, 1
        %vm1974 = vcmp.eq.s32.totalorder %v1938, 1
        %vm1975 = vcmp.eq.s32.totalorder %v1939, 1
        %vm1976 = vcmp.eq.s32.totalorder %v1940, 1
        %v1977 = vsel %vm1941, %v1903, 0.0
        %v1978 = vsel %vm1942, %v1902, 0.0
        %v1979 = vsel %vm1943, %v1901, 0.0
        %v1980 = vsel %vm1944, %v1900, 0.0
        %v1981 = vsel %vm1945, %v1899, 0.0
        %v1982 = vsel %vm1946, %v1898, 0.0
        %v1983 = vsel %vm1947, %v1897, 0.0
        %v1984 = vsel %vm1948, %v1896, 0.0
        %v1985 = vsel %vm1949, %v1895, 0.0
        %v1986 = vsel %vm1950, %v1894, 0.0
        %v1987 = vsel %vm1951, %v1893, 0.0
        %v1988 = vsel %vm1952, %v1892, 0.0
        %v1989 = vsel %vm1953, %v1891, 0.0
        %v1990 = vsel %vm1954, %v1890, 0.0
        %v1991 = vsel %vm1955, %v1889, 0.0
        %v1992 = vsel %vm1956, %v1888, 0.0
        %v1993 = vsel %vm1957, %v1887, 0.0
        %v1994 = vsel %vm1958, %v1886, 0.0
        %v1995 = vsel %vm1959, %v1885, 0.0
        %v1996 = vsel %vm1960, %v1884, 0.0
        %v1997 = vsel %vm1961, %v1883, 0.0
        %v1998 = vsel %vm1962, %v1882, 0.0
        %v1999 = vsel %vm1963, %v1881, 0.0
        %v2000 = vsel %vm1964, %v1880, 0.0
        %v2001 = vsel %vm1965, %v1879, 0.0
        %v2002 = vsel %vm1966, %v1878, 0.0
        %v2003 = vsel %vm1967, %v1877, 0.0
        %v2004 = vsel %vm1968, %v1876, 0.0
        %v2005 = vsel %vm1969, %v1875, 0.0
        %v2006 = vsel %vm1970, %v1874, 0.0
        %v2007 = vsel %vm1971, %v1873, 0.0
        %v2008 = vsel %vm1972, %v1872, 0.0
        %v2009 = vsel %vm1973, %v1871, 0.0
        %v2010 = vsel %vm1974, %v1870, 0.0
        %v2011 = vsel %vm1975, %v1869, 0.0
        %v2012 = vsel %vm1976, %v1904, 0.0
        %v2013 = vpack.c.bf16 %v1978, %v1977
        %v2014 = vpack.c.bf16 %v1980, %v1979
        %v2015 = vpack.c.bf16 %v1982, %v1981
        %v2016 = vpack.c.bf16 %v1984, %v1983
        %v2017 = vpack.c.bf16 %v1986, %v1985
        %v2018 = vpack.c.bf16 %v1988, %v1987
        %v2019 = vpack.c.bf16 %v1990, %v1989
        %v2020 = vpack.c.bf16 %v1992, %v1991
        %v2021 = vpack.c.bf16 %v1994, %v1993
        %v2022 = vpack.c.bf16 %v1996, %v1995
        %v2023 = vpack.c.bf16 %v1998, %v1997
        %v2024 = vpack.c.bf16 %v2000, %v1999
        %v2025 = vpack.c.bf16 %v2002, %v2001
        %v2026 = vpack.c.bf16 %v2004, %v2003
        %v2027 = vpack.c.bf16 %v2006, %v2005
        %v2028 = vpack.c.bf16 %v2008, %v2007
        %v2029 = vpack.c.bf16 %v2010, %v2009
        %v2030 = vpack.c.bf16 %v2012, %v2011
        %v2031 = vld [vmem:[#allocation2 + $0x120] sm:$0xff]
        %v2032 = vld [vmem:[#allocation2 + $0x128] sm:$0xff]
        %v2033 = vrot.slane %v2031, 7
        %v2034 = vrot.slane %v2032, 7
        %v2035 = vsel %vm1651, %v2033, %v2034
        %v2036 = vsel %vm1651, %v1650, %v2033
        %v2037 = vsel %vm1651, %v2034, %v1617
        %v2038 = vsel %vm1724, %v2037, 0.0
        %v2039 = vsel %vm1725, %v1684, 0.0
        %v2040 = vsel %vm1726, %v1683, 0.0
        %v2041 = vsel %vm1727, %v1682, 0.0
        %v2042 = vsel %vm1728, %v1681, 0.0
        %v2043 = vsel %vm1729, %v1680, 0.0
        %v2044 = vsel %vm1730, %v1679, 0.0
        %v2045 = vsel %vm1731, %v1678, 0.0
        %v2046 = vsel %vm1732, %v1677, 0.0
        %v2047 = vsel %vm1733, %v1676, 0.0
        %v2048 = vsel %vm1734, %v1675, 0.0
        %v2049 = vsel %vm1735, %v1674, 0.0
        %v2050 = vsel %vm1736, %v1673, 0.0
        %v2051 = vsel %vm1737, %v1672, 0.0
        %v2052 = vsel %vm1738, %v1671, 0.0
        %v2053 = vsel %vm1739, %v1670, 0.0
        %v2054 = vsel %vm1740, %v1669, 0.0
        %v2055 = vsel %vm1741, %v1668, 0.0
        %v2056 = vsel %vm1742, %v1667, 0.0
        %v2057 = vsel %vm1743, %v1666, 0.0
        %v2058 = vsel %vm1744, %v1665, 0.0
        %v2059 = vsel %vm1745, %v1664, 0.0
        %v2060 = vsel %vm1746, %v1663, 0.0
        %v2061 = vsel %vm1747, %v1662, 0.0
        %v2062 = vsel %vm1748, %v1661, 0.0
        %v2063 = vsel %vm1749, %v1660, 0.0
        %v2064 = vsel %vm1750, %v1659, 0.0
        %v2065 = vsel %vm1751, %v1658, 0.0
        %v2066 = vsel %vm1752, %v1657, 0.0
        %v2067 = vsel %vm1753, %v1656, 0.0
        %v2068 = vsel %vm1754, %v1655, 0.0
        %v2069 = vsel %vm1755, %v1654, 0.0
        %v2070 = vsel %vm1756, %v1653, 0.0
        %v2071 = vsel %vm1757, %v1652, 0.0
        %v2072 = vsel %vm1758, %v2036, 0.0
        %v2073 = vsel %vm1759, %v2035, 0.0
        %v2074 = vpack.c.bf16 %v2039, %v2038
        %v2075 = vpack.c.bf16 %v2041, %v2040
        %v2076 = vpack.c.bf16 %v2043, %v2042
        %v2077 = vpack.c.bf16 %v2045, %v2044
        %v2078 = vpack.c.bf16 %v2047, %v2046
        %v2079 = vpack.c.bf16 %v2049, %v2048
        %v2080 = vpack.c.bf16 %v2051, %v2050
        %v2081 = vpack.c.bf16 %v2053, %v2052
        %v2082 = vpack.c.bf16 %v2055, %v2054
        %v2083 = vpack.c.bf16 %v2057, %v2056
        %v2084 = vpack.c.bf16 %v2059, %v2058
        %v2085 = vpack.c.bf16 %v2061, %v2060
        %v2086 = vpack.c.bf16 %v2063, %v2062
        %v2087 = vpack.c.bf16 %v2065, %v2064
        %v2088 = vpack.c.bf16 %v2067, %v2066
        %v2089 = vpack.c.bf16 %v2069, %v2068
        %v2090 = vpack.c.bf16 %v2071, %v2070
        %v2091 = vpack.c.bf16 %v2073, %v2072
        %v2092 = vpack.c.bf16 %v2032, %v2031
        %v2093 = vrot.slane %v2031, 1
        %v2094 = vrot.slane %v2032, 1
        %v2095 = vsel %vm1868, %v2093, %v2094
        %v2096 = vsel %vm1868, %v1867, %v2093
        %v2097 = vsel %vm1868, %v2094, %v1834
        %v2098 = vsel %vm1941, %v1901, 0.0
        %v2099 = vsel %vm1942, %v1900, 0.0
        %v2100 = vsel %vm1943, %v1899, 0.0
        %v2101 = vsel %vm1944, %v1898, 0.0
        %v2102 = vsel %vm1945, %v1897, 0.0
        %v2103 = vsel %vm1946, %v1896, 0.0
        %v2104 = vsel %vm1947, %v1895, 0.0
        %v2105 = vsel %vm1948, %v1894, 0.0
        %v2106 = vsel %vm1949, %v1893, 0.0
        %v2107 = vsel %vm1950, %v1892, 0.0
        %v2108 = vsel %vm1951, %v1891, 0.0
        %v2109 = vsel %vm1952, %v1890, 0.0
        %v2110 = vsel %vm1953, %v1889, 0.0
        %v2111 = vsel %vm1954, %v1888, 0.0
        %v2112 = vsel %vm1955, %v1887, 0.0
        %v2113 = vsel %vm1956, %v1886, 0.0
        %v2114 = vsel %vm1957, %v1885, 0.0
        %v2115 = vsel %vm1958, %v1884, 0.0
        %v2116 = vsel %vm1959, %v1883, 0.0
        %v2117 = vsel %vm1960, %v1882, 0.0
        %v2118 = vsel %vm1961, %v1881, 0.0
        %v2119 = vsel %vm1962, %v1880, 0.0
        %v2120 = vsel %vm1963, %v1879, 0.0
        %v2121 = vsel %vm1964, %v1878, 0.0
        %v2122 = vsel %vm1965, %v1877, 0.0
        %v2123 = vsel %vm1966, %v1876, 0.0
        %v2124 = vsel %vm1967, %v1875, 0.0
        %v2125 = vsel %vm1968, %v1874, 0.0
        %v2126 = vsel %vm1969, %v1873, 0.0
        %v2127 = vsel %vm1970, %v1872, 0.0
        %v2128 = vsel %vm1971, %v1871, 0.0
        %v2129 = vsel %vm1972, %v1870, 0.0
        %v2130 = vsel %vm1973, %v1869, 0.0
        %v2131 = vsel %vm1974, %v2096, 0.0
        %v2132 = vsel %vm1975, %v2095, 0.0
        %v2133 = vsel %vm1976, %v2097, 0.0
        %v2134 = vpack.c.bf16 %v2099, %v2098
        %v2135 = vpack.c.bf16 %v2101, %v2100
        %v2136 = vpack.c.bf16 %v2103, %v2102
        %v2137 = vpack.c.bf16 %v2105, %v2104
        %v2138 = vpack.c.bf16 %v2107, %v2106
        %v2139 = vpack.c.bf16 %v2109, %v2108
        %v2140 = vpack.c.bf16 %v2111, %v2110
        %v2141 = vpack.c.bf16 %v2113, %v2112
        %v2142 = vpack.c.bf16 %v2115, %v2114
        %v2143 = vpack.c.bf16 %v2117, %v2116
        %v2144 = vpack.c.bf16 %v2119, %v2118
        %v2145 = vpack.c.bf16 %v2121, %v2120
        %v2146 = vpack.c.bf16 %v2123, %v2122
        %v2147 = vpack.c.bf16 %v2125, %v2124
        %v2148 = vpack.c.bf16 %v2127, %v2126
        %v2149 = vpack.c.bf16 %v2129, %v2128
        %v2150 = vpack.c.bf16 %v2131, %v2130
        %v2151 = vpack.c.bf16 %v2133, %v2132
        %v2152 = vld [vmem:[#allocation2 + $0x130] sm:$0xff]
        %v2153 = vld [vmem:[#allocation2 + $0x138] sm:$0xff]
        %v2154 = vrot.slane %v2152, 7
        %v2155 = vrot.slane %v2153, 7
        %v2156 = vsel %vm1651, %v2154, %v2155
        %v2157 = vsel %vm1651, %v2034, %v2154
        %v2158 = vsel %vm1651, %v2155, %v1619
        %v2159 = vsel %vm1724, %v2158, 0.0
        %v2160 = vsel %vm1725, %v1682, 0.0
        %v2161 = vsel %vm1726, %v1681, 0.0
        %v2162 = vsel %vm1727, %v1680, 0.0
        %v2163 = vsel %vm1728, %v1679, 0.0
        %v2164 = vsel %vm1729, %v1678, 0.0
        %v2165 = vsel %vm1730, %v1677, 0.0
        %v2166 = vsel %vm1731, %v1676, 0.0
        %v2167 = vsel %vm1732, %v1675, 0.0
        %v2168 = vsel %vm1733, %v1674, 0.0
        %v2169 = vsel %vm1734, %v1673, 0.0
        %v2170 = vsel %vm1735, %v1672, 0.0
        %v2171 = vsel %vm1736, %v1671, 0.0
        %v2172 = vsel %vm1737, %v1670, 0.0
        %v2173 = vsel %vm1738, %v1669, 0.0
        %v2174 = vsel %vm1739, %v1668, 0.0
        %v2175 = vsel %vm1740, %v1667, 0.0
        %v2176 = vsel %vm1741, %v1666, 0.0
        %v2177 = vsel %vm1742, %v1665, 0.0
        %v2178 = vsel %vm1743, %v1664, 0.0
        %v2179 = vsel %vm1744, %v1663, 0.0
        %v2180 = vsel %vm1745, %v1662, 0.0
        %v2181 = vsel %vm1746, %v1661, 0.0
        %v2182 = vsel %vm1747, %v1660, 0.0
        %v2183 = vsel %vm1748, %v1659, 0.0
        %v2184 = vsel %vm1749, %v1658, 0.0
        %v2185 = vsel %vm1750, %v1657, 0.0
        %v2186 = vsel %vm1751, %v1656, 0.0
        %v2187 = vsel %vm1752, %v1655, 0.0
        %v2188 = vsel %vm1753, %v1654, 0.0
        %v2189 = vsel %vm1754, %v1653, 0.0
        %v2190 = vsel %vm1755, %v1652, 0.0
        %v2191 = vsel %vm1756, %v2036, 0.0
        %v2192 = vsel %vm1757, %v2035, 0.0
        %v2193 = vsel %vm1758, %v2157, 0.0
        %v2194 = vsel %vm1759, %v2156, 0.0
        %v2195 = vpack.c.bf16 %v2160, %v2159
        %v2196 = vpack.c.bf16 %v2162, %v2161
        %v2197 = vpack.c.bf16 %v2164, %v2163
        %v2198 = vpack.c.bf16 %v2166, %v2165
        %v2199 = vpack.c.bf16 %v2168, %v2167
        %v2200 = vpack.c.bf16 %v2170, %v2169
        %v2201 = vpack.c.bf16 %v2172, %v2171
        %v2202 = vpack.c.bf16 %v2174, %v2173
        %v2203 = vpack.c.bf16 %v2176, %v2175
        %v2204 = vpack.c.bf16 %v2178, %v2177
        %v2205 = vpack.c.bf16 %v2180, %v2179
        %v2206 = vpack.c.bf16 %v2182, %v2181
        %v2207 = vpack.c.bf16 %v2184, %v2183
        %v2208 = vpack.c.bf16 %v2186, %v2185
        %v2209 = vpack.c.bf16 %v2188, %v2187
        %v2210 = vpack.c.bf16 %v2190, %v2189
        %v2211 = vpack.c.bf16 %v2192, %v2191
        %v2212 = vpack.c.bf16 %v2194, %v2193
        %v2213 = vpack.c.bf16 %v2153, %v2152
        %v2214 = vrot.slane %v2152, 1
        %v2215 = vrot.slane %v2153, 1
        %v2216 = vsel %vm1868, %v2214, %v2215
        %v2217 = vsel %vm1868, %v2094, %v2214
        %v2218 = vsel %vm1868, %v2215, %v1836
        %v2219 = vsel %vm1941, %v1899, 0.0
        %v2220 = vsel %vm1942, %v1898, 0.0
        %v2221 = vsel %vm1943, %v1897, 0.0
        %v2222 = vsel %vm1944, %v1896, 0.0
        %v2223 = vsel %vm1945, %v1895, 0.0
        %v2224 = vsel %vm1946, %v1894, 0.0
        %v2225 = vsel %vm1947, %v1893, 0.0
        %v2226 = vsel %vm1948, %v1892, 0.0
        %v2227 = vsel %vm1949, %v1891, 0.0
        %v2228 = vsel %vm1950, %v1890, 0.0
        %v2229 = vsel %vm1951, %v1889, 0.0
        %v2230 = vsel %vm1952, %v1888, 0.0
        %v2231 = vsel %vm1953, %v1887, 0.0
        %v2232 = vsel %vm1954, %v1886, 0.0
        %v2233 = vsel %vm1955, %v1885, 0.0
        %v2234 = vsel %vm1956, %v1884, 0.0
        %v2235 = vsel %vm1957, %v1883, 0.0
        %v2236 = vsel %vm1958, %v1882, 0.0
        %v2237 = vsel %vm1959, %v1881, 0.0
        %v2238 = vsel %vm1960, %v1880, 0.0
        %v2239 = vsel %vm1961, %v1879, 0.0
        %v2240 = vsel %vm1962, %v1878, 0.0
        %v2241 = vsel %vm1963, %v1877, 0.0
        %v2242 = vsel %vm1964, %v1876, 0.0
        %v2243 = vsel %vm1965, %v1875, 0.0
        %v2244 = vsel %vm1966, %v1874, 0.0
        %v2245 = vsel %vm1967, %v1873, 0.0
        %v2246 = vsel %vm1968, %v1872, 0.0
        %v2247 = vsel %vm1969, %v1871, 0.0
        %v2248 = vsel %vm1970, %v1870, 0.0
        %v2249 = vsel %vm1971, %v1869, 0.0
        %v2250 = vsel %vm1972, %v2096, 0.0
        %v2251 = vsel %vm1973, %v2095, 0.0
        %v2252 = vsel %vm1974, %v2217, 0.0
        %v2253 = vsel %vm1975, %v2216, 0.0
        %v2254 = vsel %vm1976, %v2218, 0.0
        %v2255 = vpack.c.bf16 %v2220, %v2219
        %v2256 = vpack.c.bf16 %v2222, %v2221
        %v2257 = vpack.c.bf16 %v2224, %v2223
        %v2258 = vpack.c.bf16 %v2226, %v2225
        %v2259 = vpack.c.bf16 %v2228, %v2227
        %v2260 = vpack.c.bf16 %v2230, %v2229
        %v2261 = vpack.c.bf16 %v2232, %v2231
        %v2262 = vpack.c.bf16 %v2234, %v2233
        %v2263 = vpack.c.bf16 %v2236, %v2235
        %v2264 = vpack.c.bf16 %v2238, %v2237
        %v2265 = vpack.c.bf16 %v2240, %v2239
        %v2266 = vpack.c.bf16 %v2242, %v2241
        %v2267 = vpack.c.bf16 %v2244, %v2243
        %v2268 = vpack.c.bf16 %v2246, %v2245
        %v2269 = vpack.c.bf16 %v2248, %v2247
        %v2270 = vpack.c.bf16 %v2250, %v2249
        %v2271 = vpack.c.bf16 %v2252, %v2251
        %v2272 = vpack.c.bf16 %v2254, %v2253
        %2291 = vrot.lane.b32.xlu0 %v1814, 64
        %v2292 = vpop.permute.xlu0 %2291
        %2293 = vrot.lane.b32.xlu0 %v1815, 64
        %v2294 = vpop.permute.xlu0 %2293
        %2295 = vrot.lane.b32.xlu0 %v1816, 64
        %v2296 = vpop.permute.xlu0 %2295
        %2297 = vrot.lane.b32.xlu0 %v1817, 64
        %v2298 = vpop.permute.xlu0 %2297
        %2299 = vrot.lane.b32.xlu0 %v1818, 64
        %v2300 = vpop.permute.xlu0 %2299
        %2301 = vrot.lane.b32.xlu0 %v1819, 64
        %v2302 = vpop.permute.xlu0 %2301
        %2303 = vrot.lane.b32.xlu0 %v1820, 64
        %v2304 = vpop.permute.xlu0 %2303
        %2305 = vrot.lane.b32.xlu0 %v1821, 64
        %v2306 = vpop.permute.xlu0 %2305
        %2307 = vrot.lane.b32.xlu0 %v1822, 64
        %v2308 = vpop.permute.xlu0 %2307
        %2309 = vrot.lane.b32.xlu0 %v1823, 64
        %v2310 = vpop.permute.xlu0 %2309
        %2311 = vrot.lane.b32.xlu0 %v1824, 64
        %v2312 = vpop.permute.xlu0 %2311
        %2313 = vrot.lane.b32.xlu0 %v1825, 64
        %v2314 = vpop.permute.xlu0 %2313
        %2315 = vrot.lane.b32.xlu0 %v1826, 64
        %v2316 = vpop.permute.xlu0 %2315
        %2317 = vrot.lane.b32.xlu0 %v1827, 64
        %v2318 = vpop.permute.xlu0 %2317
        %2319 = vrot.lane.b32.xlu0 %v1828, 64
        %v2320 = vpop.permute.xlu0 %2319
        %2321 = vrot.lane.b32.xlu0 %v1829, 64
        %v2322 = vpop.permute.xlu0 %2321
        %2323 = vrot.lane.b32.xlu0 %v1830, 64
        %v2324 = vpop.permute.xlu0 %2323
        %2325 = vrot.lane.b32.xlu0 %v1831, 64
        %v2326 = vpop.permute.xlu0 %2325
        %v2329 = vsel %vm985, %v1796, %v2292
        %v2333 = vsel %vm985, %v1797, %v2294
        %v2337 = vsel %vm985, %v1798, %v2296
        %v2341 = vsel %vm985, %v1799, %v2298
        %v2345 = vsel %vm985, %v1800, %v2300
        %v2349 = vsel %vm985, %v1801, %v2302
        %v2353 = vsel %vm985, %v1802, %v2304
        %v2357 = vsel %vm985, %v1803, %v2306
        %v2361 = vsel %vm985, %v1804, %v2308
        %v2365 = vsel %vm985, %v1805, %v2310
        %v2369 = vsel %vm985, %v1806, %v2312
        %v2373 = vsel %vm985, %v1807, %v2314
        %v2377 = vsel %vm985, %v1808, %v2316
        %v2381 = vsel %vm985, %v1809, %v2318
        %v2385 = vsel %vm985, %v1810, %v2320
        %v2389 = vsel %vm985, %v1811, %v2322
        %v2393 = vsel %vm985, %v1812, %v2324
        %v2397 = vsel %vm985, %v1813, %v2326
        %2399 = vst [vmem:[#allocation3] sm:$0xff] %v2329
        %2400 = vst [vmem:[#allocation3 + $0x28] sm:$0xff] %v2333
        %2401 = vst [vmem:[#allocation3 + $0x50] sm:$0xff] %v2337
        %2402 = vst [vmem:[#allocation3 + $0x78] sm:$0xff] %v2341
        %2403 = vst [vmem:[#allocation3 + $0xa0] sm:$0xff] %v2345
        %2404 = vst [vmem:[#allocation3 + $0xc8] sm:$0xff] %v2349
        %2405 = vst [vmem:[#allocation3 + $0xf0] sm:$0xff] %v2353
        %2406 = vst [vmem:[#allocation3 + $0x118] sm:$0xff] %v2357
        %2407 = vst [vmem:[#allocation3 + $0x140] sm:$0xff] %v2361
        %2408 = vst [vmem:[#allocation3 + $0x168] sm:$0xff] %v2365
        %2409 = vst [vmem:[#allocation3 + $0x190] sm:$0xff] %v2369
        %2410 = vst [vmem:[#allocation3 + $0x1b8] sm:$0xff] %v2373
        %2411 = vst [vmem:[#allocation3 + $0x1e0] sm:$0xff] %v2377
        %2412 = vst [vmem:[#allocation3 + $0x208] sm:$0xff] %v2381
        %2413 = vst [vmem:[#allocation3 + $0x230] sm:$0xff] %v2385
        %2414 = vst [vmem:[#allocation3 + $0x258] sm:$0xff] %v2389
        %2415 = vst [vmem:[#allocation3 + $0x280] sm:$0xff] %v2393
        %2416 = vst [vmem:[#allocation3 + $0x2a8] sm:$0xff] %v2397
        %2435 = vrot.lane.b32.xlu0 %v2074, 64
        %v2436 = vpop.permute.xlu0 %2435
        %2437 = vrot.lane.b32.xlu0 %v2075, 64
        %v2438 = vpop.permute.xlu0 %2437
        %2439 = vrot.lane.b32.xlu0 %v2076, 64
        %v2440 = vpop.permute.xlu0 %2439
        %2441 = vrot.lane.b32.xlu0 %v2077, 64
        %v2442 = vpop.permute.xlu0 %2441
        %2443 = vrot.lane.b32.xlu0 %v2078, 64
        %v2444 = vpop.permute.xlu0 %2443
        %2445 = vrot.lane.b32.xlu0 %v2079, 64
        %v2446 = vpop.permute.xlu0 %2445
        %2447 = vrot.lane.b32.xlu0 %v2080, 64
        %v2448 = vpop.permute.xlu0 %2447
        %2449 = vrot.lane.b32.xlu0 %v2081, 64
        %v2450 = vpop.permute.xlu0 %2449
        %2451 = vrot.lane.b32.xlu0 %v2082, 64
        %v2452 = vpop.permute.xlu0 %2451
        %2453 = vrot.lane.b32.xlu0 %v2083, 64
        %v2454 = vpop.permute.xlu0 %2453
        %2455 = vrot.lane.b32.xlu0 %v2084, 64
        %v2456 = vpop.permute.xlu0 %2455
        %2457 = vrot.lane.b32.xlu0 %v2085, 64
        %v2458 = vpop.permute.xlu0 %2457
        %2459 = vrot.lane.b32.xlu0 %v2086, 64
        %v2460 = vpop.permute.xlu0 %2459
        %2461 = vrot.lane.b32.xlu0 %v2087, 64
        %v2462 = vpop.permute.xlu0 %2461
        %2463 = vrot.lane.b32.xlu0 %v2088, 64
        %v2464 = vpop.permute.xlu0 %2463
        %2465 = vrot.lane.b32.xlu0 %v2089, 64
        %v2466 = vpop.permute.xlu0 %2465
        %2467 = vrot.lane.b32.xlu0 %v2090, 64
        %v2468 = vpop.permute.xlu0 %2467
        %2469 = vrot.lane.b32.xlu0 %v2091, 64
        %v2470 = vpop.permute.xlu0 %2469
        %v2473 = vsel %vm985, %v2013, %v2436
        %v2477 = vsel %vm985, %v2014, %v2438
        %v2481 = vsel %vm985, %v2015, %v2440
        %v2485 = vsel %vm985, %v2016, %v2442
        %v2489 = vsel %vm985, %v2017, %v2444
        %v2493 = vsel %vm985, %v2018, %v2446
        %v2497 = vsel %vm985, %v2019, %v2448
        %v2501 = vsel %vm985, %v2020, %v2450
        %v2505 = vsel %vm985, %v2021, %v2452
        %v2509 = vsel %vm985, %v2022, %v2454
        %v2513 = vsel %vm985, %v2023, %v2456
        %v2517 = vsel %vm985, %v2024, %v2458
        %v2521 = vsel %vm985, %v2025, %v2460
        %v2525 = vsel %vm985, %v2026, %v2462
        %v2529 = vsel %vm985, %v2027, %v2464
        %v2533 = vsel %vm985, %v2028, %v2466
        %v2537 = vsel %vm985, %v2029, %v2468
        %v2541 = vsel %vm985, %v2030, %v2470
        %2543 = vst [vmem:[#allocation3 + $0x8] sm:$0xff] %v2473
        %2544 = vst [vmem:[#allocation3 + $0x30] sm:$0xff] %v2477
        %2545 = vst [vmem:[#allocation3 + $0x58] sm:$0xff] %v2481
        %2546 = vst [vmem:[#allocation3 + $0x80] sm:$0xff] %v2485
        %2547 = vst [vmem:[#allocation3 + $0xa8] sm:$0xff] %v2489
        %2548 = vst [vmem:[#allocation3 + $0xd0] sm:$0xff] %v2493
        %2549 = vst [vmem:[#allocation3 + $0xf8] sm:$0xff] %v2497
        %2550 = vst [vmem:[#allocation3 + $0x120] sm:$0xff] %v2501
        %2551 = vst [vmem:[#allocation3 + $0x148] sm:$0xff] %v2505
        %2552 = vst [vmem:[#allocation3 + $0x170] sm:$0xff] %v2509
        %2553 = vst [vmem:[#allocation3 + $0x198] sm:$0xff] %v2513
        %2554 = vst [vmem:[#allocation3 + $0x1c0] sm:$0xff] %v2517
        %2555 = vst [vmem:[#allocation3 + $0x1e8] sm:$0xff] %v2521
        %2556 = vst [vmem:[#allocation3 + $0x210] sm:$0xff] %v2525
        %2557 = vst [vmem:[#allocation3 + $0x238] sm:$0xff] %v2529
        %2558 = vst [vmem:[#allocation3 + $0x260] sm:$0xff] %v2533
        %2559 = vst [vmem:[#allocation3 + $0x288] sm:$0xff] %v2537
        %2560 = vst [vmem:[#allocation3 + $0x2b0] sm:$0xff] %v2541
        %2579 = vrot.lane.b32.xlu0 %v2134, 64
        %v2580 = vpop.permute.xlu0 %2579
        %2581 = vrot.lane.b32.xlu0 %v2135, 64
        %v2582 = vpop.permute.xlu0 %2581
        %2583 = vrot.lane.b32.xlu0 %v2136, 64
        %v2584 = vpop.permute.xlu0 %2583
        %2585 = vrot.lane.b32.xlu0 %v2137, 64
        %v2586 = vpop.permute.xlu0 %2585
        %2587 = vrot.lane.b32.xlu0 %v2138, 64
        %v2588 = vpop.permute.xlu0 %2587
        %2589 = vrot.lane.b32.xlu0 %v2139, 64
        %v2590 = vpop.permute.xlu0 %2589
        %2591 = vrot.lane.b32.xlu0 %v2140, 64
        %v2592 = vpop.permute.xlu0 %2591
        %2593 = vrot.lane.b32.xlu0 %v2141, 64
        %v2594 = vpop.permute.xlu0 %2593
        %2595 = vrot.lane.b32.xlu0 %v2142, 64
        %v2596 = vpop.permute.xlu0 %2595
        %2597 = vrot.lane.b32.xlu0 %v2143, 64
        %v2598 = vpop.permute.xlu0 %2597
        %2599 = vrot.lane.b32.xlu0 %v2144, 64
        %v2600 = vpop.permute.xlu0 %2599
        %2601 = vrot.lane.b32.xlu0 %v2145, 64
        %v2602 = vpop.permute.xlu0 %2601
        %2603 = vrot.lane.b32.xlu0 %v2146, 64
        %v2604 = vpop.permute.xlu0 %2603
        %2605 = vrot.lane.b32.xlu0 %v2147, 64
        %v2606 = vpop.permute.xlu0 %2605
        %2607 = vrot.lane.b32.xlu0 %v2148, 64
        %v2608 = vpop.permute.xlu0 %2607
        %2609 = vrot.lane.b32.xlu0 %v2149, 64
        %v2610 = vpop.permute.xlu0 %2609
        %2611 = vrot.lane.b32.xlu0 %v2150, 64
        %v2612 = vpop.permute.xlu0 %2611
        %2613 = vrot.lane.b32.xlu0 %v2151, 64
        %v2614 = vpop.permute.xlu0 %2613
        %v2617 = vsel %vm985, %v1815, %v2580
        %v2621 = vsel %vm985, %v1816, %v2582
        %v2625 = vsel %vm985, %v1817, %v2584
        %v2629 = vsel %vm985, %v1818, %v2586
        %v2633 = vsel %vm985, %v1819, %v2588
        %v2637 = vsel %vm985, %v1820, %v2590
        %v2641 = vsel %vm985, %v1821, %v2592
        %v2645 = vsel %vm985, %v1822, %v2594
        %v2649 = vsel %vm985, %v1823, %v2596
        %v2653 = vsel %vm985, %v1824, %v2598
        %v2657 = vsel %vm985, %v1825, %v2600
        %v2661 = vsel %vm985, %v1826, %v2602
        %v2665 = vsel %vm985, %v1827, %v2604
        %v2669 = vsel %vm985, %v1828, %v2606
        %v2673 = vsel %vm985, %v1829, %v2608
        %v2677 = vsel %vm985, %v1830, %v2610
        %v2681 = vsel %vm985, %v1831, %v2612
        %v2685 = vsel %vm985, %v2092, %v2614
        %2687 = vst [vmem:[#allocation3 + $0x10] sm:$0xff] %v2617
        %2688 = vst [vmem:[#allocation3 + $0x38] sm:$0xff] %v2621
        %2689 = vst [vmem:[#allocation3 + $0x60] sm:$0xff] %v2625
        %2690 = vst [vmem:[#allocation3 + $0x88] sm:$0xff] %v2629
        %2691 = vst [vmem:[#allocation3 + $0xb0] sm:$0xff] %v2633
        %2692 = vst [vmem:[#allocation3 + $0xd8] sm:$0xff] %v2637
        %2693 = vst [vmem:[#allocation3 + $0x100] sm:$0xff] %v2641
        %2694 = vst [vmem:[#allocation3 + $0x128] sm:$0xff] %v2645
        %2695 = vst [vmem:[#allocation3 + $0x150] sm:$0xff] %v2649
        %2696 = vst [vmem:[#allocation3 + $0x178] sm:$0xff] %v2653
        %2697 = vst [vmem:[#allocation3 + $0x1a0] sm:$0xff] %v2657
        %2698 = vst [vmem:[#allocation3 + $0x1c8] sm:$0xff] %v2661
        %2699 = vst [vmem:[#allocation3 + $0x1f0] sm:$0xff] %v2665
        %2700 = vst [vmem:[#allocation3 + $0x218] sm:$0xff] %v2669
        %2701 = vst [vmem:[#allocation3 + $0x240] sm:$0xff] %v2673
        %2702 = vst [vmem:[#allocation3 + $0x268] sm:$0xff] %v2677
        %2703 = vst [vmem:[#allocation3 + $0x290] sm:$0xff] %v2681
        %2704 = vst [vmem:[#allocation3 + $0x2b8] sm:$0xff] %v2685
        %2707 = vrot.lane.b32.xlu0 %v2092, 64
        %v2708 = vpop.permute.xlu0 %2707
        %2709 = vrot.lane.b32.xlu0 %v2213, 64
        %v2710 = vpop.permute.xlu0 %2709
        %v2712 = vsel %vm985, %v2195, %v2296
        %v2715 = vsel %vm985, %v2196, %v2298
        %v2718 = vsel %vm985, %v2197, %v2300
        %v2721 = vsel %vm985, %v2198, %v2302
        %v2724 = vsel %vm985, %v2199, %v2304
        %v2727 = vsel %vm985, %v2200, %v2306
        %v2730 = vsel %vm985, %v2201, %v2308
        %v2733 = vsel %vm985, %v2202, %v2310
        %v2736 = vsel %vm985, %v2203, %v2312
        %v2739 = vsel %vm985, %v2204, %v2314
        %v2742 = vsel %vm985, %v2205, %v2316
        %v2745 = vsel %vm985, %v2206, %v2318
        %v2748 = vsel %vm985, %v2207, %v2320
        %v2751 = vsel %vm985, %v2208, %v2322
        %v2754 = vsel %vm985, %v2209, %v2324
        %v2757 = vsel %vm985, %v2210, %v2326
        %v2761 = vsel %vm985, %v2211, %v2708
        %v2765 = vsel %vm985, %v2212, %v2710
        %2767 = vst [vmem:[#allocation3 + $0x18] sm:$0xff] %v2712
        %2768 = vst [vmem:[#allocation3 + $0x40] sm:$0xff] %v2715
        %2769 = vst [vmem:[#allocation3 + $0x68] sm:$0xff] %v2718
        %2770 = vst [vmem:[#allocation3 + $0x90] sm:$0xff] %v2721
        %2771 = vst [vmem:[#allocation3 + $0xb8] sm:$0xff] %v2724
        %2772 = vst [vmem:[#allocation3 + $0xe0] sm:$0xff] %v2727
        %2773 = vst [vmem:[#allocation3 + $0x108] sm:$0xff] %v2730
        %2774 = vst [vmem:[#allocation3 + $0x130] sm:$0xff] %v2733
        %2775 = vst [vmem:[#allocation3 + $0x158] sm:$0xff] %v2736
        %2776 = vst [vmem:[#allocation3 + $0x180] sm:$0xff] %v2739
        %2777 = vst [vmem:[#allocation3 + $0x1a8] sm:$0xff] %v2742
        %2778 = vst [vmem:[#allocation3 + $0x1d0] sm:$0xff] %v2745
        %2779 = vst [vmem:[#allocation3 + $0x1f8] sm:$0xff] %v2748
        %2780 = vst [vmem:[#allocation3 + $0x220] sm:$0xff] %v2751
        %2781 = vst [vmem:[#allocation3 + $0x248] sm:$0xff] %v2754
        %2782 = vst [vmem:[#allocation3 + $0x270] sm:$0xff] %v2757
        %2783 = vst [vmem:[#allocation3 + $0x298] sm:$0xff] %v2761
        %2784 = vst [vmem:[#allocation3 + $0x2c0] sm:$0xff] %v2765
        %2785 = vst.msk [vmem:[#allocation3 + $0x20] sm:$0xff] %vm985, %v2255
        %2786 = vst.msk [vmem:[#allocation3 + $0x48] sm:$0xff] %vm985, %v2256
        %2787 = vst.msk [vmem:[#allocation3 + $0x70] sm:$0xff] %vm985, %v2257
        %2788 = vst.msk [vmem:[#allocation3 + $0x98] sm:$0xff] %vm985, %v2258
        %2789 = vst.msk [vmem:[#allocation3 + $0xc0] sm:$0xff] %vm985, %v2259
        %2790 = vst.msk [vmem:[#allocation3 + $0xe8] sm:$0xff] %vm985, %v2260
        %2791 = vst.msk [vmem:[#allocation3 + $0x110] sm:$0xff] %vm985, %v2261
        %2792 = vst.msk [vmem:[#allocation3 + $0x138] sm:$0xff] %vm985, %v2262
        %2793 = vst.msk [vmem:[#allocation3 + $0x160] sm:$0xff] %vm985, %v2263
        %2794 = vst.msk [vmem:[#allocation3 + $0x188] sm:$0xff] %vm985, %v2264
        %2795 = vst.msk [vmem:[#allocation3 + $0x1b0] sm:$0xff] %vm985, %v2265
        %2796 = vst.msk [vmem:[#allocation3 + $0x1d8] sm:$0xff] %vm985, %v2266
        %2797 = vst.msk [vmem:[#allocation3 + $0x200] sm:$0xff] %vm985, %v2267
        %2798 = vst.msk [vmem:[#allocation3 + $0x228] sm:$0xff] %vm985, %v2268
        %2799 = vst.msk [vmem:[#allocation3 + $0x250] sm:$0xff] %vm985, %v2269
        %2800 = vst.msk [vmem:[#allocation3 + $0x278] sm:$0xff] %vm985, %v2270
        %2801 = vst.msk [vmem:[#allocation3 + $0x2a0] sm:$0xff] %vm985, %v2271
        %2802 = vst.msk [vmem:[#allocation3 + $0x2c8] sm:$0xff] %vm985, %v2272
        %v2803 = vld [vmem:[#allocation3] sm:$0xff]
        %v2804 = vld [vmem:[#allocation3 + $0x8] sm:$0xff]
        %v2805 = vld [vmem:[#allocation3 + $0x10] sm:$0xff]
        %v2806 = vld [vmem:[#allocation3 + $0x18] sm:$0xff]
        %v2807 = vld [vmem:[#allocation3 + $0x20] sm:$0xff]
        %v2808 = vld [vmem:[#allocation3 + $0x28] sm:$0xff]
        %v2809 = vld [vmem:[#allocation3 + $0x30] sm:$0xff]
        %v2810 = vld [vmem:[#allocation3 + $0x38] sm:$0xff]
        %v2811 = vld [vmem:[#allocation3 + $0x40] sm:$0xff]
        %v2812 = vld [vmem:[#allocation3 + $0x48] sm:$0xff]
        %v2813 = vld [vmem:[#allocation3 + $0x50] sm:$0xff]
        %v2814 = vld [vmem:[#allocation3 + $0x58] sm:$0xff]
        %v2815 = vld [vmem:[#allocation3 + $0x60] sm:$0xff]
        %v2816 = vld [vmem:[#allocation3 + $0x68] sm:$0xff]
        %v2817 = vld [vmem:[#allocation3 + $0x70] sm:$0xff]
        %v2818 = vld [vmem:[#allocation3 + $0x78] sm:$0xff]
        %v2819 = vld [vmem:[#allocation3 + $0x80] sm:$0xff]
        %v2820 = vld [vmem:[#allocation3 + $0x88] sm:$0xff]
        %v2821 = vld [vmem:[#allocation3 + $0x90] sm:$0xff]
        %v2822 = vld [vmem:[#allocation3 + $0x98] sm:$0xff]
        %v2823 = vld [vmem:[#allocation3 + $0xa0] sm:$0xff]
        %v2824 = vld [vmem:[#allocation3 + $0xa8] sm:$0xff]
        %v2825 = vld [vmem:[#allocation3 + $0xb0] sm:$0xff]
        %v2826 = vld [vmem:[#allocation3 + $0xb8] sm:$0xff]
        %v2827 = vld [vmem:[#allocation3 + $0xc0] sm:$0xff]
        %v2828 = vld [vmem:[#allocation3 + $0xc8] sm:$0xff]
        %v2829 = vld [vmem:[#allocation3 + $0xd0] sm:$0xff]
        %v2830 = vld [vmem:[#allocation3 + $0xd8] sm:$0xff]
        %v2831 = vld [vmem:[#allocation3 + $0xe0] sm:$0xff]
        %v2832 = vld [vmem:[#allocation3 + $0xe8] sm:$0xff]
        %v2833 = vld [vmem:[#allocation3 + $0xf0] sm:$0xff]
        %v2834 = vld [vmem:[#allocation3 + $0xf8] sm:$0xff]
        %v2835 = vld [vmem:[#allocation3 + $0x100] sm:$0xff]
        %v2836 = vld [vmem:[#allocation3 + $0x108] sm:$0xff]
        %v2837 = vld [vmem:[#allocation3 + $0x110] sm:$0xff]
        %v2838 = vld [vmem:[#allocation3 + $0x118] sm:$0xff]
        %v2839 = vld [vmem:[#allocation3 + $0x120] sm:$0xff]
        %v2840 = vld [vmem:[#allocation3 + $0x128] sm:$0xff]
        %v2841 = vld [vmem:[#allocation3 + $0x130] sm:$0xff]
        %v2842 = vld [vmem:[#allocation3 + $0x138] sm:$0xff]
        %v2843 = vld [vmem:[#allocation3 + $0x140] sm:$0xff]
        %v2844 = vld [vmem:[#allocation3 + $0x148] sm:$0xff]
        %v2845 = vld [vmem:[#allocation3 + $0x150] sm:$0xff]
        %v2846 = vld [vmem:[#allocation3 + $0x158] sm:$0xff]
        %v2847 = vld [vmem:[#allocation3 + $0x160] sm:$0xff]
        %v2848 = vld [vmem:[#allocation3 + $0x168] sm:$0xff]
        %v2849 = vld [vmem:[#allocation3 + $0x170] sm:$0xff]
        %v2850 = vld [vmem:[#allocation3 + $0x178] sm:$0xff]
        %v2851 = vld [vmem:[#allocation3 + $0x180] sm:$0xff]
        %v2852 = vld [vmem:[#allocation3 + $0x188] sm:$0xff]
        %v2853 = vld [vmem:[#allocation3 + $0x190] sm:$0xff]
        %v2854 = vld [vmem:[#allocation3 + $0x198] sm:$0xff]
        %v2855 = vld [vmem:[#allocation3 + $0x1a0] sm:$0xff]
        %v2856 = vld [vmem:[#allocation3 + $0x1a8] sm:$0xff]
        %v2857 = vld [vmem:[#allocation3 + $0x1b0] sm:$0xff]
        %v2858 = vld [vmem:[#allocation3 + $0x1b8] sm:$0xff]
        %v2859 = vld [vmem:[#allocation3 + $0x1c0] sm:$0xff]
        %v2860 = vld [vmem:[#allocation3 + $0x1c8] sm:$0xff]
        %v2861 = vld [vmem:[#allocation3 + $0x1d0] sm:$0xff]
        %v2862 = vld [vmem:[#allocation3 + $0x1d8] sm:$0xff]
        %v2863 = vld [vmem:[#allocation3 + $0x1e0] sm:$0xff]
        %v2864 = vld [vmem:[#allocation3 + $0x1e8] sm:$0xff]
        %v2865 = vld [vmem:[#allocation3 + $0x1f0] sm:$0xff]
        %v2866 = vld [vmem:[#allocation3 + $0x1f8] sm:$0xff]
        %v2867 = vld [vmem:[#allocation3 + $0x200] sm:$0xff]
        %v2868 = vld [vmem:[#allocation3 + $0x208] sm:$0xff]
        %v2869 = vld [vmem:[#allocation3 + $0x210] sm:$0xff]
        %v2870 = vld [vmem:[#allocation3 + $0x218] sm:$0xff]
        %v2871 = vld [vmem:[#allocation3 + $0x220] sm:$0xff]
        %v2872 = vld [vmem:[#allocation3 + $0x228] sm:$0xff]
        %v2873 = vld [vmem:[#allocation3 + $0x230] sm:$0xff]
        %v2874 = vld [vmem:[#allocation3 + $0x238] sm:$0xff]
        %v2875 = vld [vmem:[#allocation3 + $0x240] sm:$0xff]
        %v2876 = vld [vmem:[#allocation3 + $0x248] sm:$0xff]
        %v2877 = vld [vmem:[#allocation3 + $0x250] sm:$0xff]
        %v2878 = vld [vmem:[#allocation3 + $0x258] sm:$0xff]
        %v2879 = vld [vmem:[#allocation3 + $0x260] sm:$0xff]
        %v2880 = vld [vmem:[#allocation3 + $0x268] sm:$0xff]
        %v2881 = vld [vmem:[#allocation3 + $0x270] sm:$0xff]
        %v2882 = vld [vmem:[#allocation3 + $0x278] sm:$0xff]
        %v2883 = vld [vmem:[#allocation3 + $0x280] sm:$0xff]
        %v2884 = vld [vmem:[#allocation3 + $0x288] sm:$0xff]
        %v2885 = vld [vmem:[#allocation3 + $0x290] sm:$0xff]
        %v2886 = vld [vmem:[#allocation3 + $0x298] sm:$0xff]
        %v2887 = vld [vmem:[#allocation3 + $0x2a0] sm:$0xff]
        %v2888 = vld [vmem:[#allocation3 + $0x2a8] sm:$0xff]
        %v2889 = vld [vmem:[#allocation3 + $0x2b0] sm:$0xff]
        %v2890 = vld [vmem:[#allocation3 + $0x2b8] sm:$0xff]
        %v2891 = vld [vmem:[#allocation3 + $0x2c0] sm:$0xff]
        %v2892 = vld [vmem:[#allocation3 + $0x2c8] sm:$0xff]
        %v2893 = vld [vmem:[#allocation10] sm:$0xf]
        %v2894 = vld [vmem:[#allocation10 + $0x4] sm:$0xf]
        %v2895 = vld [vmem:[#allocation10 + $0x8] sm:$0xf]
        %v2896 = vld [vmem:[#allocation10 + $0xc] sm:$0xf]
        %v2897 = vld [vmem:[#allocation10 + $0x10] sm:$0xf]
        %v2898 = vld [vmem:[#allocation10 + $0x14] sm:$0xf]
        %v2899 = vld [vmem:[#allocation10 + $0x18] sm:$0xf]
        %v2900 = vld [vmem:[#allocation10 + $0x1c] sm:$0xf]
        %v2901 = vld [vmem:[#allocation10 + $0x20] sm:$0xf]
        %v2902 = vld [vmem:[#allocation10 + $0x24] sm:$0xf]
        %v2903 = vld [vmem:[#allocation10 + $0x28] sm:$0xf]
        %v2904 = vld [vmem:[#allocation10 + $0x2c] sm:$0xf]
        %v2905 = vld [vmem:[#allocation10 + $0x30] sm:$0xf]
        %v2906 = vld [vmem:[#allocation10 + $0x34] sm:$0xf]
        %v2907 = vld [vmem:[#allocation10 + $0x38] sm:$0xf]
        %v2908 = vld [vmem:[#allocation10 + $0x3c] sm:$0xf]
        %v2909 = vld [vmem:[#allocation10 + $0x40] sm:$0xf]
        %v2910 = vld [vmem:[#allocation10 + $0x44] sm:$0xf]
        %v2911 = vld [vmem:[#allocation10 + $0x48] sm:$0xf]
        %v2912 = vld [vmem:[#allocation10 + $0x4c] sm:$0xf]
        %v2913 = vld [vmem:[#allocation10 + $0x50] sm:$0xf]
        %v2914 = vld [vmem:[#allocation10 + $0x54] sm:$0xf]
        %v2915 = vld [vmem:[#allocation10 + $0x58] sm:$0xf]
        %v2916 = vld [vmem:[#allocation10 + $0x5c] sm:$0xf]
        %v2917 = vld [vmem:[#allocation10 + $0x60] sm:$0xf]
        %v2918 = vld [vmem:[#allocation10 + $0x64] sm:$0xf]
        %v2919 = vld [vmem:[#allocation10 + $0x68] sm:$0xf]
        %v2920 = vld [vmem:[#allocation10 + $0x6c] sm:$0xf]
        %v2921 = vld [vmem:[#allocation10 + $0x70] sm:$0xf]
        %v2922 = vld [vmem:[#allocation10 + $0x74] sm:$0xf]
        %v2923 = vld [vmem:[#allocation10 + $0x78] sm:$0xf]
        %v2924 = vld [vmem:[#allocation10 + $0x7c] sm:$0xf]
        %v2925 = vld [vmem:[#allocation10 + $0x80] sm:$0xf]
        %v2926 = vld [vmem:[#allocation10 + $0x84] sm:$0xf]
        %v2927 = vld [vmem:[#allocation10 + $0x88] sm:$0xf]
        %v2928 = vld [vmem:[#allocation10 + $0x8c] sm:$0xf]
        %v2929 = vld [vmem:[#allocation10 + $0x90] sm:$0xf]
        %v2930 = vld [vmem:[#allocation10 + $0x94] sm:$0xf]
        %v2931 = vld [vmem:[#allocation10 + $0x98] sm:$0xf]
        %v2932 = vld [vmem:[#allocation10 + $0x9c] sm:$0xf]
        %v2933 = vld [vmem:[#allocation10 + $0xa0] sm:$0xf]
        %v2934 = vld [vmem:[#allocation10 + $0xa4] sm:$0xf]
        %v2935 = vld [vmem:[#allocation10 + $0xa8] sm:$0xf]
        %v2936 = vld [vmem:[#allocation10 + $0xac] sm:$0xf]
        %v2937 = vld [vmem:[#allocation10 + $0xb0] sm:$0xf]
        %v2938 = vld [vmem:[#allocation10 + $0xb4] sm:$0xf]
        %v2939 = vld [vmem:[#allocation10 + $0xb8] sm:$0xf]
        %v2940 = vld [vmem:[#allocation10 + $0xbc] sm:$0xf]
        %v2941 = vld [vmem:[#allocation10 + $0xc0] sm:$0xf]
        %v2942 = vld [vmem:[#allocation10 + $0xc4] sm:$0xf]
        %v2943 = vld [vmem:[#allocation10 + $0xc8] sm:$0xf]
        %v2944 = vld [vmem:[#allocation10 + $0xcc] sm:$0xf]
        %v2945 = vld [vmem:[#allocation10 + $0xd0] sm:$0xf]
        %v2946 = vld [vmem:[#allocation10 + $0xd4] sm:$0xf]
        %v2947 = vld [vmem:[#allocation10 + $0xd8] sm:$0xf]
        %v2948 = vld [vmem:[#allocation10 + $0xdc] sm:$0xf]
        %v2949 = vld [vmem:[#allocation10 + $0xe0] sm:$0xf]
        %v2950 = vld [vmem:[#allocation10 + $0xe4] sm:$0xf]
        %v2951 = vld [vmem:[#allocation10 + $0xe8] sm:$0xf]
        %v2952 = vld [vmem:[#allocation10 + $0xec] sm:$0xf]
        %v2953 = vld [vmem:[#allocation10 + $0xf0] sm:$0xf]
        %v2954 = vld [vmem:[#allocation10 + $0xf4] sm:$0xf]
        %v2955 = vld [vmem:[#allocation10 + $0xf8] sm:$0xf]
        %v2956 = vld [vmem:[#allocation10 + $0xfc] sm:$0xf]
        %v2957 = vld [vmem:[#allocation10 + $0x100] sm:$0xf]
        %v2958 = vld [vmem:[#allocation10 + $0x104] sm:$0xf]
        %v2959 = vld [vmem:[#allocation10 + $0x108] sm:$0xf]
        %v2960 = vld [vmem:[#allocation10 + $0x10c] sm:$0xf]
        %v2961 = vld [vmem:[#allocation10 + $0x110] sm:$0xf]
        %v2962 = vld [vmem:[#allocation10 + $0x114] sm:$0xf]
        %v2963 = vld [vmem:[#allocation10 + $0x118] sm:$0xf]
        %v2964 = vld [vmem:[#allocation10 + $0x11c] sm:$0xf]
        %v2965 = vld [vmem:[#allocation12] sm:$0x1]
        %v2967 = vlaneseq
        %v2968 = vshrl.u32 %v2967, 7
        %v2969 = vsub.s32 0, %v2968
        %v2970 = vrot.slane %v2965, %v2969
        %v3044 = vunpack.c.l.b16 %v2893
        %v3045 = vunpack.c.l.b16 %v2894
        %v3046 = vunpack.c.l.b16 %v2895
        %v3047 = vunpack.c.l.b16 %v2896
        %v3048 = vunpack.c.l.b16 %v2897
        %v3049 = vunpack.c.l.b16 %v2898
        %v3050 = vunpack.c.l.b16 %v2899
        %v3051 = vunpack.c.l.b16 %v2900
        %v3052 = vunpack.c.l.b16 %v2901
        %v3053 = vunpack.c.l.b16 %v2902
        %v3054 = vunpack.c.l.b16 %v2903
        %v3055 = vunpack.c.l.b16 %v2904
        %v3056 = vunpack.c.l.b16 %v2905
        %v3057 = vunpack.c.l.b16 %v2906
        %v3058 = vunpack.c.l.b16 %v2907
        %v3059 = vunpack.c.l.b16 %v2908
        %v3060 = vunpack.c.l.b16 %v2909
        %v3061 = vunpack.c.l.b16 %v2910
        %v3062 = vunpack.c.l.b16 %v2911
        %v3063 = vunpack.c.l.b16 %v2912
        %v3064 = vunpack.c.l.b16 %v2913
        %v3065 = vunpack.c.l.b16 %v2914
        %v3066 = vunpack.c.l.b16 %v2915
        %v3067 = vunpack.c.l.b16 %v2916
        %v3068 = vunpack.c.l.b16 %v2917
        %v3069 = vunpack.c.l.b16 %v2918
        %v3070 = vunpack.c.l.b16 %v2919
        %v3071 = vunpack.c.l.b16 %v2920
        %v3072 = vunpack.c.l.b16 %v2921
        %v3073 = vunpack.c.l.b16 %v2922
        %v3074 = vunpack.c.l.b16 %v2923
        %v3075 = vunpack.c.l.b16 %v2924
        %v3076 = vunpack.c.l.b16 %v2925
        %v3077 = vunpack.c.l.b16 %v2926
        %v3078 = vunpack.c.l.b16 %v2927
        %v3079 = vunpack.c.l.b16 %v2928
        %v3080 = vunpack.c.l.b16 %v2929
        %v3081 = vunpack.c.l.b16 %v2930
        %v3082 = vunpack.c.l.b16 %v2931
        %v3083 = vunpack.c.l.b16 %v2932
        %v3084 = vunpack.c.l.b16 %v2933
        %v3085 = vunpack.c.l.b16 %v2934
        %v3086 = vunpack.c.l.b16 %v2935
        %v3087 = vunpack.c.l.b16 %v2936
        %v3088 = vunpack.c.l.b16 %v2937
        %v3089 = vunpack.c.l.b16 %v2938
        %v3090 = vunpack.c.l.b16 %v2939
        %v3091 = vunpack.c.l.b16 %v2940
        %v3092 = vunpack.c.l.b16 %v2941
        %v3093 = vunpack.c.l.b16 %v2942
        %v3094 = vunpack.c.l.b16 %v2943
        %v3095 = vunpack.c.l.b16 %v2944
        %v3096 = vunpack.c.l.b16 %v2945
        %v3097 = vunpack.c.l.b16 %v2946
        %v3098 = vunpack.c.l.b16 %v2947
        %v3099 = vunpack.c.l.b16 %v2948
        %v3100 = vunpack.c.l.b16 %v2949
        %v3101 = vunpack.c.l.b16 %v2950
        %v3102 = vunpack.c.l.b16 %v2951
        %v3103 = vunpack.c.l.b16 %v2952
        %v3104 = vunpack.c.l.b16 %v2953
        %v3105 = vunpack.c.l.b16 %v2954
        %v3106 = vunpack.c.l.b16 %v2955
        %v3107 = vunpack.c.l.b16 %v2956
        %v3108 = vunpack.c.l.b16 %v2957
        %v3109 = vunpack.c.l.b16 %v2958
        %v3110 = vunpack.c.l.b16 %v2959
        %v3111 = vunpack.c.l.b16 %v2960
        %v3112 = vunpack.c.l.b16 %v2961
        %v3113 = vunpack.c.l.b16 %v2962
        %v3114 = vunpack.c.l.b16 %v2963
        %v3115 = vunpack.c.l.b16 %v2964
        %v3116 = vpack.c.b16 %v3045, %v3044
        %v3117 = vpack.c.b16 %v3047, %v3046
        %v3118 = vpack.c.b16 %v3049, %v3048
        %v3119 = vpack.c.b16 %v3051, %v3050
        %v3120 = vpack.c.b16 %v3053, %v3052
        %v3121 = vpack.c.b16 %v3055, %v3054
        %v3122 = vpack.c.b16 %v3057, %v3056
        %v3123 = vpack.c.b16 %v3059, %v3058
        %v3124 = vpack.c.b16 %v3061, %v3060
        %v3125 = vpack.c.b16 %v3063, %v3062
        %v3126 = vpack.c.b16 %v3065, %v3064
        %v3127 = vpack.c.b16 %v3067, %v3066
        %v3128 = vpack.c.b16 %v3069, %v3068
        %v3129 = vpack.c.b16 %v3071, %v3070
        %v3130 = vpack.c.b16 %v3073, %v3072
        %v3131 = vpack.c.b16 %v3075, %v3074
        %v3132 = vpack.c.b16 %v3077, %v3076
        %v3133 = vpack.c.b16 %v3079, %v3078
        %v3134 = vpack.c.b16 %v3081, %v3080
        %v3135 = vpack.c.b16 %v3083, %v3082
        %v3136 = vpack.c.b16 %v3085, %v3084
        %v3137 = vpack.c.b16 %v3087, %v3086
        %v3138 = vpack.c.b16 %v3089, %v3088
        %v3139 = vpack.c.b16 %v3091, %v3090
        %v3140 = vpack.c.b16 %v3093, %v3092
        %v3141 = vpack.c.b16 %v3095, %v3094
        %v3142 = vpack.c.b16 %v3097, %v3096
        %v3143 = vpack.c.b16 %v3099, %v3098
        %v3144 = vpack.c.b16 %v3101, %v3100
        %v3145 = vpack.c.b16 %v3103, %v3102
        %v3146 = vpack.c.b16 %v3105, %v3104
        %v3147 = vpack.c.b16 %v3107, %v3106
        %v3148 = vpack.c.b16 %v3109, %v3108
        %v3149 = vpack.c.b16 %v3111, %v3110
        %v3150 = vpack.c.b16 %v3113, %v3112
        %v3151 = vpack.c.b16 %v3115, %v3114
        %v3189 = vsel %vm985, %v2807, 0
        %v3192 = vsel %vm985, %v2812, 0
        %v3195 = vsel %vm985, %v2817, 0
        %v3198 = vsel %vm985, %v2822, 0
        %v3201 = vsel %vm985, %v2827, 0
        %v3204 = vsel %vm985, %v2832, 0
        %v3207 = vsel %vm985, %v2837, 0
        %v3210 = vsel %vm985, %v2842, 0
        %v3213 = vsel %vm985, %v2847, 0
        %v3216 = vsel %vm985, %v2852, 0
        %v3219 = vsel %vm985, %v2857, 0
        %v3222 = vsel %vm985, %v2862, 0
        %v3225 = vsel %vm985, %v2867, 0
        %v3228 = vsel %vm985, %v2872, 0
        %v3231 = vsel %vm985, %v2877, 0
        %v3234 = vsel %vm985, %v2882, 0
        %v3237 = vsel %vm985, %v2887, 0
        %v3240 = vsel %vm985, %v2892, 0
        %3242 = vmatprep.subr.bf16.mxu0 0
        %3243 = vmatpush1.bf16.msra.mxu0 %v3116
        %3244 = vmatprep.subr.bf16.mxu0 0
        %3245 = vmatpush1.bf16.msra.mxu0 %v3117
        %3246 = vmatprep.subr.bf16.mxu0 0
        %3247 = vmatpush1.bf16.msra.mxu0 %v3118
        %3248 = vmatprep.subr.bf16.mxu0 0
        %3249 = vmatpush1.bf16.msra.mxu0 %v3119
        %3250 = vmatprep.subr.bf16.mxu0 0
        %3251 = vmatpush1.bf16.msra.mxu0 %v3120
        %3252 = vmatprep.subr.bf16.mxu0 0
        %3253 = vmatpush1.bf16.msra.mxu0 %v3121
        %3254 = vmatprep.subr.bf16.mxu0 0
        %3255 = vmatpush1.bf16.msra.mxu0 %v3122
        %3256 = vmatprep.subr.bf16.mxu0 0
        %3257 = vmatpush1.bf16.msra.mxu0 %v3123
        %3258 = vmatprep.subr.bf16.mxu0 0
        %3259 = vmatpush1.bf16.msra.mxu0 %v3124
        %3260 = vmatprep.subr.bf16.mxu0 0
        %3261 = vmatpush1.bf16.msra.mxu0 %v3125
        %3262 = vmatprep.subr.bf16.mxu0 0
        %3263 = vmatpush1.bf16.msra.mxu0 %v3126
        %3264 = vmatprep.subr.bf16.mxu0 0
        %3265 = vmatpush1.bf16.msra.mxu0 %v3127
        %3266 = vmatprep.subr.bf16.mxu0 0
        %3267 = vmatpush1.bf16.msra.mxu0 %v3128
        %3268 = vmatprep.subr.bf16.mxu0 0
        %3269 = vmatpush1.bf16.msra.mxu0 %v3129
        %3270 = vmatprep.subr.bf16.mxu0 0
        %3271 = vmatpush1.bf16.msra.mxu0 %v3130
        %3272 = vmatprep.subr.bf16.mxu0 0
        %3273 = vmatpush1.bf16.msra.mxu0 %v3131
        %3274 = vmatprep.mubr.bf16.mxu0 %v2804
        %3275 = vmatmul.mubr.bf16.gmra.mrb[0].mxu0 %v2803
        %v3276 = vpop.f32.mrb[0].mxu0
        %v3277 = vadd.f32 %v2970, %v3276
        %v3278 = vpop.f32.mrb[0].mxu0
        %v3279 = vpop.f32.mrb[0].mxu0
        %v3280 = vadd.f32 %v2970, %v3279
        %v3281 = vpop.f32.mrb[0].mxu0
        %3282 = vmatprep.mubr.bf16.mxu0 %v2809
        %3283 = vmatmul.mubr.bf16.gmra.mrb[0].mxu0 %v2808
        %v3284 = vpop.f32.mrb[0].mxu0
        %v3285 = vadd.f32 %v2970, %v3284
        %v3286 = vpop.f32.mrb[0].mxu0
        %v3287 = vpop.f32.mrb[0].mxu0
        %v3288 = vadd.f32 %v2970, %v3287
        %v3289 = vpop.f32.mrb[0].mxu0
        %3290 = vmatprep.mubr.bf16.mxu0 %v2814
        %3291 = vmatmul.mubr.bf16.gmra.mrb[0].mxu0 %v2813
        %v3292 = vpop.f32.mrb[0].mxu0
        %v3293 = vadd.f32 %v2970, %v3292
        %v3294 = vpop.f32.mrb[0].mxu0
        %v3295 = vpop.f32.mrb[0].mxu0
        %v3296 = vadd.f32 %v2970, %v3295
        %v3297 = vpop.f32.mrb[0].mxu0
        %3298 = vmatprep.mubr.bf16.mxu0 %v2819
        %3299 = vmatmul.mubr.bf16.gmra.mrb[0].mxu0 %v2818
        %v3300 = vpop.f32.mrb[0].mxu0
        %v3301 = vadd.f32 %v2970, %v3300
        %v3302 = vpop.f32.mrb[0].mxu0
        %v3303 = vpop.f32.mrb[0].mxu0
        %v3304 = vadd.f32 %v2970, %v3303
        %v3305 = vpop.f32.mrb[0].mxu0
        %3306 = vmatprep.mubr.bf16.mxu0 %v2824
        %3307 = vmatmul.mubr.bf16.gmra.mrb[0].mxu0 %v2823
        %v3308 = vpop.f32.mrb[0].mxu0
        %v3309 = vadd.f32 %v2970, %v3308
        %v3310 = vpop.f32.mrb[0].mxu0
        %v3311 = vpop.f32.mrb[0].mxu0
        %v3312 = vadd.f32 %v2970, %v3311
        %v3313 = vpop.f32.mrb[0].mxu0
        %3314 = vmatprep.mubr.bf16.mxu0 %v2829
        %3315 = vmatmul.mubr.bf16.gmra.mrb[0].mxu0 %v2828
        %v3316 = vpop.f32.mrb[0].mxu0
        %v3317 = vadd.f32 %v2970, %v3316
        %v3318 = vpop.f32.mrb[0].mxu0
        %v3319 = vpop.f32.mrb[0].mxu0
        %v3320 = vadd.f32 %v2970, %v3319
        %v3321 = vpop.f32.mrb[0].mxu0
        %3322 = vmatprep.mubr.bf16.mxu0 %v2834
        %3323 = vmatmul.mubr.bf16.gmra.mrb[0].mxu0 %v2833
        %v3324 = vpop.f32.mrb[0].mxu0
        %v3325 = vadd.f32 %v2970, %v3324
        %v3326 = vpop.f32.mrb[0].mxu0
        %v3327 = vpop.f32.mrb[0].mxu0
        %v3328 = vadd.f32 %v2970, %v3327
        %v3329 = vpop.f32.mrb[0].mxu0
        %3330 = vmatprep.mubr.bf16.mxu0 %v2839
        %3331 = vmatmul.mubr.bf16.gmra.mrb[0].mxu0 %v2838
        %v3332 = vpop.f32.mrb[0].mxu0
        %v3333 = vadd.f32 %v2970, %v3332
        %v3334 = vpop.f32.mrb[0].mxu0
        %v3335 = vpop.f32.mrb[0].mxu0
        %v3336 = vadd.f32 %v2970, %v3335
        %v3337 = vpop.f32.mrb[0].mxu0
        %3338 = vmatprep.mubr.bf16.mxu0 %v2844
        %3339 = vmatmul.mubr.bf16.gmra.mrb[0].mxu0 %v2843
        %v3340 = vpop.f32.mrb[0].mxu0
        %v3341 = vadd.f32 %v2970, %v3340
        %v3342 = vpop.f32.mrb[0].mxu0
        %v3343 = vpop.f32.mrb[0].mxu0
        %v3344 = vadd.f32 %v2970, %v3343
        %v3345 = vpop.f32.mrb[0].mxu0
        %3346 = vmatprep.mubr.bf16.mxu0 %v2849
        %3347 = vmatmul.mubr.bf16.gmra.mrb[0].mxu0 %v2848
        %v3348 = vpop.f32.mrb[0].mxu0
        %v3349 = vadd.f32 %v2970, %v3348
        %v3350 = vpop.f32.mrb[0].mxu0
        %v3351 = vpop.f32.mrb[0].mxu0
        %v3352 = vadd.f32 %v2970, %v3351
        %v3353 = vpop.f32.mrb[0].mxu0
        %3354 = vmatprep.mubr.bf16.mxu0 %v2854
        %3355 = vmatmul.mubr.bf16.gmra.mrb[0].mxu0 %v2853
        %v3356 = vpop.f32.mrb[0].mxu0
        %v3357 = vadd.f32 %v2970, %v3356
        %v3358 = vpop.f32.mrb[0].mxu0
        %v3359 = vpop.f32.mrb[0].mxu0
        %v3360 = vadd.f32 %v2970, %v3359
        %v3361 = vpop.f32.mrb[0].mxu0
        %3362 = vmatprep.mubr.bf16.mxu0 %v2859
        %3363 = vmatmul.mubr.bf16.gmra.mrb[0].mxu0 %v2858
        %v3364 = vpop.f32.mrb[0].mxu0
        %v3365 = vadd.f32 %v2970, %v3364
        %v3366 = vpop.f32.mrb[0].mxu0
        %v3367 = vpop.f32.mrb[0].mxu0
        %v3368 = vadd.f32 %v2970, %v3367
        %v3369 = vpop.f32.mrb[0].mxu0
        %3370 = vmatprep.mubr.bf16.mxu0 %v2864
        %3371 = vmatmul.mubr.bf16.gmra.mrb[0].mxu0 %v2863
        %v3372 = vpop.f32.mrb[0].mxu0
        %v3373 = vadd.f32 %v2970, %v3372
        %v3374 = vpop.f32.mrb[0].mxu0
        %v3375 = vpop.f32.mrb[0].mxu0
        %v3376 = vadd.f32 %v2970, %v3375
        %v3377 = vpop.f32.mrb[0].mxu0
        %3378 = vmatprep.mubr.bf16.mxu0 %v2869
        %3379 = vmatmul.mubr.bf16.gmra.mrb[0].mxu0 %v2868
        %v3380 = vpop.f32.mrb[0].mxu0
        %v3381 = vadd.f32 %v2970, %v3380
        %v3382 = vpop.f32.mrb[0].mxu0
        %v3383 = vpop.f32.mrb[0].mxu0
        %v3384 = vadd.f32 %v2970, %v3383
        %v3385 = vpop.f32.mrb[0].mxu0
        %3386 = vmatprep.mubr.bf16.mxu0 %v2874
        %3387 = vmatmul.mubr.bf16.gmra.mrb[0].mxu0 %v2873
        %v3388 = vpop.f32.mrb[0].mxu0
        %v3389 = vadd.f32 %v2970, %v3388
        %v3390 = vpop.f32.mrb[0].mxu0
        %v3391 = vpop.f32.mrb[0].mxu0
        %v3392 = vadd.f32 %v2970, %v3391
        %v3393 = vpop.f32.mrb[0].mxu0
        %3394 = vmatprep.mubr.bf16.mxu0 %v2879
        %3395 = vmatmul.mubr.bf16.gmra.mrb[0].mxu0 %v2878
        %v3396 = vpop.f32.mrb[0].mxu0
        %v3397 = vadd.f32 %v2970, %v3396
        %v3398 = vpop.f32.mrb[0].mxu0
        %v3399 = vpop.f32.mrb[0].mxu0
        %v3400 = vadd.f32 %v2970, %v3399
        %v3401 = vpop.f32.mrb[0].mxu0
        %3402 = vmatprep.mubr.bf16.mxu0 %v2884
        %3403 = vmatmul.mubr.bf16.gmra.mrb[0].mxu0 %v2883
        %v3404 = vpop.f32.mrb[0].mxu0
        %v3405 = vadd.f32 %v2970, %v3404
        %v3406 = vpop.f32.mrb[0].mxu0
        %v3407 = vpop.f32.mrb[0].mxu0
        %v3408 = vadd.f32 %v2970, %v3407
        %v3409 = vpop.f32.mrb[0].mxu0
        %3410 = vmatprep.mubr.bf16.mxu0 %v2889
        %3411 = vmatmul.mubr.bf16.gmra.mrb[0].mxu0 %v2888
        %v3412 = vpop.f32.mrb[0].mxu0
        %v3413 = vadd.f32 %v2970, %v3412
        %v3414 = vpop.f32.mrb[0].mxu0
        %v3415 = vpop.f32.mrb[0].mxu0
        %v3416 = vadd.f32 %v2970, %v3415
        %v3417 = vpop.f32.mrb[0].mxu0
        %3418 = vdwg.mxu0
        %3419 = vmatprep.subr.bf16.mxu0 0
        %3420 = vmatpush1.bf16.msra.mxu0 %v3132
        %3421 = vmatprep.subr.bf16.mxu0 0
        %3422 = vmatpush1.bf16.msra.mxu0 %v3133
        %3423 = vmatprep.subr.bf16.mxu0 0
        %3424 = vmatpush1.bf16.msra.mxu0 %v3134
        %3425 = vmatprep.subr.bf16.mxu0 0
        %3426 = vmatpush1.bf16.msra.mxu0 %v3135
        %3427 = vmatprep.subr.bf16.mxu0 0
        %3428 = vmatpush1.bf16.msra.mxu0 %v3136
        %3429 = vmatprep.subr.bf16.mxu0 0
        %3430 = vmatpush1.bf16.msra.mxu0 %v3137
        %3431 = vmatprep.subr.bf16.mxu0 0
        %3432 = vmatpush1.bf16.msra.mxu0 %v3138
        %3433 = vmatprep.subr.bf16.mxu0 0
        %3434 = vmatpush1.bf16.msra.mxu0 %v3139
        %3435 = vmatprep.subr.bf16.mxu0 0
        %3436 = vmatpush1.bf16.msra.mxu0 %v3140
        %3437 = vmatprep.subr.bf16.mxu0 0
        %3438 = vmatpush1.bf16.msra.mxu0 %v3141
        %3439 = vmatprep.subr.bf16.mxu0 0
        %3440 = vmatpush1.bf16.msra.mxu0 %v3142
        %3441 = vmatprep.subr.bf16.mxu0 0
        %3442 = vmatpush1.bf16.msra.mxu0 %v3143
        %3443 = vmatprep.subr.bf16.mxu0 0
        %3444 = vmatpush1.bf16.msra.mxu0 %v3144
        %3445 = vmatprep.subr.bf16.mxu0 0
        %3446 = vmatpush1.bf16.msra.mxu0 %v3145
        %3447 = vmatprep.subr.bf16.mxu0 0
        %3448 = vmatpush1.bf16.msra.mxu0 %v3146
        %3449 = vmatprep.subr.bf16.mxu0 0
        %3450 = vmatpush1.bf16.msra.mxu0 %v3147
        %3451 = vmatprep.mubr.bf16.mxu0 %v2806
        %3452 = vmatmul.mubr.bf16.gmra.mrb[0].mxu0 %v2805
        %v3453 = vpop.f32.mrb[0].mxu0
        %v3454 = vadd.f32 %v3277, %v3453
        %v3455 = vpop.f32.mrb[0].mxu0
        %v3456 = vpop.f32.mrb[0].mxu0
        %v3457 = vadd.f32 %v3280, %v3456
        %v3458 = vpop.f32.mrb[0].mxu0
        %3459 = vmatprep.mubr.bf16.mxu0 %v2811
        %3460 = vmatmul.mubr.bf16.gmra.mrb[0].mxu0 %v2810
        %v3461 = vpop.f32.mrb[0].mxu0
        %v3462 = vadd.f32 %v3285, %v3461
        %v3463 = vpop.f32.mrb[0].mxu0
        %v3464 = vpop.f32.mrb[0].mxu0
        %v3465 = vadd.f32 %v3288, %v3464
        %v3466 = vpop.f32.mrb[0].mxu0
        %3467 = vmatprep.mubr.bf16.mxu0 %v2816
        %3468 = vmatmul.mubr.bf16.gmra.mrb[0].mxu0 %v2815
        %v3469 = vpop.f32.mrb[0].mxu0
        %v3470 = vadd.f32 %v3293, %v3469
        %v3471 = vpop.f32.mrb[0].mxu0
        %v3472 = vpop.f32.mrb[0].mxu0
        %v3473 = vadd.f32 %v3296, %v3472
        %v3474 = vpop.f32.mrb[0].mxu0
        %3475 = vmatprep.mubr.bf16.mxu0 %v2821
        %3476 = vmatmul.mubr.bf16.gmra.mrb[0].mxu0 %v2820
        %v3477 = vpop.f32.mrb[0].mxu0
        %v3478 = vadd.f32 %v3301, %v3477
        %v3479 = vpop.f32.mrb[0].mxu0
        %v3480 = vpop.f32.mrb[0].mxu0
        %v3481 = vadd.f32 %v3304, %v3480
        %v3482 = vpop.f32.mrb[0].mxu0
        %3483 = vmatprep.mubr.bf16.mxu0 %v2826
        %3484 = vmatmul.mubr.bf16.gmra.mrb[0].mxu0 %v2825
        %v3485 = vpop.f32.mrb[0].mxu0
        %v3486 = vadd.f32 %v3309, %v3485
        %v3487 = vpop.f32.mrb[0].mxu0
        %v3488 = vpop.f32.mrb[0].mxu0
        %v3489 = vadd.f32 %v3312, %v3488
        %v3490 = vpop.f32.mrb[0].mxu0
        %3491 = vmatprep.mubr.bf16.mxu0 %v2831
        %3492 = vmatmul.mubr.bf16.gmra.mrb[0].mxu0 %v2830
        %v3493 = vpop.f32.mrb[0].mxu0
        %v3494 = vadd.f32 %v3317, %v3493
        %v3495 = vpop.f32.mrb[0].mxu0
        %v3496 = vpop.f32.mrb[0].mxu0
        %v3497 = vadd.f32 %v3320, %v3496
        %v3498 = vpop.f32.mrb[0].mxu0
        %3499 = vmatprep.mubr.bf16.mxu0 %v2836
        %3500 = vmatmul.mubr.bf16.gmra.mrb[0].mxu0 %v2835
        %v3501 = vpop.f32.mrb[0].mxu0
        %v3502 = vadd.f32 %v3325, %v3501
        %v3503 = vpop.f32.mrb[0].mxu0
        %v3504 = vpop.f32.mrb[0].mxu0
        %v3505 = vadd.f32 %v3328, %v3504
        %v3506 = vpop.f32.mrb[0].mxu0
        %3507 = vmatprep.mubr.bf16.mxu0 %v2841
        %3508 = vmatmul.mubr.bf16.gmra.mrb[0].mxu0 %v2840
        %v3509 = vpop.f32.mrb[0].mxu0
        %v3510 = vadd.f32 %v3333, %v3509
        %v3511 = vpop.f32.mrb[0].mxu0
        %v3512 = vpop.f32.mrb[0].mxu0
        %v3513 = vadd.f32 %v3336, %v3512
        %v3514 = vpop.f32.mrb[0].mxu0
        %3515 = vmatprep.mubr.bf16.mxu0 %v2846
        %3516 = vmatmul.mubr.bf16.gmra.mrb[0].mxu0 %v2845
        %v3517 = vpop.f32.mrb[0].mxu0
        %v3518 = vadd.f32 %v3341, %v3517
        %v3519 = vpop.f32.mrb[0].mxu0
        %v3520 = vpop.f32.mrb[0].mxu0
        %v3521 = vadd.f32 %v3344, %v3520
        %v3522 = vpop.f32.mrb[0].mxu0
        %3523 = vmatprep.mubr.bf16.mxu0 %v2851
        %3524 = vmatmul.mubr.bf16.gmra.mrb[0].mxu0 %v2850
        %v3525 = vpop.f32.mrb[0].mxu0
        %v3526 = vadd.f32 %v3349, %v3525
        %v3527 = vpop.f32.mrb[0].mxu0
        %v3528 = vpop.f32.mrb[0].mxu0
        %v3529 = vadd.f32 %v3352, %v3528
        %v3530 = vpop.f32.mrb[0].mxu0
        %3531 = vmatprep.mubr.bf16.mxu0 %v2856
        %3532 = vmatmul.mubr.bf16.gmra.mrb[0].mxu0 %v2855
        %v3533 = vpop.f32.mrb[0].mxu0
        %v3534 = vadd.f32 %v3357, %v3533
        %v3535 = vpop.f32.mrb[0].mxu0
        %v3536 = vpop.f32.mrb[0].mxu0
        %v3537 = vadd.f32 %v3360, %v3536
        %v3538 = vpop.f32.mrb[0].mxu0
        %3539 = vmatprep.mubr.bf16.mxu0 %v2861
        %3540 = vmatmul.mubr.bf16.gmra.mrb[0].mxu0 %v2860
        %v3541 = vpop.f32.mrb[0].mxu0
        %v3542 = vadd.f32 %v3365, %v3541
        %v3543 = vpop.f32.mrb[0].mxu0
        %v3544 = vpop.f32.mrb[0].mxu0
        %v3545 = vadd.f32 %v3368, %v3544
        %v3546 = vpop.f32.mrb[0].mxu0
        %3547 = vmatprep.mubr.bf16.mxu0 %v2866
        %3548 = vmatmul.mubr.bf16.gmra.mrb[0].mxu0 %v2865
        %v3549 = vpop.f32.mrb[0].mxu0
        %v3550 = vadd.f32 %v3373, %v3549
        %v3551 = vpop.f32.mrb[0].mxu0
        %v3552 = vpop.f32.mrb[0].mxu0
        %v3553 = vadd.f32 %v3376, %v3552
        %v3554 = vpop.f32.mrb[0].mxu0
        %3555 = vmatprep.mubr.bf16.mxu0 %v2871
        %3556 = vmatmul.mubr.bf16.gmra.mrb[0].mxu0 %v2870
        %v3557 = vpop.f32.mrb[0].mxu0
        %v3558 = vadd.f32 %v3381, %v3557
        %v3559 = vpop.f32.mrb[0].mxu0
        %v3560 = vpop.f32.mrb[0].mxu0
        %v3561 = vadd.f32 %v3384, %v3560
        %v3562 = vpop.f32.mrb[0].mxu0
        %3563 = vmatprep.mubr.bf16.mxu0 %v2876
        %3564 = vmatmul.mubr.bf16.gmra.mrb[0].mxu0 %v2875
        %v3565 = vpop.f32.mrb[0].mxu0
        %v3566 = vadd.f32 %v3389, %v3565
        %v3567 = vpop.f32.mrb[0].mxu0
        %v3568 = vpop.f32.mrb[0].mxu0
        %v3569 = vadd.f32 %v3392, %v3568
        %v3570 = vpop.f32.mrb[0].mxu0
        %3571 = vmatprep.mubr.bf16.mxu0 %v2881
        %3572 = vmatmul.mubr.bf16.gmra.mrb[0].mxu0 %v2880
        %v3573 = vpop.f32.mrb[0].mxu0
        %v3574 = vadd.f32 %v3397, %v3573
        %v3575 = vpop.f32.mrb[0].mxu0
        %v3576 = vpop.f32.mrb[0].mxu0
        %v3577 = vadd.f32 %v3400, %v3576
        %v3578 = vpop.f32.mrb[0].mxu0
        %3579 = vmatprep.mubr.bf16.mxu0 %v2886
        %3580 = vmatmul.mubr.bf16.gmra.mrb[0].mxu0 %v2885
        %v3581 = vpop.f32.mrb[0].mxu0
        %v3582 = vadd.f32 %v3405, %v3581
        %v3583 = vpop.f32.mrb[0].mxu0
        %v3584 = vpop.f32.mrb[0].mxu0
        %v3585 = vadd.f32 %v3408, %v3584
        %v3586 = vpop.f32.mrb[0].mxu0
        %3587 = vmatprep.mubr.bf16.mxu0 %v2891
        %3588 = vmatmul.mubr.bf16.gmra.mrb[0].mxu0 %v2890
        %v3589 = vpop.f32.mrb[0].mxu0
        %v3590 = vadd.f32 %v3413, %v3589
        %v3591 = vpop.f32.mrb[0].mxu0
        %v3592 = vpop.f32.mrb[0].mxu0
        %v3593 = vadd.f32 %v3416, %v3592
        %v3594 = vpop.f32.mrb[0].mxu0
        %3595 = vdwg.mxu0
        %3596 = vmatprep.subr.bf16.mxu0 0
        %3597 = vmatpush1.bf16.msra.mxu0 %v3148
        %3598 = vmatprep.subr.bf16.mxu0 0
        %3599 = vmatpush1.bf16.msra.mxu0 %v3149
        %3600 = vmatprep.subr.bf16.mxu0 0
        %3601 = vmatpush1.bf16.msra.mxu0 %v3150
        %3602 = vmatprep.subr.bf16.mxu0 0
        %3603 = vmatpush1.bf16.msra.mxu0 %v3151
        %3604 = vmatprep.subr.bf16.mxu0 0
        %3605 = vmatpush1.bf16.msra.mxu0 0
        %3606 = vmatprep.subr.bf16.mxu0 0
        %3607 = vmatpush1.bf16.msra.mxu0 0
        %3608 = vmatprep.subr.bf16.mxu0 0
        %3609 = vmatpush1.bf16.msra.mxu0 0
        %3610 = vmatprep.subr.bf16.mxu0 0
        %3611 = vmatpush1.bf16.msra.mxu0 0
        %3612 = vmatprep.subr.bf16.mxu0 0
        %3613 = vmatpush1.bf16.msra.mxu0 0
        %3614 = vmatprep.subr.bf16.mxu0 0
        %3615 = vmatpush1.bf16.msra.mxu0 0
        %3616 = vmatprep.subr.bf16.mxu0 0
        %3617 = vmatpush1.bf16.msra.mxu0 0
        %3618 = vmatprep.subr.bf16.mxu0 0
        %3619 = vmatpush1.bf16.msra.mxu0 0
        %3620 = vmatprep.subr.bf16.mxu0 0
        %3621 = vmatpush1.bf16.msra.mxu0 0
        %3622 = vmatprep.subr.bf16.mxu0 0
        %3623 = vmatpush1.bf16.msra.mxu0 0
        %3624 = vmatprep.subr.bf16.mxu0 0
        %3625 = vmatpush1.bf16.msra.mxu0 0
        %3626 = vmatprep.subr.bf16.mxu0 0
        %3627 = vmatpush1.bf16.msra.mxu0 0
        %3628 = vmatprep.mubr.bf16.mxu0 0
        %3629 = vmatmul.mubr.bf16.gmra.mrb[0].mxu0 %v3189
        %v3630 = vpop.f32.mrb[0].mxu0
        %v3631 = vadd.f32 %v3454, %v3630
        %v3632 = vpop.f32.mrb[0].mxu0
        %v3633 = vpop.f32.mrb[0].mxu0
        %v3634 = vadd.f32 %v3457, %v3633
        %v3635 = vpop.f32.mrb[0].mxu0
        %3636 = vmatprep.mubr.bf16.mxu0 0
        %3637 = vmatmul.mubr.bf16.gmra.mrb[0].mxu0 %v3192
        %v3638 = vpop.f32.mrb[0].mxu0
        %v3639 = vadd.f32 %v3462, %v3638
        %v3640 = vpop.f32.mrb[0].mxu0
        %v3641 = vpop.f32.mrb[0].mxu0
        %v3642 = vadd.f32 %v3465, %v3641
        %v3643 = vpop.f32.mrb[0].mxu0
        %3644 = vmatprep.mubr.bf16.mxu0 0
        %3645 = vmatmul.mubr.bf16.gmra.mrb[0].mxu0 %v3195
        %v3646 = vpop.f32.mrb[0].mxu0
        %v3647 = vadd.f32 %v3470, %v3646
        %v3648 = vpop.f32.mrb[0].mxu0
        %v3649 = vpop.f32.mrb[0].mxu0
        %v3650 = vadd.f32 %v3473, %v3649
        %v3651 = vpop.f32.mrb[0].mxu0
        %3652 = vmatprep.mubr.bf16.mxu0 0
        %3653 = vmatmul.mubr.bf16.gmra.mrb[0].mxu0 %v3198
        %v3654 = vpop.f32.mrb[0].mxu0
        %v3655 = vadd.f32 %v3478, %v3654
        %v3656 = vpop.f32.mrb[0].mxu0
        %v3657 = vpop.f32.mrb[0].mxu0
        %v3658 = vadd.f32 %v3481, %v3657
        %v3659 = vpop.f32.mrb[0].mxu0
        %3660 = vmatprep.mubr.bf16.mxu0 0
        %3661 = vmatmul.mubr.bf16.gmra.mrb[0].mxu0 %v3201
        %v3662 = vpop.f32.mrb[0].mxu0
        %v3663 = vadd.f32 %v3486, %v3662
        %v3664 = vpop.f32.mrb[0].mxu0
        %v3665 = vpop.f32.mrb[0].mxu0
        %v3666 = vadd.f32 %v3489, %v3665
        %v3667 = vpop.f32.mrb[0].mxu0
        %3668 = vmatprep.mubr.bf16.mxu0 0
        %3669 = vmatmul.mubr.bf16.gmra.mrb[0].mxu0 %v3204
        %v3670 = vpop.f32.mrb[0].mxu0
        %v3671 = vadd.f32 %v3494, %v3670
        %v3672 = vpop.f32.mrb[0].mxu0
        %v3673 = vpop.f32.mrb[0].mxu0
        %v3674 = vadd.f32 %v3497, %v3673
        %v3675 = vpop.f32.mrb[0].mxu0
        %3676 = vmatprep.mubr.bf16.mxu0 0
        %3677 = vmatmul.mubr.bf16.gmra.mrb[0].mxu0 %v3207
        %v3678 = vpop.f32.mrb[0].mxu0
        %v3679 = vadd.f32 %v3502, %v3678
        %v3680 = vpop.f32.mrb[0].mxu0
        %v3681 = vpop.f32.mrb[0].mxu0
        %v3682 = vadd.f32 %v3505, %v3681
        %v3683 = vpop.f32.mrb[0].mxu0
        %3684 = vmatprep.mubr.bf16.mxu0 0
        %3685 = vmatmul.mubr.bf16.gmra.mrb[0].mxu0 %v3210
        %v3686 = vpop.f32.mrb[0].mxu0
        %v3687 = vadd.f32 %v3510, %v3686
        %v3688 = vpop.f32.mrb[0].mxu0
        %v3689 = vpop.f32.mrb[0].mxu0
        %v3690 = vadd.f32 %v3513, %v3689
        %v3691 = vpop.f32.mrb[0].mxu0
        %3692 = vmatprep.mubr.bf16.mxu0 0
        %3693 = vmatmul.mubr.bf16.gmra.mrb[0].mxu0 %v3213
        %v3694 = vpop.f32.mrb[0].mxu0
        %v3695 = vadd.f32 %v3518, %v3694
        %v3696 = vpop.f32.mrb[0].mxu0
        %v3697 = vpop.f32.mrb[0].mxu0
        %v3698 = vadd.f32 %v3521, %v3697
        %v3699 = vpop.f32.mrb[0].mxu0
        %3700 = vmatprep.mubr.bf16.mxu0 0
        %3701 = vmatmul.mubr.bf16.gmra.mrb[0].mxu0 %v3216
        %v3702 = vpop.f32.mrb[0].mxu0
        %v3703 = vadd.f32 %v3526, %v3702
        %v3704 = vpop.f32.mrb[0].mxu0
        %v3705 = vpop.f32.mrb[0].mxu0
        %v3706 = vadd.f32 %v3529, %v3705
        %v3707 = vpop.f32.mrb[0].mxu0
        %3708 = vmatprep.mubr.bf16.mxu0 0
        %3709 = vmatmul.mubr.bf16.gmra.mrb[0].mxu0 %v3219
        %v3710 = vpop.f32.mrb[0].mxu0
        %v3711 = vadd.f32 %v3534, %v3710
        %v3712 = vpop.f32.mrb[0].mxu0
        %v3713 = vpop.f32.mrb[0].mxu0
        %v3714 = vadd.f32 %v3537, %v3713
        %v3715 = vpop.f32.mrb[0].mxu0
        %3716 = vmatprep.mubr.bf16.mxu0 0
        %3717 = vmatmul.mubr.bf16.gmra.mrb[0].mxu0 %v3222
        %v3718 = vpop.f32.mrb[0].mxu0
        %v3719 = vadd.f32 %v3542, %v3718
        %v3720 = vpop.f32.mrb[0].mxu0
        %v3721 = vpop.f32.mrb[0].mxu0
        %v3722 = vadd.f32 %v3545, %v3721
        %v3723 = vpop.f32.mrb[0].mxu0
        %3724 = vmatprep.mubr.bf16.mxu0 0
        %3725 = vmatmul.mubr.bf16.gmra.mrb[0].mxu0 %v3225
        %v3726 = vpop.f32.mrb[0].mxu0
        %v3727 = vadd.f32 %v3550, %v3726
        %v3728 = vpop.f32.mrb[0].mxu0
        %v3729 = vpop.f32.mrb[0].mxu0
        %v3730 = vadd.f32 %v3553, %v3729
        %v3731 = vpop.f32.mrb[0].mxu0
        %3732 = vmatprep.mubr.bf16.mxu0 0
        %3733 = vmatmul.mubr.bf16.gmra.mrb[0].mxu0 %v3228
        %v3734 = vpop.f32.mrb[0].mxu0
        %v3735 = vadd.f32 %v3558, %v3734
        %v3736 = vpop.f32.mrb[0].mxu0
        %v3737 = vpop.f32.mrb[0].mxu0
        %v3738 = vadd.f32 %v3561, %v3737
        %v3739 = vpop.f32.mrb[0].mxu0
        %3740 = vmatprep.mubr.bf16.mxu0 0
        %3741 = vmatmul.mubr.bf16.gmra.mrb[0].mxu0 %v3231
        %v3742 = vpop.f32.mrb[0].mxu0
        %v3743 = vadd.f32 %v3566, %v3742
        %v3744 = vpop.f32.mrb[0].mxu0
        %v3745 = vpop.f32.mrb[0].mxu0
        %v3746 = vadd.f32 %v3569, %v3745
        %v3747 = vpop.f32.mrb[0].mxu0
        %3748 = vmatprep.mubr.bf16.mxu0 0
        %3749 = vmatmul.mubr.bf16.gmra.mrb[0].mxu0 %v3234
        %v3750 = vpop.f32.mrb[0].mxu0
        %v3751 = vadd.f32 %v3574, %v3750
        %v3752 = vpop.f32.mrb[0].mxu0
        %v3753 = vpop.f32.mrb[0].mxu0
        %v3754 = vadd.f32 %v3577, %v3753
        %v3755 = vpop.f32.mrb[0].mxu0
        %3756 = vmatprep.mubr.bf16.mxu0 0
        %3757 = vmatmul.mubr.bf16.gmra.mrb[0].mxu0 %v3237
        %v3758 = vpop.f32.mrb[0].mxu0
        %v3759 = vadd.f32 %v3582, %v3758
        %v3760 = vpop.f32.mrb[0].mxu0
        %v3761 = vpop.f32.mrb[0].mxu0
        %v3762 = vadd.f32 %v3585, %v3761
        %v3763 = vpop.f32.mrb[0].mxu0
        %3764 = vmatprep.mubr.bf16.mxu0 0
        %3765 = vmatmul.mubr.bf16.gmra.mrb[0].mxu0 %v3240
        %v3766 = vpop.f32.mrb[0].mxu0
        %v3767 = vadd.f32 %v3590, %v3766
        %v3768 = vpop.f32.mrb[0].mxu0
        %v3769 = vpop.f32.mrb[0].mxu0
        %v3770 = vadd.f32 %v3593, %v3769
        %v3771 = vpop.f32.mrb[0].mxu0
        %3772 = vdwg.mxu0
        %vm3773 = vcmp.ge.f32.partialorder %v3631, 0.0
        %vm3774 = vcmp.ge.f32.partialorder %v3634, 0.0
        %vm3775 = vcmp.ge.f32.partialorder %v3639, 0.0
        %vm3776 = vcmp.ge.f32.partialorder %v3642, 0.0
        %vm3777 = vcmp.ge.f32.partialorder %v3647, 0.0
        %vm3778 = vcmp.ge.f32.partialorder %v3650, 0.0
        %vm3779 = vcmp.ge.f32.partialorder %v3655, 0.0
        %vm3780 = vcmp.ge.f32.partialorder %v3658, 0.0
        %vm3781 = vcmp.ge.f32.partialorder %v3663, 0.0
        %vm3782 = vcmp.ge.f32.partialorder %v3666, 0.0
        %vm3783 = vcmp.ge.f32.partialorder %v3671, 0.0
        %vm3784 = vcmp.ge.f32.partialorder %v3674, 0.0
        %vm3785 = vcmp.ge.f32.partialorder %v3679, 0.0
        %vm3786 = vcmp.ge.f32.partialorder %v3682, 0.0
        %vm3787 = vcmp.ge.f32.partialorder %v3687, 0.0
        %vm3788 = vcmp.ge.f32.partialorder %v3690, 0.0
        %vm3789 = vcmp.ge.f32.partialorder %v3695, 0.0
        %vm3790 = vcmp.ge.f32.partialorder %v3698, 0.0
        %vm3791 = vcmp.ge.f32.partialorder %v3703, 0.0
        %vm3792 = vcmp.ge.f32.partialorder %v3706, 0.0
        %vm3793 = vcmp.ge.f32.partialorder %v3711, 0.0
        %vm3794 = vcmp.ge.f32.partialorder %v3714, 0.0
        %vm3795 = vcmp.ge.f32.partialorder %v3719, 0.0
        %vm3796 = vcmp.ge.f32.partialorder %v3722, 0.0
        %vm3797 = vcmp.ge.f32.partialorder %v3727, 0.0
        %vm3798 = vcmp.ge.f32.partialorder %v3730, 0.0
        %vm3799 = vcmp.ge.f32.partialorder %v3735, 0.0
        %vm3800 = vcmp.ge.f32.partialorder %v3738, 0.0
        %vm3801 = vcmp.ge.f32.partialorder %v3743, 0.0
        %vm3802 = vcmp.ge.f32.partialorder %v3746, 0.0
        %vm3803 = vcmp.ge.f32.partialorder %v3751, 0.0
        %vm3804 = vcmp.ge.f32.partialorder %v3754, 0.0
        %vm3805 = vcmp.ge.f32.partialorder %v3759, 0.0
        %vm3806 = vcmp.ge.f32.partialorder %v3762, 0.0
        %vm3807 = vcmp.ge.f32.partialorder %v3767, 0.0
        %vm3808 = vcmp.ge.f32.partialorder %v3770, 0.0
        %v3809 = vmul.f32 %v3631, 0.2
        %v3810 = vmul.f32 %v3634, 0.2
        %v3811 = vmul.f32 %v3639, 0.2
        %v3812 = vmul.f32 %v3642, 0.2
        %v3813 = vmul.f32 %v3647, 0.2
        %v3814 = vmul.f32 %v3650, 0.2
        %v3815 = vmul.f32 %v3655, 0.2
        %v3816 = vmul.f32 %v3658, 0.2
        %v3817 = vmul.f32 %v3663, 0.2
        %v3818 = vmul.f32 %v3666, 0.2
        %v3819 = vmul.f32 %v3671, 0.2
        %v3820 = vmul.f32 %v3674, 0.2
        %v3821 = vmul.f32 %v3679, 0.2
        %v3822 = vmul.f32 %v3682, 0.2
        %v3823 = vmul.f32 %v3687, 0.2
        %v3824 = vmul.f32 %v3690, 0.2
        %v3825 = vmul.f32 %v3695, 0.2
        %v3826 = vmul.f32 %v3698, 0.2
        %v3827 = vmul.f32 %v3703, 0.2
        %v3828 = vmul.f32 %v3706, 0.2
        %v3829 = vmul.f32 %v3711, 0.2
        %v3830 = vmul.f32 %v3714, 0.2
        %v3831 = vmul.f32 %v3719, 0.2
        %v3832 = vmul.f32 %v3722, 0.2
        %v3833 = vmul.f32 %v3727, 0.2
        %v3834 = vmul.f32 %v3730, 0.2
        %v3835 = vmul.f32 %v3735, 0.2
        %v3836 = vmul.f32 %v3738, 0.2
        %v3837 = vmul.f32 %v3743, 0.2
        %v3838 = vmul.f32 %v3746, 0.2
        %v3839 = vmul.f32 %v3751, 0.2
        %v3840 = vmul.f32 %v3754, 0.2
        %v3841 = vmul.f32 %v3759, 0.2
        %v3842 = vmul.f32 %v3762, 0.2
        %v3843 = vmul.f32 %v3767, 0.2
        %v3844 = vmul.f32 %v3770, 0.2
        %v3845 = vsel %vm3773, %v3631, %v3809
        %v3846 = vsel %vm3774, %v3634, %v3810
        %v3847 = vsel %vm3775, %v3639, %v3811
        %v3848 = vsel %vm3776, %v3642, %v3812
        %v3849 = vsel %vm3777, %v3647, %v3813
        %v3850 = vsel %vm3778, %v3650, %v3814
        %v3851 = vsel %vm3779, %v3655, %v3815
        %v3852 = vsel %vm3780, %v3658, %v3816
        %v3853 = vsel %vm3781, %v3663, %v3817
        %v3854 = vsel %vm3782, %v3666, %v3818
        %v3855 = vsel %vm3783, %v3671, %v3819
        %v3856 = vsel %vm3784, %v3674, %v3820
        %v3857 = vsel %vm3785, %v3679, %v3821
        %v3858 = vsel %vm3786, %v3682, %v3822
        %v3859 = vsel %vm3787, %v3687, %v3823
        %v3860 = vsel %vm3788, %v3690, %v3824
        %v3861 = vsel %vm3789, %v3695, %v3825
        %v3862 = vsel %vm3790, %v3698, %v3826
        %v3863 = vsel %vm3791, %v3703, %v3827
        %v3864 = vsel %vm3792, %v3706, %v3828
        %v3865 = vsel %vm3793, %v3711, %v3829
        %v3866 = vsel %vm3794, %v3714, %v3830
        %v3867 = vsel %vm3795, %v3719, %v3831
        %v3868 = vsel %vm3796, %v3722, %v3832
        %v3869 = vsel %vm3797, %v3727, %v3833
        %v3870 = vsel %vm3798, %v3730, %v3834
        %v3871 = vsel %vm3799, %v3735, %v3835
        %v3872 = vsel %vm3800, %v3738, %v3836
        %v3873 = vsel %vm3801, %v3743, %v3837
        %v3874 = vsel %vm3802, %v3746, %v3838
        %v3875 = vsel %vm3803, %v3751, %v3839
        %v3876 = vsel %vm3804, %v3754, %v3840
        %v3877 = vsel %vm3805, %v3759, %v3841
        %v3878 = vsel %vm3806, %v3762, %v3842
        %v3879 = vsel %vm3807, %v3767, %v3843
        %v3880 = vsel %vm3808, %v3770, %v3844
        %3881 = vst.msk [vmem:[#allocation2] sm:$0xff] %vm985, %v3845
        %3882 = vst.msk [vmem:[#allocation2 + $0x8] sm:$0xff] %vm985, %v3846
        %3883 = vst.msk [vmem:[#allocation2 + $0x10] sm:$0xff] %vm985, %v3847
        %3884 = vst.msk [vmem:[#allocation2 + $0x18] sm:$0xff] %vm985, %v3848
        %3885 = vst.msk [vmem:[#allocation2 + $0x20] sm:$0xff] %vm985, %v3849
        %3886 = vst.msk [vmem:[#allocation2 + $0x28] sm:$0xff] %vm985, %v3850
        %3887 = vst.msk [vmem:[#allocation2 + $0x30] sm:$0xff] %vm985, %v3851
        %3888 = vst.msk [vmem:[#allocation2 + $0x38] sm:$0xff] %vm985, %v3852
        %3889 = vst.msk [vmem:[#allocation2 + $0x40] sm:$0xff] %vm985, %v3853
        %3890 = vst.msk [vmem:[#allocation2 + $0x48] sm:$0xff] %vm985, %v3854
        %3891 = vst.msk [vmem:[#allocation2 + $0x50] sm:$0xff] %vm985, %v3855
        %3892 = vst.msk [vmem:[#allocation2 + $0x58] sm:$0xff] %vm985, %v3856
        %3893 = vst.msk [vmem:[#allocation2 + $0x60] sm:$0xff] %vm985, %v3857
        %3894 = vst.msk [vmem:[#allocation2 + $0x68] sm:$0xff] %vm985, %v3858
        %3895 = vst.msk [vmem:[#allocation2 + $0x70] sm:$0xff] %vm985, %v3859
        %3896 = vst.msk [vmem:[#allocation2 + $0x78] sm:$0xff] %vm985, %v3860
        %3897 = vst.msk [vmem:[#allocation2 + $0x80] sm:$0xff] %vm985, %v3861
        %3898 = vst.msk [vmem:[#allocation2 + $0x88] sm:$0xff] %vm985, %v3862
        %3899 = vst.msk [vmem:[#allocation2 + $0x90] sm:$0xff] %vm985, %v3863
        %3900 = vst.msk [vmem:[#allocation2 + $0x98] sm:$0xff] %vm985, %v3864
        %3901 = vst.msk [vmem:[#allocation2 + $0xa0] sm:$0xff] %vm985, %v3865
        %3902 = vst.msk [vmem:[#allocation2 + $0xa8] sm:$0xff] %vm985, %v3866
        %3903 = vst.msk [vmem:[#allocation2 + $0xb0] sm:$0xff] %vm985, %v3867
        %3904 = vst.msk [vmem:[#allocation2 + $0xb8] sm:$0xff] %vm985, %v3868
        %3905 = vst.msk [vmem:[#allocation2 + $0xc0] sm:$0xff] %vm985, %v3869
        %3906 = vst.msk [vmem:[#allocation2 + $0xc8] sm:$0xff] %vm985, %v3870
        %3907 = vst.msk [vmem:[#allocation2 + $0xd0] sm:$0xff] %vm985, %v3871
        %3908 = vst.msk [vmem:[#allocation2 + $0xd8] sm:$0xff] %vm985, %v3872
        %3909 = vst.msk [vmem:[#allocation2 + $0xe0] sm:$0xff] %vm985, %v3873
        %3910 = vst.msk [vmem:[#allocation2 + $0xe8] sm:$0xff] %vm985, %v3874
        %3911 = vst.msk [vmem:[#allocation2 + $0xf0] sm:$0xff] %vm985, %v3875
        %3912 = vst.msk [vmem:[#allocation2 + $0xf8] sm:$0xff] %vm985, %v3876
        %3913 = vst.msk [vmem:[#allocation2 + $0x100] sm:$0xff] %vm985, %v3877
        %3914 = vst.msk [vmem:[#allocation2 + $0x108] sm:$0xff] %vm985, %v3878
        %3915 = vst.msk [vmem:[#allocation2 + $0x110] sm:$0xff] %vm985, %v3879
        %3916 = vst.msk [vmem:[#allocation2 + $0x118] sm:$0xff] %vm985, %v3880
        // Predicated region
        $region89: #{resblock_pallas.1} parent=51 // pred_check
          %p3917 = pneg %p1026
        $region90: #{resblock_pallas.1} parent=51 // pred_check_branch
          %3919 = sbr.rel (%p3917) target = $region92
        $region91: #{resblock_pallas.1} parent=51 // pred_region
          %3920 = vst.msk [vmem:[#allocation2] sm:$0xff] %vm985, 0.0
          %3921 = vst.msk [vmem:[#allocation2 + $0x8] sm:$0xff] %vm985, 0.0
          %3922 = vst.msk [vmem:[#allocation2 + $0x110] sm:$0xff] %vm985, 0.0
          %3923 = vst.msk [vmem:[#allocation2 + $0x118] sm:$0xff] %vm985, 0.0
        $region92: #{resblock_pallas.1} parent=51 // pred_fallthru
          _
        %v3924 = vld [vmem:[#allocation2] sm:$0xff]
        %v3925 = vld [vmem:[#allocation2 + $0x8] sm:$0xff]
        %v3926 = vld [vmem:[#allocation2 + $0x10] sm:$0xff]
        %v3927 = vld [vmem:[#allocation2 + $0x18] sm:$0xff]
        %v3928 = vld [vmem:[#allocation2 + $0x20] sm:$0xff]
        %v3929 = vld [vmem:[#allocation2 + $0x28] sm:$0xff]
        %v3930 = vld [vmem:[#allocation2 + $0x30] sm:$0xff]
        %v3931 = vld [vmem:[#allocation2 + $0x38] sm:$0xff]
        %v3932 = vld [vmem:[#allocation2 + $0x40] sm:$0xff]
        %v3933 = vld [vmem:[#allocation2 + $0x48] sm:$0xff]
        %v3934 = vld [vmem:[#allocation2 + $0x50] sm:$0xff]
        %v3935 = vld [vmem:[#allocation2 + $0x58] sm:$0xff]
        %v3936 = vld [vmem:[#allocation2 + $0x60] sm:$0xff]
        %v3937 = vld [vmem:[#allocation2 + $0x68] sm:$0xff]
        %v3938 = vld [vmem:[#allocation2 + $0x70] sm:$0xff]
        %v3939 = vld [vmem:[#allocation2 + $0x78] sm:$0xff]
        %v3940 = vld [vmem:[#allocation2 + $0x80] sm:$0xff]
        %v3941 = vld [vmem:[#allocation2 + $0x88] sm:$0xff]
        %v3942 = vld [vmem:[#allocation2 + $0x90] sm:$0xff]
        %v3943 = vld [vmem:[#allocation2 + $0x98] sm:$0xff]
        %v3944 = vld [vmem:[#allocation2 + $0xa0] sm:$0xff]
        %v3945 = vld [vmem:[#allocation2 + $0xa8] sm:$0xff]
        %v3946 = vld [vmem:[#allocation2 + $0xb0] sm:$0xff]
        %v3947 = vld [vmem:[#allocation2 + $0xb8] sm:$0xff]
        %v3948 = vld [vmem:[#allocation2 + $0xc0] sm:$0xff]
        %v3949 = vld [vmem:[#allocation2 + $0xc8] sm:$0xff]
        %v3950 = vld [vmem:[#allocation2 + $0xd0] sm:$0xff]
        %v3951 = vld [vmem:[#allocation2 + $0xd8] sm:$0xff]
        %v3952 = vld [vmem:[#allocation2 + $0xe0] sm:$0xff]
        %v3953 = vld [vmem:[#allocation2 + $0xe8] sm:$0xff]
        %v3954 = vld [vmem:[#allocation2 + $0xf0] sm:$0xff]
        %v3955 = vld [vmem:[#allocation2 + $0xf8] sm:$0xff]
        %v3956 = vrot.slane %v3924, 7
        %v3957 = vrot.slane %v3925, 7
        %v3958 = vrot.slane %v3926, 7
        %v3959 = vrot.slane %v3927, 7
        %v3960 = vrot.slane %v3928, 7
        %v3961 = vrot.slane %v3929, 7
        %v3962 = vrot.slane %v3930, 7
        %v3963 = vrot.slane %v3931, 7
        %v3964 = vrot.slane %v3932, 7
        %v3965 = vrot.slane %v3933, 7
        %v3966 = vrot.slane %v3934, 7
        %v3967 = vrot.slane %v3935, 7
        %v3968 = vrot.slane %v3936, 7
        %v3969 = vrot.slane %v3937, 7
        %v3970 = vrot.slane %v3938, 7
        %v3971 = vrot.slane %v3939, 7
        %v3972 = vrot.slane %v3940, 7
        %v3973 = vrot.slane %v3941, 7
        %v3974 = vrot.slane %v3942, 7
        %v3975 = vrot.slane %v3943, 7
        %v3976 = vrot.slane %v3944, 7
        %v3977 = vrot.slane %v3945, 7
        %v3978 = vrot.slane %v3946, 7
        %v3979 = vrot.slane %v3947, 7
        %v3980 = vrot.slane %v3948, 7
        %v3981 = vrot.slane %v3949, 7
        %v3982 = vrot.slane %v3950, 7
        %v3983 = vrot.slane %v3951, 7
        %v3984 = vrot.slane %v3952, 7
        %v3985 = vrot.slane %v3953, 7
        %v3986 = vrot.slane %v3954, 7
        %v3987 = vrot.slane %v3955, 7
        %v3988 = vsel %vm1651, %v3986, %v3987
        %v3989 = vsel %vm1651, %v3985, %v3986
        %v3990 = vsel %vm1651, %v3984, %v3985
        %v3991 = vsel %vm1651, %v3983, %v3984
        %v3992 = vsel %vm1651, %v3982, %v3983
        %v3993 = vsel %vm1651, %v3981, %v3982
        %v3994 = vsel %vm1651, %v3980, %v3981
        %v3995 = vsel %vm1651, %v3979, %v3980
        %v3996 = vsel %vm1651, %v3978, %v3979
        %v3997 = vsel %vm1651, %v3977, %v3978
        %v3998 = vsel %vm1651, %v3976, %v3977
        %v3999 = vsel %vm1651, %v3975, %v3976
        %v4000 = vsel %vm1651, %v3974, %v3975
        %v4001 = vsel %vm1651, %v3973, %v3974
        %v4002 = vsel %vm1651, %v3972, %v3973
        %v4003 = vsel %vm1651, %v3971, %v3972
        %v4004 = vsel %vm1651, %v3970, %v3971
        %v4005 = vsel %vm1651, %v3969, %v3970
        %v4006 = vsel %vm1651, %v3968, %v3969
        %v4007 = vsel %vm1651, %v3967, %v3968
        %v4008 = vsel %vm1651, %v3966, %v3967
        %v4009 = vsel %vm1651, %v3965, %v3966
        %v4010 = vsel %vm1651, %v3964, %v3965
        %v4011 = vsel %vm1651, %v3963, %v3964
        %v4012 = vsel %vm1651, %v3962, %v3963
        %v4013 = vsel %vm1651, %v3961, %v3962
        %v4014 = vsel %vm1651, %v3960, %v3961
        %v4015 = vsel %vm1651, %v3959, %v3960
        %v4016 = vsel %vm1651, %v3958, %v3959
        %v4017 = vsel %vm1651, %v3957, %v3958
        %v4018 = vsel %vm1651, %v3956, %v3957
        %v4019 = vsel %vm1651, %v3987, %v3956
        %v4020 = vsel %vm1724, %v4019, 0.0
        %v4021 = vsel %vm1725, %v4018, 0.0
        %v4022 = vsel %vm1726, %v4017, 0.0
        %v4023 = vsel %vm1727, %v4016, 0.0
        %v4024 = vsel %vm1728, %v4015, 0.0
        %v4025 = vsel %vm1729, %v4014, 0.0
        %v4026 = vsel %vm1730, %v4013, 0.0
        %v4027 = vsel %vm1731, %v4012, 0.0
        %v4028 = vsel %vm1732, %v4011, 0.0
        %v4029 = vsel %vm1733, %v4010, 0.0
        %v4030 = vsel %vm1734, %v4009, 0.0
        %v4031 = vsel %vm1735, %v4008, 0.0
        %v4032 = vsel %vm1736, %v4007, 0.0
        %v4033 = vsel %vm1737, %v4006, 0.0
        %v4034 = vsel %vm1738, %v4005, 0.0
        %v4035 = vsel %vm1739, %v4004, 0.0
        %v4036 = vsel %vm1740, %v4003, 0.0
        %v4037 = vsel %vm1741, %v4002, 0.0
        %v4038 = vsel %vm1742, %v4001, 0.0
        %v4039 = vsel %vm1743, %v4000, 0.0
        %v4040 = vsel %vm1744, %v3999, 0.0
        %v4041 = vsel %vm1745, %v3998, 0.0
        %v4042 = vsel %vm1746, %v3997, 0.0
        %v4043 = vsel %vm1747, %v3996, 0.0
        %v4044 = vsel %vm1748, %v3995, 0.0
        %v4045 = vsel %vm1749, %v3994, 0.0
        %v4046 = vsel %vm1750, %v3993, 0.0
        %v4047 = vsel %vm1751, %v3992, 0.0
        %v4048 = vsel %vm1752, %v3991, 0.0
        %v4049 = vsel %vm1753, %v3990, 0.0
        %v4050 = vsel %vm1754, %v3989, 0.0
        %v4051 = vsel %vm1755, %v3988, 0.0
        %v4052 = vpack.c.bf16 %v4021, %v4020
        %v4053 = vpack.c.bf16 %v4023, %v4022
        %v4054 = vpack.c.bf16 %v4025, %v4024
        %v4055 = vpack.c.bf16 %v4027, %v4026
        %v4056 = vpack.c.bf16 %v4029, %v4028
        %v4057 = vpack.c.bf16 %v4031, %v4030
        %v4058 = vpack.c.bf16 %v4033, %v4032
        %v4059 = vpack.c.bf16 %v4035, %v4034
        %v4060 = vpack.c.bf16 %v4037, %v4036
        %v4061 = vpack.c.bf16 %v4039, %v4038
        %v4062 = vpack.c.bf16 %v4041, %v4040
        %v4063 = vpack.c.bf16 %v4043, %v4042
        %v4064 = vpack.c.bf16 %v4045, %v4044
        %v4065 = vpack.c.bf16 %v4047, %v4046
        %v4066 = vpack.c.bf16 %v4049, %v4048
        %v4067 = vpack.c.bf16 %v4051, %v4050
        %v4068 = vpack.c.bf16 %v3925, %v3924
        %v4069 = vpack.c.bf16 %v3927, %v3926
        %v4070 = vpack.c.bf16 %v3929, %v3928
        %v4071 = vpack.c.bf16 %v3931, %v3930
        %v4072 = vpack.c.bf16 %v3933, %v3932
        %v4073 = vpack.c.bf16 %v3935, %v3934
        %v4074 = vpack.c.bf16 %v3937, %v3936
        %v4075 = vpack.c.bf16 %v3939, %v3938
        %v4076 = vpack.c.bf16 %v3941, %v3940
        %v4077 = vpack.c.bf16 %v3943, %v3942
        %v4078 = vpack.c.bf16 %v3945, %v3944
        %v4079 = vpack.c.bf16 %v3947, %v3946
        %v4080 = vpack.c.bf16 %v3949, %v3948
        %v4081 = vpack.c.bf16 %v3951, %v3950
        %v4082 = vpack.c.bf16 %v3953, %v3952
        %v4083 = vpack.c.bf16 %v3955, %v3954
        %v4084 = vrot.slane %v3924, 1
        %v4085 = vrot.slane %v3925, 1
        %v4086 = vrot.slane %v3926, 1
        %v4087 = vrot.slane %v3927, 1
        %v4088 = vrot.slane %v3928, 1
        %v4089 = vrot.slane %v3929, 1
        %v4090 = vrot.slane %v3930, 1
        %v4091 = vrot.slane %v3931, 1
        %v4092 = vrot.slane %v3932, 1
        %v4093 = vrot.slane %v3933, 1
        %v4094 = vrot.slane %v3934, 1
        %v4095 = vrot.slane %v3935, 1
        %v4096 = vrot.slane %v3936, 1
        %v4097 = vrot.slane %v3937, 1
        %v4098 = vrot.slane %v3938, 1
        %v4099 = vrot.slane %v3939, 1
        %v4100 = vrot.slane %v3940, 1
        %v4101 = vrot.slane %v3941, 1
        %v4102 = vrot.slane %v3942, 1
        %v4103 = vrot.slane %v3943, 1
        %v4104 = vrot.slane %v3944, 1
        %v4105 = vrot.slane %v3945, 1
        %v4106 = vrot.slane %v3946, 1
        %v4107 = vrot.slane %v3947, 1
        %v4108 = vrot.slane %v3948, 1
        %v4109 = vrot.slane %v3949, 1
        %v4110 = vrot.slane %v3950, 1
        %v4111 = vrot.slane %v3951, 1
        %v4112 = vrot.slane %v3952, 1
        %v4113 = vrot.slane %v3953, 1
        %v4114 = vrot.slane %v3954, 1
        %v4115 = vrot.slane %v3955, 1
        %v4116 = vsel %vm1868, %v4114, %v4115
        %v4117 = vsel %vm1868, %v4113, %v4114
        %v4118 = vsel %vm1868, %v4112, %v4113
        %v4119 = vsel %vm1868, %v4111, %v4112
        %v4120 = vsel %vm1868, %v4110, %v4111
        %v4121 = vsel %vm1868, %v4109, %v4110
        %v4122 = vsel %vm1868, %v4108, %v4109
        %v4123 = vsel %vm1868, %v4107, %v4108
        %v4124 = vsel %vm1868, %v4106, %v4107
        %v4125 = vsel %vm1868, %v4105, %v4106
        %v4126 = vsel %vm1868, %v4104, %v4105
        %v4127 = vsel %vm1868, %v4103, %v4104
        %v4128 = vsel %vm1868, %v4102, %v4103
        %v4129 = vsel %vm1868, %v4101, %v4102
        %v4130 = vsel %vm1868, %v4100, %v4101
        %v4131 = vsel %vm1868, %v4099, %v4100
        %v4132 = vsel %vm1868, %v4098, %v4099
        %v4133 = vsel %vm1868, %v4097, %v4098
        %v4134 = vsel %vm1868, %v4096, %v4097
        %v4135 = vsel %vm1868, %v4095, %v4096
        %v4136 = vsel %vm1868, %v4094, %v4095
        %v4137 = vsel %vm1868, %v4093, %v4094
        %v4138 = vsel %vm1868, %v4092, %v4093
        %v4139 = vsel %vm1868, %v4091, %v4092
        %v4140 = vsel %vm1868, %v4090, %v4091
        %v4141 = vsel %vm1868, %v4089, %v4090
        %v4142 = vsel %vm1868, %v4088, %v4089
        %v4143 = vsel %vm1868, %v4087, %v4088
        %v4144 = vsel %vm1868, %v4086, %v4087
        %v4145 = vsel %vm1868, %v4085, %v4086
        %v4146 = vsel %vm1868, %v4084, %v4085
        %v4147 = vsel %vm1868, %v4115, %v4084
        %v4148 = vsel %vm1941, %v4146, 0.0
        %v4149 = vsel %vm1942, %v4145, 0.0
        %v4150 = vsel %vm1943, %v4144, 0.0
        %v4151 = vsel %vm1944, %v4143, 0.0
        %v4152 = vsel %vm1945, %v4142, 0.0
        %v4153 = vsel %vm1946, %v4141, 0.0
        %v4154 = vsel %vm1947, %v4140, 0.0
        %v4155 = vsel %vm1948, %v4139, 0.0
        %v4156 = vsel %vm1949, %v4138, 0.0
        %v4157 = vsel %vm1950, %v4137, 0.0
        %v4158 = vsel %vm1951, %v4136, 0.0
        %v4159 = vsel %vm1952, %v4135, 0.0
        %v4160 = vsel %vm1953, %v4134, 0.0
        %v4161 = vsel %vm1954, %v4133, 0.0
        %v4162 = vsel %vm1955, %v4132, 0.0
        %v4163 = vsel %vm1956, %v4131, 0.0
        %v4164 = vsel %vm1957, %v4130, 0.0
        %v4165 = vsel %vm1958, %v4129, 0.0
        %v4166 = vsel %vm1959, %v4128, 0.0
        %v4167 = vsel %vm1960, %v4127, 0.0
        %v4168 = vsel %vm1961, %v4126, 0.0
        %v4169 = vsel %vm1962, %v4125, 0.0
        %v4170 = vsel %vm1963, %v4124, 0.0
        %v4171 = vsel %vm1964, %v4123, 0.0
        %v4172 = vsel %vm1965, %v4122, 0.0
        %v4173 = vsel %vm1966, %v4121, 0.0
        %v4174 = vsel %vm1967, %v4120, 0.0
        %v4175 = vsel %vm1968, %v4119, 0.0
        %v4176 = vsel %vm1969, %v4118, 0.0
        %v4177 = vsel %vm1970, %v4117, 0.0
        %v4178 = vsel %vm1971, %v4116, 0.0
        %v4179 = vsel %vm1972, %v4147, 0.0
        %v4180 = vpack.c.bf16 %v4149, %v4148
        %v4181 = vpack.c.bf16 %v4151, %v4150
        %v4182 = vpack.c.bf16 %v4153, %v4152
        %v4183 = vpack.c.bf16 %v4155, %v4154
        %v4184 = vpack.c.bf16 %v4157, %v4156
        %v4185 = vpack.c.bf16 %v4159, %v4158
        %v4186 = vpack.c.bf16 %v4161, %v4160
        %v4187 = vpack.c.bf16 %v4163, %v4162
        %v4188 = vpack.c.bf16 %v4165, %v4164
        %v4189 = vpack.c.bf16 %v4167, %v4166
        %v4190 = vpack.c.bf16 %v4169, %v4168
        %v4191 = vpack.c.bf16 %v4171, %v4170
        %v4192 = vpack.c.bf16 %v4173, %v4172
        %v4193 = vpack.c.bf16 %v4175, %v4174
        %v4194 = vpack.c.bf16 %v4177, %v4176
        %v4195 = vpack.c.bf16 %v4179, %v4178
        %v4196 = vld [vmem:[#allocation2 + $0x100] sm:$0xff]
        %v4197 = vld [vmem:[#allocation2 + $0x108] sm:$0xff]
        %v4198 = vrot.slane %v4196, 7
        %v4199 = vrot.slane %v4197, 7
        %v4200 = vsel %vm1651, %v4198, %v4199
        %v4201 = vsel %vm1651, %v3987, %v4198
        %v4202 = vsel %vm1651, %v4199, %v3958
        %v4203 = vsel %vm1724, %v4202, 0.0
        %v4204 = vsel %vm1725, %v4016, 0.0
        %v4205 = vsel %vm1726, %v4015, 0.0
        %v4206 = vsel %vm1727, %v4014, 0.0
        %v4207 = vsel %vm1728, %v4013, 0.0
        %v4208 = vsel %vm1729, %v4012, 0.0
        %v4209 = vsel %vm1730, %v4011, 0.0
        %v4210 = vsel %vm1731, %v4010, 0.0
        %v4211 = vsel %vm1732, %v4009, 0.0
        %v4212 = vsel %vm1733, %v4008, 0.0
        %v4213 = vsel %vm1734, %v4007, 0.0
        %v4214 = vsel %vm1735, %v4006, 0.0
        %v4215 = vsel %vm1736, %v4005, 0.0
        %v4216 = vsel %vm1737, %v4004, 0.0
        %v4217 = vsel %vm1738, %v4003, 0.0
        %v4218 = vsel %vm1739, %v4002, 0.0
        %v4219 = vsel %vm1740, %v4001, 0.0
        %v4220 = vsel %vm1741, %v4000, 0.0
        %v4221 = vsel %vm1742, %v3999, 0.0
        %v4222 = vsel %vm1743, %v3998, 0.0
        %v4223 = vsel %vm1744, %v3997, 0.0
        %v4224 = vsel %vm1745, %v3996, 0.0
        %v4225 = vsel %vm1746, %v3995, 0.0
        %v4226 = vsel %vm1747, %v3994, 0.0
        %v4227 = vsel %vm1748, %v3993, 0.0
        %v4228 = vsel %vm1749, %v3992, 0.0
        %v4229 = vsel %vm1750, %v3991, 0.0
        %v4230 = vsel %vm1751, %v3990, 0.0
        %v4231 = vsel %vm1752, %v3989, 0.0
        %v4232 = vsel %vm1753, %v3988, 0.0
        %v4233 = vsel %vm1754, %v4201, 0.0
        %v4234 = vsel %vm1755, %v4200, 0.0
        %v4235 = vpack.c.bf16 %v4204, %v4203
        %v4236 = vpack.c.bf16 %v4206, %v4205
        %v4237 = vpack.c.bf16 %v4208, %v4207
        %v4238 = vpack.c.bf16 %v4210, %v4209
        %v4239 = vpack.c.bf16 %v4212, %v4211
        %v4240 = vpack.c.bf16 %v4214, %v4213
        %v4241 = vpack.c.bf16 %v4216, %v4215
        %v4242 = vpack.c.bf16 %v4218, %v4217
        %v4243 = vpack.c.bf16 %v4220, %v4219
        %v4244 = vpack.c.bf16 %v4222, %v4221
        %v4245 = vpack.c.bf16 %v4224, %v4223
        %v4246 = vpack.c.bf16 %v4226, %v4225
        %v4247 = vpack.c.bf16 %v4228, %v4227
        %v4248 = vpack.c.bf16 %v4230, %v4229
        %v4249 = vpack.c.bf16 %v4232, %v4231
        %v4250 = vpack.c.bf16 %v4234, %v4233
        %v4251 = vpack.c.bf16 %v4197, %v4196
        %v4252 = vrot.slane %v4196, 1
        %v4253 = vrot.slane %v4197, 1
        %v4254 = vsel %vm1868, %v4252, %v4253
        %v4255 = vsel %vm1868, %v4115, %v4252
        %v4256 = vsel %vm1868, %v4253, %v4086
        %v4257 = vsel %vm1941, %v4144, 0.0
        %v4258 = vsel %vm1942, %v4143, 0.0
        %v4259 = vsel %vm1943, %v4142, 0.0
        %v4260 = vsel %vm1944, %v4141, 0.0
        %v4261 = vsel %vm1945, %v4140, 0.0
        %v4262 = vsel %vm1946, %v4139, 0.0
        %v4263 = vsel %vm1947, %v4138, 0.0
        %v4264 = vsel %vm1948, %v4137, 0.0
        %v4265 = vsel %vm1949, %v4136, 0.0
        %v4266 = vsel %vm1950, %v4135, 0.0
        %v4267 = vsel %vm1951, %v4134, 0.0
        %v4268 = vsel %vm1952, %v4133, 0.0
        %v4269 = vsel %vm1953, %v4132, 0.0
        %v4270 = vsel %vm1954, %v4131, 0.0
        %v4271 = vsel %vm1955, %v4130, 0.0
        %v4272 = vsel %vm1956, %v4129, 0.0
        %v4273 = vsel %vm1957, %v4128, 0.0
        %v4274 = vsel %vm1958, %v4127, 0.0
        %v4275 = vsel %vm1959, %v4126, 0.0
        %v4276 = vsel %vm1960, %v4125, 0.0
        %v4277 = vsel %vm1961, %v4124, 0.0
        %v4278 = vsel %vm1962, %v4123, 0.0
        %v4279 = vsel %vm1963, %v4122, 0.0
        %v4280 = vsel %vm1964, %v4121, 0.0
        %v4281 = vsel %vm1965, %v4120, 0.0
        %v4282 = vsel %vm1966, %v4119, 0.0
        %v4283 = vsel %vm1967, %v4118, 0.0
        %v4284 = vsel %vm1968, %v4117, 0.0
        %v4285 = vsel %vm1969, %v4116, 0.0
        %v4286 = vsel %vm1970, %v4255, 0.0
        %v4287 = vsel %vm1971, %v4254, 0.0
        %v4288 = vsel %vm1972, %v4256, 0.0
        %v4289 = vpack.c.bf16 %v4258, %v4257
        %v4290 = vpack.c.bf16 %v4260, %v4259
        %v4291 = vpack.c.bf16 %v4262, %v4261
        %v4292 = vpack.c.bf16 %v4264, %v4263
        %v4293 = vpack.c.bf16 %v4266, %v4265
        %v4294 = vpack.c.bf16 %v4268, %v4267
        %v4295 = vpack.c.bf16 %v4270, %v4269
        %v4296 = vpack.c.bf16 %v4272, %v4271
        %v4297 = vpack.c.bf16 %v4274, %v4273
        %v4298 = vpack.c.bf16 %v4276, %v4275
        %v4299 = vpack.c.bf16 %v4278, %v4277
        %v4300 = vpack.c.bf16 %v4280, %v4279
        %v4301 = vpack.c.bf16 %v4282, %v4281
        %v4302 = vpack.c.bf16 %v4284, %v4283
        %v4303 = vpack.c.bf16 %v4286, %v4285
        %v4304 = vpack.c.bf16 %v4288, %v4287
        %v4305 = vld [vmem:[#allocation2 + $0x110] sm:$0xff]
        %v4306 = vld [vmem:[#allocation2 + $0x118] sm:$0xff]
        %v4307 = vrot.slane %v4305, 7
        %v4308 = vrot.slane %v4306, 7
        %v4309 = vsel %vm1651, %v4307, %v4308
        %v4310 = vsel %vm1651, %v4199, %v4307
        %v4311 = vsel %vm1651, %v4308, %v3960
        %v4312 = vsel %vm1724, %v4311, 0.0
        %v4313 = vsel %vm1725, %v4014, 0.0
        %v4314 = vsel %vm1726, %v4013, 0.0
        %v4315 = vsel %vm1727, %v4012, 0.0
        %v4316 = vsel %vm1728, %v4011, 0.0
        %v4317 = vsel %vm1729, %v4010, 0.0
        %v4318 = vsel %vm1730, %v4009, 0.0
        %v4319 = vsel %vm1731, %v4008, 0.0
        %v4320 = vsel %vm1732, %v4007, 0.0
        %v4321 = vsel %vm1733, %v4006, 0.0
        %v4322 = vsel %vm1734, %v4005, 0.0
        %v4323 = vsel %vm1735, %v4004, 0.0
        %v4324 = vsel %vm1736, %v4003, 0.0
        %v4325 = vsel %vm1737, %v4002, 0.0
        %v4326 = vsel %vm1738, %v4001, 0.0
        %v4327 = vsel %vm1739, %v4000, 0.0
        %v4328 = vsel %vm1740, %v3999, 0.0
        %v4329 = vsel %vm1741, %v3998, 0.0
        %v4330 = vsel %vm1742, %v3997, 0.0
        %v4331 = vsel %vm1743, %v3996, 0.0
        %v4332 = vsel %vm1744, %v3995, 0.0
        %v4333 = vsel %vm1745, %v3994, 0.0
        %v4334 = vsel %vm1746, %v3993, 0.0
        %v4335 = vsel %vm1747, %v3992, 0.0
        %v4336 = vsel %vm1748, %v3991, 0.0
        %v4337 = vsel %vm1749, %v3990, 0.0
        %v4338 = vsel %vm1750, %v3989, 0.0
        %v4339 = vsel %vm1751, %v3988, 0.0
        %v4340 = vsel %vm1752, %v4201, 0.0
        %v4341 = vsel %vm1753, %v4200, 0.0
        %v4342 = vsel %vm1754, %v4310, 0.0
        %v4343 = vsel %vm1755, %v4309, 0.0
        %v4344 = vpack.c.bf16 %v4313, %v4312
        %v4345 = vpack.c.bf16 %v4315, %v4314
        %v4346 = vpack.c.bf16 %v4317, %v4316
        %v4347 = vpack.c.bf16 %v4319, %v4318
        %v4348 = vpack.c.bf16 %v4321, %v4320
        %v4349 = vpack.c.bf16 %v4323, %v4322
        %v4350 = vpack.c.bf16 %v4325, %v4324
        %v4351 = vpack.c.bf16 %v4327, %v4326
        %v4352 = vpack.c.bf16 %v4329, %v4328
        %v4353 = vpack.c.bf16 %v4331, %v4330
        %v4354 = vpack.c.bf16 %v4333, %v4332
        %v4355 = vpack.c.bf16 %v4335, %v4334
        %v4356 = vpack.c.bf16 %v4337, %v4336
        %v4357 = vpack.c.bf16 %v4339, %v4338
        %v4358 = vpack.c.bf16 %v4341, %v4340
        %v4359 = vpack.c.bf16 %v4343, %v4342
        %v4360 = vpack.c.bf16 %v4306, %v4305
        %v4361 = vrot.slane %v4305, 1
        %v4362 = vrot.slane %v4306, 1
        %v4363 = vsel %vm1868, %v4361, %v4362
        %v4364 = vsel %vm1868, %v4253, %v4361
        %v4365 = vsel %vm1868, %v4362, %v4088
        %v4366 = vsel %vm1941, %v4142, 0.0
        %v4367 = vsel %vm1942, %v4141, 0.0
        %v4368 = vsel %vm1943, %v4140, 0.0
        %v4369 = vsel %vm1944, %v4139, 0.0
        %v4370 = vsel %vm1945, %v4138, 0.0
        %v4371 = vsel %vm1946, %v4137, 0.0
        %v4372 = vsel %vm1947, %v4136, 0.0
        %v4373 = vsel %vm1948, %v4135, 0.0
        %v4374 = vsel %vm1949, %v4134, 0.0
        %v4375 = vsel %vm1950, %v4133, 0.0
        %v4376 = vsel %vm1951, %v4132, 0.0
        %v4377 = vsel %vm1952, %v4131, 0.0
        %v4378 = vsel %vm1953, %v4130, 0.0
        %v4379 = vsel %vm1954, %v4129, 0.0
        %v4380 = vsel %vm1955, %v4128, 0.0
        %v4381 = vsel %vm1956, %v4127, 0.0
        %v4382 = vsel %vm1957, %v4126, 0.0
        %v4383 = vsel %vm1958, %v4125, 0.0
        %v4384 = vsel %vm1959, %v4124, 0.0
        %v4385 = vsel %vm1960, %v4123, 0.0
        %v4386 = vsel %vm1961, %v4122, 0.0
        %v4387 = vsel %vm1962, %v4121, 0.0
        %v4388 = vsel %vm1963, %v4120, 0.0
        %v4389 = vsel %vm1964, %v4119, 0.0
        %v4390 = vsel %vm1965, %v4118, 0.0
        %v4391 = vsel %vm1966, %v4117, 0.0
        %v4392 = vsel %vm1967, %v4116, 0.0
        %v4393 = vsel %vm1968, %v4255, 0.0
        %v4394 = vsel %vm1969, %v4254, 0.0
        %v4395 = vsel %vm1970, %v4364, 0.0
        %v4396 = vsel %vm1971, %v4363, 0.0
        %v4397 = vsel %vm1972, %v4365, 0.0
        %v4398 = vpack.c.bf16 %v4367, %v4366
        %v4399 = vpack.c.bf16 %v4369, %v4368
        %v4400 = vpack.c.bf16 %v4371, %v4370
        %v4401 = vpack.c.bf16 %v4373, %v4372
        %v4402 = vpack.c.bf16 %v4375, %v4374
        %v4403 = vpack.c.bf16 %v4377, %v4376
        %v4404 = vpack.c.bf16 %v4379, %v4378
        %v4405 = vpack.c.bf16 %v4381, %v4380
        %v4406 = vpack.c.bf16 %v4383, %v4382
        %v4407 = vpack.c.bf16 %v4385, %v4384
        %v4408 = vpack.c.bf16 %v4387, %v4386
        %v4409 = vpack.c.bf16 %v4389, %v4388
        %v4410 = vpack.c.bf16 %v4391, %v4390
        %v4411 = vpack.c.bf16 %v4393, %v4392
        %v4412 = vpack.c.bf16 %v4395, %v4394
        %v4413 = vpack.c.bf16 %v4397, %v4396
        %4430 = vrot.lane.b32.xlu0 %v4068, 64
        %v4431 = vpop.permute.xlu0 %4430
        %4432 = vrot.lane.b32.xlu0 %v4069, 64
        %v4433 = vpop.permute.xlu0 %4432
        %4434 = vrot.lane.b32.xlu0 %v4070, 64
        %v4435 = vpop.permute.xlu0 %4434
        %4436 = vrot.lane.b32.xlu0 %v4071, 64
        %v4437 = vpop.permute.xlu0 %4436
        %4438 = vrot.lane.b32.xlu0 %v4072, 64
        %v4439 = vpop.permute.xlu0 %4438
        %4440 = vrot.lane.b32.xlu0 %v4073, 64
        %v4441 = vpop.permute.xlu0 %4440
        %4442 = vrot.lane.b32.xlu0 %v4074, 64
        %v4443 = vpop.permute.xlu0 %4442
        %4444 = vrot.lane.b32.xlu0 %v4075, 64
        %v4445 = vpop.permute.xlu0 %4444
        %4446 = vrot.lane.b32.xlu0 %v4076, 64
        %v4447 = vpop.permute.xlu0 %4446
        %4448 = vrot.lane.b32.xlu0 %v4077, 64
        %v4449 = vpop.permute.xlu0 %4448
        %4450 = vrot.lane.b32.xlu0 %v4078, 64
        %v4451 = vpop.permute.xlu0 %4450
        %4452 = vrot.lane.b32.xlu0 %v4079, 64
        %v4453 = vpop.permute.xlu0 %4452
        %4454 = vrot.lane.b32.xlu0 %v4080, 64
        %v4455 = vpop.permute.xlu0 %4454
        %4456 = vrot.lane.b32.xlu0 %v4081, 64
        %v4457 = vpop.permute.xlu0 %4456
        %4458 = vrot.lane.b32.xlu0 %v4082, 64
        %v4459 = vpop.permute.xlu0 %4458
        %4460 = vrot.lane.b32.xlu0 %v4083, 64
        %v4461 = vpop.permute.xlu0 %4460
        %v4464 = vsel %vm985, %v4052, %v4431
        %v4468 = vsel %vm985, %v4053, %v4433
        %v4472 = vsel %vm985, %v4054, %v4435
        %v4476 = vsel %vm985, %v4055, %v4437
        %v4480 = vsel %vm985, %v4056, %v4439
        %v4484 = vsel %vm985, %v4057, %v4441
        %v4488 = vsel %vm985, %v4058, %v4443
        %v4492 = vsel %vm985, %v4059, %v4445
        %v4496 = vsel %vm985, %v4060, %v4447
        %v4500 = vsel %vm985, %v4061, %v4449
        %v4504 = vsel %vm985, %v4062, %v4451
        %v4508 = vsel %vm985, %v4063, %v4453
        %v4512 = vsel %vm985, %v4064, %v4455
        %v4516 = vsel %vm985, %v4065, %v4457
        %v4520 = vsel %vm985, %v4066, %v4459
        %v4524 = vsel %vm985, %v4067, %v4461
        %4526 = vst [vmem:[#allocation3] sm:$0xff] %v4464
        %4527 = vst [vmem:[#allocation3 + $0x28] sm:$0xff] %v4468
        %4528 = vst [vmem:[#allocation3 + $0x50] sm:$0xff] %v4472
        %4529 = vst [vmem:[#allocation3 + $0x78] sm:$0xff] %v4476
        %4530 = vst [vmem:[#allocation3 + $0xa0] sm:$0xff] %v4480
        %4531 = vst [vmem:[#allocation3 + $0xc8] sm:$0xff] %v4484
        %4532 = vst [vmem:[#allocation3 + $0xf0] sm:$0xff] %v4488
        %4533 = vst [vmem:[#allocation3 + $0x118] sm:$0xff] %v4492
        %4534 = vst [vmem:[#allocation3 + $0x140] sm:$0xff] %v4496
        %4535 = vst [vmem:[#allocation3 + $0x168] sm:$0xff] %v4500
        %4536 = vst [vmem:[#allocation3 + $0x190] sm:$0xff] %v4504
        %4537 = vst [vmem:[#allocation3 + $0x1b8] sm:$0xff] %v4508
        %4538 = vst [vmem:[#allocation3 + $0x1e0] sm:$0xff] %v4512
        %4539 = vst [vmem:[#allocation3 + $0x208] sm:$0xff] %v4516
        %4540 = vst [vmem:[#allocation3 + $0x230] sm:$0xff] %v4520
        %4541 = vst [vmem:[#allocation3 + $0x258] sm:$0xff] %v4524
        %4558 = vrot.lane.b32.xlu0 %v4235, 64
        %v4559 = vpop.permute.xlu0 %4558
        %4560 = vrot.lane.b32.xlu0 %v4236, 64
        %v4561 = vpop.permute.xlu0 %4560
        %4562 = vrot.lane.b32.xlu0 %v4237, 64
        %v4563 = vpop.permute.xlu0 %4562
        %4564 = vrot.lane.b32.xlu0 %v4238, 64
        %v4565 = vpop.permute.xlu0 %4564
        %4566 = vrot.lane.b32.xlu0 %v4239, 64
        %v4567 = vpop.permute.xlu0 %4566
        %4568 = vrot.lane.b32.xlu0 %v4240, 64
        %v4569 = vpop.permute.xlu0 %4568
        %4570 = vrot.lane.b32.xlu0 %v4241, 64
        %v4571 = vpop.permute.xlu0 %4570
        %4572 = vrot.lane.b32.xlu0 %v4242, 64
        %v4573 = vpop.permute.xlu0 %4572
        %4574 = vrot.lane.b32.xlu0 %v4243, 64
        %v4575 = vpop.permute.xlu0 %4574
        %4576 = vrot.lane.b32.xlu0 %v4244, 64
        %v4577 = vpop.permute.xlu0 %4576
        %4578 = vrot.lane.b32.xlu0 %v4245, 64
        %v4579 = vpop.permute.xlu0 %4578
        %4580 = vrot.lane.b32.xlu0 %v4246, 64
        %v4581 = vpop.permute.xlu0 %4580
        %4582 = vrot.lane.b32.xlu0 %v4247, 64
        %v4583 = vpop.permute.xlu0 %4582
        %4584 = vrot.lane.b32.xlu0 %v4248, 64
        %v4585 = vpop.permute.xlu0 %4584
        %4586 = vrot.lane.b32.xlu0 %v4249, 64
        %v4587 = vpop.permute.xlu0 %4586
        %4588 = vrot.lane.b32.xlu0 %v4250, 64
        %v4589 = vpop.permute.xlu0 %4588
        %v4592 = vsel %vm985, %v4180, %v4559
        %v4596 = vsel %vm985, %v4181, %v4561
        %v4600 = vsel %vm985, %v4182, %v4563
        %v4604 = vsel %vm985, %v4183, %v4565
        %v4608 = vsel %vm985, %v4184, %v4567
        %v4612 = vsel %vm985, %v4185, %v4569
        %v4616 = vsel %vm985, %v4186, %v4571
        %v4620 = vsel %vm985, %v4187, %v4573
        %v4624 = vsel %vm985, %v4188, %v4575
        %v4628 = vsel %vm985, %v4189, %v4577
        %v4632 = vsel %vm985, %v4190, %v4579
        %v4636 = vsel %vm985, %v4191, %v4581
        %v4640 = vsel %vm985, %v4192, %v4583
        %v4644 = vsel %vm985, %v4193, %v4585
        %v4648 = vsel %vm985, %v4194, %v4587
        %v4652 = vsel %vm985, %v4195, %v4589
        %4654 = vst [vmem:[#allocation3 + $0x8] sm:$0xff] %v4592
        %4655 = vst [vmem:[#allocation3 + $0x30] sm:$0xff] %v4596
        %4656 = vst [vmem:[#allocation3 + $0x58] sm:$0xff] %v4600
        %4657 = vst [vmem:[#allocation3 + $0x80] sm:$0xff] %v4604
        %4658 = vst [vmem:[#allocation3 + $0xa8] sm:$0xff] %v4608
        %4659 = vst [vmem:[#allocation3 + $0xd0] sm:$0xff] %v4612
        %4660 = vst [vmem:[#allocation3 + $0xf8] sm:$0xff] %v4616
        %4661 = vst [vmem:[#allocation3 + $0x120] sm:$0xff] %v4620
        %4662 = vst [vmem:[#allocation3 + $0x148] sm:$0xff] %v4624
        %4663 = vst [vmem:[#allocation3 + $0x170] sm:$0xff] %v4628
        %4664 = vst [vmem:[#allocation3 + $0x198] sm:$0xff] %v4632
        %4665 = vst [vmem:[#allocation3 + $0x1c0] sm:$0xff] %v4636
        %4666 = vst [vmem:[#allocation3 + $0x1e8] sm:$0xff] %v4640
        %4667 = vst [vmem:[#allocation3 + $0x210] sm:$0xff] %v4644
        %4668 = vst [vmem:[#allocation3 + $0x238] sm:$0xff] %v4648
        %4669 = vst [vmem:[#allocation3 + $0x260] sm:$0xff] %v4652
        %4686 = vrot.lane.b32.xlu0 %v4289, 64
        %v4687 = vpop.permute.xlu0 %4686
        %4688 = vrot.lane.b32.xlu0 %v4290, 64
        %v4689 = vpop.permute.xlu0 %4688
        %4690 = vrot.lane.b32.xlu0 %v4291, 64
        %v4691 = vpop.permute.xlu0 %4690
        %4692 = vrot.lane.b32.xlu0 %v4292, 64
        %v4693 = vpop.permute.xlu0 %4692
        %4694 = vrot.lane.b32.xlu0 %v4293, 64
        %v4695 = vpop.permute.xlu0 %4694
        %4696 = vrot.lane.b32.xlu0 %v4294, 64
        %v4697 = vpop.permute.xlu0 %4696
        %4698 = vrot.lane.b32.xlu0 %v4295, 64
        %v4699 = vpop.permute.xlu0 %4698
        %4700 = vrot.lane.b32.xlu0 %v4296, 64
        %v4701 = vpop.permute.xlu0 %4700
        %4702 = vrot.lane.b32.xlu0 %v4297, 64
        %v4703 = vpop.permute.xlu0 %4702
        %4704 = vrot.lane.b32.xlu0 %v4298, 64
        %v4705 = vpop.permute.xlu0 %4704
        %4706 = vrot.lane.b32.xlu0 %v4299, 64
        %v4707 = vpop.permute.xlu0 %4706
        %4708 = vrot.lane.b32.xlu0 %v4300, 64
        %v4709 = vpop.permute.xlu0 %4708
        %4710 = vrot.lane.b32.xlu0 %v4301, 64
        %v4711 = vpop.permute.xlu0 %4710
        %4712 = vrot.lane.b32.xlu0 %v4302, 64
        %v4713 = vpop.permute.xlu0 %4712
        %4714 = vrot.lane.b32.xlu0 %v4303, 64
        %v4715 = vpop.permute.xlu0 %4714
        %4716 = vrot.lane.b32.xlu0 %v4304, 64
        %v4717 = vpop.permute.xlu0 %4716
        %v4720 = vsel %vm985, %v4069, %v4687
        %v4724 = vsel %vm985, %v4070, %v4689
        %v4728 = vsel %vm985, %v4071, %v4691
        %v4732 = vsel %vm985, %v4072, %v4693
        %v4736 = vsel %vm985, %v4073, %v4695
        %v4740 = vsel %vm985, %v4074, %v4697
        %v4744 = vsel %vm985, %v4075, %v4699
        %v4748 = vsel %vm985, %v4076, %v4701
        %v4752 = vsel %vm985, %v4077, %v4703
        %v4756 = vsel %vm985, %v4078, %v4705
        %v4760 = vsel %vm985, %v4079, %v4707
        %v4764 = vsel %vm985, %v4080, %v4709
        %v4768 = vsel %vm985, %v4081, %v4711
        %v4772 = vsel %vm985, %v4082, %v4713
        %v4776 = vsel %vm985, %v4083, %v4715
        %v4780 = vsel %vm985, %v4251, %v4717
        %4782 = vst [vmem:[#allocation3 + $0x10] sm:$0xff] %v4720
        %4783 = vst [vmem:[#allocation3 + $0x38] sm:$0xff] %v4724
        %4784 = vst [vmem:[#allocation3 + $0x60] sm:$0xff] %v4728
        %4785 = vst [vmem:[#allocation3 + $0x88] sm:$0xff] %v4732
        %4786 = vst [vmem:[#allocation3 + $0xb0] sm:$0xff] %v4736
        %4787 = vst [vmem:[#allocation3 + $0xd8] sm:$0xff] %v4740
        %4788 = vst [vmem:[#allocation3 + $0x100] sm:$0xff] %v4744
        %4789 = vst [vmem:[#allocation3 + $0x128] sm:$0xff] %v4748
        %4790 = vst [vmem:[#allocation3 + $0x150] sm:$0xff] %v4752
        %4791 = vst [vmem:[#allocation3 + $0x178] sm:$0xff] %v4756
        %4792 = vst [vmem:[#allocation3 + $0x1a0] sm:$0xff] %v4760
        %4793 = vst [vmem:[#allocation3 + $0x1c8] sm:$0xff] %v4764
        %4794 = vst [vmem:[#allocation3 + $0x1f0] sm:$0xff] %v4768
        %4795 = vst [vmem:[#allocation3 + $0x218] sm:$0xff] %v4772
        %4796 = vst [vmem:[#allocation3 + $0x240] sm:$0xff] %v4776
        %4797 = vst [vmem:[#allocation3 + $0x268] sm:$0xff] %v4780
        %4800 = vrot.lane.b32.xlu0 %v4251, 64
        %v4801 = vpop.permute.xlu0 %4800
        %4802 = vrot.lane.b32.xlu0 %v4360, 64
        %v4803 = vpop.permute.xlu0 %4802
        %v4805 = vsel %vm985, %v4344, %v4435
        %v4808 = vsel %vm985, %v4345, %v4437
        %v4811 = vsel %vm985, %v4346, %v4439
        %v4814 = vsel %vm985, %v4347, %v4441
        %v4817 = vsel %vm985, %v4348, %v4443
        %v4820 = vsel %vm985, %v4349, %v4445
        %v4823 = vsel %vm985, %v4350, %v4447
        %v4826 = vsel %vm985, %v4351, %v4449
        %v4829 = vsel %vm985, %v4352, %v4451
        %v4832 = vsel %vm985, %v4353, %v4453
        %v4835 = vsel %vm985, %v4354, %v4455
        %v4838 = vsel %vm985, %v4355, %v4457
        %v4841 = vsel %vm985, %v4356, %v4459
        %v4844 = vsel %vm985, %v4357, %v4461
        %v4848 = vsel %vm985, %v4358, %v4801
        %v4852 = vsel %vm985, %v4359, %v4803
        %4854 = vst [vmem:[#allocation3 + $0x18] sm:$0xff] %v4805
        %4855 = vst [vmem:[#allocation3 + $0x40] sm:$0xff] %v4808
        %4856 = vst [vmem:[#allocation3 + $0x68] sm:$0xff] %v4811
        %4857 = vst [vmem:[#allocation3 + $0x90] sm:$0xff] %v4814
        %4858 = vst [vmem:[#allocation3 + $0xb8] sm:$0xff] %v4817
        %4859 = vst [vmem:[#allocation3 + $0xe0] sm:$0xff] %v4820
        %4860 = vst [vmem:[#allocation3 + $0x108] sm:$0xff] %v4823
        %4861 = vst [vmem:[#allocation3 + $0x130] sm:$0xff] %v4826
        %4862 = vst [vmem:[#allocation3 + $0x158] sm:$0xff] %v4829
        %4863 = vst [vmem:[#allocation3 + $0x180] sm:$0xff] %v4832
        %4864 = vst [vmem:[#allocation3 + $0x1a8] sm:$0xff] %v4835
        %4865 = vst [vmem:[#allocation3 + $0x1d0] sm:$0xff] %v4838
        %4866 = vst [vmem:[#allocation3 + $0x1f8] sm:$0xff] %v4841
        %4867 = vst [vmem:[#allocation3 + $0x220] sm:$0xff] %v4844
        %4868 = vst [vmem:[#allocation3 + $0x248] sm:$0xff] %v4848
        %4869 = vst [vmem:[#allocation3 + $0x270] sm:$0xff] %v4852
        %4870 = vst.msk [vmem:[#allocation3 + $0x20] sm:$0xff] %vm985, %v4398
        %4871 = vst.msk [vmem:[#allocation3 + $0x48] sm:$0xff] %vm985, %v4399
        %4872 = vst.msk [vmem:[#allocation3 + $0x70] sm:$0xff] %vm985, %v4400
        %4873 = vst.msk [vmem:[#allocation3 + $0x98] sm:$0xff] %vm985, %v4401
        %4874 = vst.msk [vmem:[#allocation3 + $0xc0] sm:$0xff] %vm985, %v4402
        %4875 = vst.msk [vmem:[#allocation3 + $0xe8] sm:$0xff] %vm985, %v4403
        %4876 = vst.msk [vmem:[#allocation3 + $0x110] sm:$0xff] %vm985, %v4404
        %4877 = vst.msk [vmem:[#allocation3 + $0x138] sm:$0xff] %vm985, %v4405
        %4878 = vst.msk [vmem:[#allocation3 + $0x160] sm:$0xff] %vm985, %v4406
        %4879 = vst.msk [vmem:[#allocation3 + $0x188] sm:$0xff] %vm985, %v4407
        %4880 = vst.msk [vmem:[#allocation3 + $0x1b0] sm:$0xff] %vm985, %v4408
        %4881 = vst.msk [vmem:[#allocation3 + $0x1d8] sm:$0xff] %vm985, %v4409
        %4882 = vst.msk [vmem:[#allocation3 + $0x200] sm:$0xff] %vm985, %v4410
        %4883 = vst.msk [vmem:[#allocation3 + $0x228] sm:$0xff] %vm985, %v4411
        %4884 = vst.msk [vmem:[#allocation3 + $0x250] sm:$0xff] %vm985, %v4412
        %4885 = vst.msk [vmem:[#allocation3 + $0x278] sm:$0xff] %vm985, %v4413
        %v4886 = vld [vmem:[#allocation3] sm:$0xff]
        %v4887 = vld [vmem:[#allocation3 + $0x8] sm:$0xff]
        %v4888 = vld [vmem:[#allocation3 + $0x10] sm:$0xff]
        %v4889 = vld [vmem:[#allocation3 + $0x18] sm:$0xff]
        %v4890 = vld [vmem:[#allocation3 + $0x20] sm:$0xff]
        %v4891 = vld [vmem:[#allocation3 + $0x28] sm:$0xff]
        %v4892 = vld [vmem:[#allocation3 + $0x30] sm:$0xff]
        %v4893 = vld [vmem:[#allocation3 + $0x38] sm:$0xff]
        %v4894 = vld [vmem:[#allocation3 + $0x40] sm:$0xff]
        %v4895 = vld [vmem:[#allocation3 + $0x48] sm:$0xff]
        %v4896 = vld [vmem:[#allocation3 + $0x50] sm:$0xff]
        %v4897 = vld [vmem:[#allocation3 + $0x58] sm:$0xff]
        %v4898 = vld [vmem:[#allocation3 + $0x60] sm:$0xff]
        %v4899 = vld [vmem:[#allocation3 + $0x68] sm:$0xff]
        %v4900 = vld [vmem:[#allocation3 + $0x70] sm:$0xff]
        %v4901 = vld [vmem:[#allocation3 + $0x78] sm:$0xff]
        %v4902 = vld [vmem:[#allocation3 + $0x80] sm:$0xff]
        %v4903 = vld [vmem:[#allocation3 + $0x88] sm:$0xff]
        %v4904 = vld [vmem:[#allocation3 + $0x90] sm:$0xff]
        %v4905 = vld [vmem:[#allocation3 + $0x98] sm:$0xff]
        %v4906 = vld [vmem:[#allocation3 + $0xa0] sm:$0xff]
        %v4907 = vld [vmem:[#allocation3 + $0xa8] sm:$0xff]
        %v4908 = vld [vmem:[#allocation3 + $0xb0] sm:$0xff]
        %v4909 = vld [vmem:[#allocation3 + $0xb8] sm:$0xff]
        %v4910 = vld [vmem:[#allocation3 + $0xc0] sm:$0xff]
        %v4911 = vld [vmem:[#allocation3 + $0xc8] sm:$0xff]
        %v4912 = vld [vmem:[#allocation3 + $0xd0] sm:$0xff]
        %v4913 = vld [vmem:[#allocation3 + $0xd8] sm:$0xff]
        %v4914 = vld [vmem:[#allocation3 + $0xe0] sm:$0xff]
        %v4915 = vld [vmem:[#allocation3 + $0xe8] sm:$0xff]
        %v4916 = vld [vmem:[#allocation3 + $0xf0] sm:$0xff]
        %v4917 = vld [vmem:[#allocation3 + $0xf8] sm:$0xff]
        %v4918 = vld [vmem:[#allocation3 + $0x100] sm:$0xff]
        %v4919 = vld [vmem:[#allocation3 + $0x108] sm:$0xff]
        %v4920 = vld [vmem:[#allocation3 + $0x110] sm:$0xff]
        %v4921 = vld [vmem:[#allocation3 + $0x118] sm:$0xff]
        %v4922 = vld [vmem:[#allocation3 + $0x120] sm:$0xff]
        %v4923 = vld [vmem:[#allocation3 + $0x128] sm:$0xff]
        %v4924 = vld [vmem:[#allocation3 + $0x130] sm:$0xff]
        %v4925 = vld [vmem:[#allocation3 + $0x138] sm:$0xff]
        %v4926 = vld [vmem:[#allocation3 + $0x140] sm:$0xff]
        %v4927 = vld [vmem:[#allocation3 + $0x148] sm:$0xff]
        %v4928 = vld [vmem:[#allocation3 + $0x150] sm:$0xff]
        %v4929 = vld [vmem:[#allocation3 + $0x158] sm:$0xff]
        %v4930 = vld [vmem:[#allocation3 + $0x160] sm:$0xff]
        %v4931 = vld [vmem:[#allocation3 + $0x168] sm:$0xff]
        %v4932 = vld [vmem:[#allocation3 + $0x170] sm:$0xff]
        %v4933 = vld [vmem:[#allocation3 + $0x178] sm:$0xff]
        %v4934 = vld [vmem:[#allocation3 + $0x180] sm:$0xff]
        %v4935 = vld [vmem:[#allocation3 + $0x188] sm:$0xff]
        %v4936 = vld [vmem:[#allocation3 + $0x190] sm:$0xff]
        %v4937 = vld [vmem:[#allocation3 + $0x198] sm:$0xff]
        %v4938 = vld [vmem:[#allocation3 + $0x1a0] sm:$0xff]
        %v4939 = vld [vmem:[#allocation3 + $0x1a8] sm:$0xff]
        %v4940 = vld [vmem:[#allocation3 + $0x1b0] sm:$0xff]
        %v4941 = vld [vmem:[#allocation3 + $0x1b8] sm:$0xff]
        %v4942 = vld [vmem:[#allocation3 + $0x1c0] sm:$0xff]
        %v4943 = vld [vmem:[#allocation3 + $0x1c8] sm:$0xff]
        %v4944 = vld [vmem:[#allocation3 + $0x1d0] sm:$0xff]
        %v4945 = vld [vmem:[#allocation3 + $0x1d8] sm:$0xff]
        %v4946 = vld [vmem:[#allocation3 + $0x1e0] sm:$0xff]
        %v4947 = vld [vmem:[#allocation3 + $0x1e8] sm:$0xff]
        %v4948 = vld [vmem:[#allocation3 + $0x1f0] sm:$0xff]
        %v4949 = vld [vmem:[#allocation3 + $0x1f8] sm:$0xff]
        %v4950 = vld [vmem:[#allocation3 + $0x200] sm:$0xff]
        %v4951 = vld [vmem:[#allocation3 + $0x208] sm:$0xff]
        %v4952 = vld [vmem:[#allocation3 + $0x210] sm:$0xff]
        %v4953 = vld [vmem:[#allocation3 + $0x218] sm:$0xff]
        %v4954 = vld [vmem:[#allocation3 + $0x220] sm:$0xff]
        %v4955 = vld [vmem:[#allocation3 + $0x228] sm:$0xff]
        %v4956 = vld [vmem:[#allocation3 + $0x230] sm:$0xff]
        %v4957 = vld [vmem:[#allocation3 + $0x238] sm:$0xff]
        %v4958 = vld [vmem:[#allocation3 + $0x240] sm:$0xff]
        %v4959 = vld [vmem:[#allocation3 + $0x248] sm:$0xff]
        %v4960 = vld [vmem:[#allocation3 + $0x250] sm:$0xff]
        %v4961 = vld [vmem:[#allocation3 + $0x258] sm:$0xff]
        %v4962 = vld [vmem:[#allocation3 + $0x260] sm:$0xff]
        %v4963 = vld [vmem:[#allocation3 + $0x268] sm:$0xff]
        %v4964 = vld [vmem:[#allocation3 + $0x270] sm:$0xff]
        %v4965 = vld [vmem:[#allocation3 + $0x278] sm:$0xff]
        %v4966 = vld [vmem:[#allocation15] sm:$0xf]
        %v4967 = vld [vmem:[#allocation15 + $0x4] sm:$0xf]
        %v4968 = vld [vmem:[#allocation15 + $0x8] sm:$0xf]
        %v4969 = vld [vmem:[#allocation15 + $0xc] sm:$0xf]
        %v4970 = vld [vmem:[#allocation15 + $0x10] sm:$0xf]
        %v4971 = vld [vmem:[#allocation15 + $0x14] sm:$0xf]
        %v4972 = vld [vmem:[#allocation15 + $0x18] sm:$0xf]
        %v4973 = vld [vmem:[#allocation15 + $0x1c] sm:$0xf]
        %v4974 = vld [vmem:[#allocation15 + $0x20] sm:$0xf]
        %v4975 = vld [vmem:[#allocation15 + $0x24] sm:$0xf]
        %v4976 = vld [vmem:[#allocation15 + $0x28] sm:$0xf]
        %v4977 = vld [vmem:[#allocation15 + $0x2c] sm:$0xf]
        %v4978 = vld [vmem:[#allocation15 + $0x30] sm:$0xf]
        %v4979 = vld [vmem:[#allocation15 + $0x34] sm:$0xf]
        %v4980 = vld [vmem:[#allocation15 + $0x38] sm:$0xf]
        %v4981 = vld [vmem:[#allocation15 + $0x3c] sm:$0xf]
        %v4982 = vld [vmem:[#allocation15 + $0x40] sm:$0xf]
        %v4983 = vld [vmem:[#allocation15 + $0x44] sm:$0xf]
        %v4984 = vld [vmem:[#allocation15 + $0x48] sm:$0xf]
        %v4985 = vld [vmem:[#allocation15 + $0x4c] sm:$0xf]
        %v4986 = vld [vmem:[#allocation15 + $0x50] sm:$0xf]
        %v4987 = vld [vmem:[#allocation15 + $0x54] sm:$0xf]
        %v4988 = vld [vmem:[#allocation15 + $0x58] sm:$0xf]
        %v4989 = vld [vmem:[#allocation15 + $0x5c] sm:$0xf]
        %v4990 = vld [vmem:[#allocation15 + $0x60] sm:$0xf]
        %v4991 = vld [vmem:[#allocation15 + $0x64] sm:$0xf]
        %v4992 = vld [vmem:[#allocation15 + $0x68] sm:$0xf]
        %v4993 = vld [vmem:[#allocation15 + $0x6c] sm:$0xf]
        %v4994 = vld [vmem:[#allocation15 + $0x70] sm:$0xf]
        %v4995 = vld [vmem:[#allocation15 + $0x74] sm:$0xf]
        %v4996 = vld [vmem:[#allocation15 + $0x78] sm:$0xf]
        %v4997 = vld [vmem:[#allocation15 + $0x7c] sm:$0xf]
        %v4998 = vld [vmem:[#allocation15 + $0x80] sm:$0xf]
        %v4999 = vld [vmem:[#allocation15 + $0x84] sm:$0xf]
        %v5000 = vld [vmem:[#allocation15 + $0x88] sm:$0xf]
        %v5001 = vld [vmem:[#allocation15 + $0x8c] sm:$0xf]
        %v5002 = vld [vmem:[#allocation15 + $0x90] sm:$0xf]
        %v5003 = vld [vmem:[#allocation15 + $0x94] sm:$0xf]
        %v5004 = vld [vmem:[#allocation15 + $0x98] sm:$0xf]
        %v5005 = vld [vmem:[#allocation15 + $0x9c] sm:$0xf]
        %v5006 = vld [vmem:[#allocation15 + $0xa0] sm:$0xf]
        %v5007 = vld [vmem:[#allocation15 + $0xa4] sm:$0xf]
        %v5008 = vld [vmem:[#allocation15 + $0xa8] sm:$0xf]
        %v5009 = vld [vmem:[#allocation15 + $0xac] sm:$0xf]
        %v5010 = vld [vmem:[#allocation15 + $0xb0] sm:$0xf]
        %v5011 = vld [vmem:[#allocation15 + $0xb4] sm:$0xf]
        %v5012 = vld [vmem:[#allocation15 + $0xb8] sm:$0xf]
        %v5013 = vld [vmem:[#allocation15 + $0xbc] sm:$0xf]
        %v5014 = vld [vmem:[#allocation15 + $0xc0] sm:$0xf]
        %v5015 = vld [vmem:[#allocation15 + $0xc4] sm:$0xf]
        %v5016 = vld [vmem:[#allocation15 + $0xc8] sm:$0xf]
        %v5017 = vld [vmem:[#allocation15 + $0xcc] sm:$0xf]
        %v5018 = vld [vmem:[#allocation15 + $0xd0] sm:$0xf]
        %v5019 = vld [vmem:[#allocation15 + $0xd4] sm:$0xf]
        %v5020 = vld [vmem:[#allocation15 + $0xd8] sm:$0xf]
        %v5021 = vld [vmem:[#allocation15 + $0xdc] sm:$0xf]
        %v5022 = vld [vmem:[#allocation15 + $0xe0] sm:$0xf]
        %v5023 = vld [vmem:[#allocation15 + $0xe4] sm:$0xf]
        %v5024 = vld [vmem:[#allocation15 + $0xe8] sm:$0xf]
        %v5025 = vld [vmem:[#allocation15 + $0xec] sm:$0xf]
        %v5026 = vld [vmem:[#allocation15 + $0xf0] sm:$0xf]
        %v5027 = vld [vmem:[#allocation15 + $0xf4] sm:$0xf]
        %v5028 = vld [vmem:[#allocation15 + $0xf8] sm:$0xf]
        %v5029 = vld [vmem:[#allocation15 + $0xfc] sm:$0xf]
        %v5030 = vld [vmem:[#allocation15 + $0x100] sm:$0xf]
        %v5031 = vld [vmem:[#allocation15 + $0x104] sm:$0xf]
        %v5032 = vld [vmem:[#allocation15 + $0x108] sm:$0xf]
        %v5033 = vld [vmem:[#allocation15 + $0x10c] sm:$0xf]
        %v5034 = vld [vmem:[#allocation15 + $0x110] sm:$0xf]
        %v5035 = vld [vmem:[#allocation15 + $0x114] sm:$0xf]
        %v5036 = vld [vmem:[#allocation15 + $0x118] sm:$0xf]
        %v5037 = vld [vmem:[#allocation15 + $0x11c] sm:$0xf]
        %v5038 = vld [vmem:[%s377 + $0x10] sm:$0xf]
        %v5039 = vld [vmem:[%s377 + $0x14] sm:$0xf]
        %v5040 = vld [vmem:[%s377 + $0x18] sm:$0xf]
        %v5041 = vld [vmem:[%s377 + $0x1c] sm:$0xf]
        %v5042 = vld [vmem:[%s377 + $0x20] sm:$0xf]
        %v5043 = vld [vmem:[%s377 + $0x24] sm:$0xf]
        %v5044 = vld [vmem:[%s377 + $0x28] sm:$0xf]
        %v5045 = vld [vmem:[%s377 + $0x2c] sm:$0xf]
        %v5046 = vld [vmem:[%s377 + $0x30] sm:$0xf]
        %v5047 = vld [vmem:[%s377 + $0x34] sm:$0xf]
        %v5048 = vld [vmem:[%s377 + $0x38] sm:$0xf]
        %v5049 = vld [vmem:[%s377 + $0x3c] sm:$0xf]
        %v5050 = vld [vmem:[%s377 + $0x40] sm:$0xf]
        %v5051 = vld [vmem:[%s377 + $0x44] sm:$0xf]
        %v5052 = vld [vmem:[%s377 + $0x48] sm:$0xf]
        %v5053 = vld [vmem:[%s377 + $0x4c] sm:$0xf]
        %v5054 = vld [vmem:[%s377 + $0x50] sm:$0xf]
        %v5055 = vld [vmem:[%s377 + $0x54] sm:$0xf]
        %v5056 = vld [vmem:[%s377 + $0x58] sm:$0xf]
        %v5057 = vld [vmem:[%s377 + $0x5c] sm:$0xf]
        %v5058 = vld [vmem:[%s377 + $0x60] sm:$0xf]
        %v5059 = vld [vmem:[%s377 + $0x64] sm:$0xf]
        %v5060 = vld [vmem:[%s377 + $0x68] sm:$0xf]
        %v5061 = vld [vmem:[%s377 + $0x6c] sm:$0xf]
        %v5062 = vld [vmem:[%s377 + $0x70] sm:$0xf]
        %v5063 = vld [vmem:[%s377 + $0x74] sm:$0xf]
        %v5064 = vld [vmem:[%s377 + $0x78] sm:$0xf]
        %v5065 = vld [vmem:[%s377 + $0x7c] sm:$0xf]
        %v5066 = vld [vmem:[%s377 + $0x80] sm:$0xf]
        %v5067 = vld [vmem:[%s377 + $0x84] sm:$0xf]
        %v5068 = vld [vmem:[%s377 + $0x88] sm:$0xf]
        %v5069 = vld [vmem:[%s377 + $0x8c] sm:$0xf]
        %v5070 = vld [vmem:[#allocation13] sm:$0xf]
        %v5071 = vld [vmem:[#allocation13 + $0x4] sm:$0xf]
        %v5072 = vld [vmem:[#allocation13 + $0x8] sm:$0xf]
        %v5073 = vld [vmem:[#allocation13 + $0xc] sm:$0xf]
        %v5074 = vld [vmem:[#allocation13 + $0x10] sm:$0x3]
        %v5107 = vunpack.c.l.b16 %v5038
        %v5108 = vunpack.c.l.b16 %v5039
        %v5109 = vunpack.c.l.b16 %v5040
        %v5110 = vunpack.c.l.b16 %v5041
        %v5111 = vunpack.c.l.b16 %v5042
        %v5112 = vunpack.c.l.b16 %v5043
        %v5113 = vunpack.c.l.b16 %v5044
        %v5114 = vunpack.c.l.b16 %v5045
        %v5115 = vunpack.c.l.b16 %v5046
        %v5116 = vunpack.c.l.b16 %v5047
        %v5117 = vunpack.c.l.b16 %v5048
        %v5118 = vunpack.c.l.b16 %v5049
        %v5119 = vunpack.c.l.b16 %v5050
        %v5120 = vunpack.c.l.b16 %v5051
        %v5121 = vunpack.c.l.b16 %v5052
        %v5122 = vunpack.c.l.b16 %v5053
        %v5123 = vunpack.c.l.b16 %v5054
        %v5124 = vunpack.c.l.b16 %v5055
        %v5125 = vunpack.c.l.b16 %v5056
        %v5126 = vunpack.c.l.b16 %v5057
        %v5127 = vunpack.c.l.b16 %v5058
        %v5128 = vunpack.c.l.b16 %v5059
        %v5129 = vunpack.c.l.b16 %v5060
        %v5130 = vunpack.c.l.b16 %v5061
        %v5131 = vunpack.c.l.b16 %v5062
        %v5132 = vunpack.c.l.b16 %v5063
        %v5133 = vunpack.c.l.b16 %v5064
        %v5134 = vunpack.c.l.b16 %v5065
        %v5135 = vunpack.c.l.b16 %v5066
        %v5136 = vunpack.c.l.b16 %v5067
        %v5137 = vunpack.c.l.b16 %v5068
        %v5138 = vunpack.c.l.b16 %v5069
        %v5139 = vpack.c.b16 %v5108, %v5107
        %v5140 = vpack.c.b16 %v5110, %v5109
        %v5141 = vpack.c.b16 %v5112, %v5111
        %v5142 = vpack.c.b16 %v5114, %v5113
        %v5143 = vpack.c.b16 %v5116, %v5115
        %v5144 = vpack.c.b16 %v5118, %v5117
        %v5145 = vpack.c.b16 %v5120, %v5119
        %v5146 = vpack.c.b16 %v5122, %v5121
        %v5147 = vpack.c.b16 %v5124, %v5123
        %v5148 = vpack.c.b16 %v5126, %v5125
        %v5149 = vpack.c.b16 %v5128, %v5127
        %v5150 = vpack.c.b16 %v5130, %v5129
        %v5151 = vpack.c.b16 %v5132, %v5131
        %v5152 = vpack.c.b16 %v5134, %v5133
        %v5153 = vpack.c.b16 %v5136, %v5135
        %v5154 = vpack.c.b16 %v5138, %v5137
        %v5160 = vunpack.c.l.b16 %v5070
        %v5161 = vunpack.c.l.b16 %v5071
        %v5162 = vunpack.c.l.b16 %v5072
        %v5163 = vunpack.c.l.b16 %v5073
        %v5164 = vunpack.c.l.b16 %v5074
        %v5165 = vpack.c.b16 %v5161, %v5160
        %v5166 = vpack.c.b16 %v5163, %v5162
        %v5167 = vpack.c.b16 %v5164, %v5164
        %v5171 = vsel %vm607, %v5139, 0
        %v5174 = vsel %vm607, %v5140, 0
        %v5177 = vsel %vm607, %v5141, 0
        %v5180 = vsel %vm607, %v5142, 0
        %v5183 = vsel %vm607, %v5143, 0
        %v5186 = vsel %vm607, %v5144, 0
        %v5189 = vsel %vm607, %v5145, 0
        %v5192 = vsel %vm607, %v5146, 0
        %v5195 = vsel %vm607, %v5147, 0
        %v5198 = vsel %vm607, %v5148, 0
        %v5201 = vsel %vm607, %v5149, 0
        %v5204 = vsel %vm607, %v5150, 0
        %v5207 = vsel %vm607, %v5151, 0
        %v5210 = vsel %vm607, %v5152, 0
        %v5213 = vsel %vm607, %v5153, 0
        %v5216 = vsel %vm607, %v5154, 0
        %v5219 = vsel %vm668, %v5167, 0
        %5221 = vmatprep.subr.bf16.mxu0 0
        %5222 = vmatpush1.bf16.msra.mxu0 %v5165
        %5223 = vmatprep.subr.bf16.mxu0 0
        %5224 = vmatpush1.bf16.msra.mxu0 %v5166
        %5225 = vmatprep.subr.bf16.mxu0 0
        %5226 = vmatpush1.bf16.msra.mxu0 %v5219
        %5227 = vmatprep.subr.bf16.mxu0 0
        %5228 = vmatpush1.bf16.msra.mxu0 0
        %5229 = vmatprep.subr.bf16.mxu0 0
        %5230 = vmatpush1.bf16.msra.mxu0 0
        %5231 = vmatprep.subr.bf16.mxu0 0
        %5232 = vmatpush1.bf16.msra.mxu0 0
        %5233 = vmatprep.subr.bf16.mxu0 0
        %5234 = vmatpush1.bf16.msra.mxu0 0
        %5235 = vmatprep.subr.bf16.mxu0 0
        %5236 = vmatpush1.bf16.msra.mxu0 0
        %5237 = vmatprep.subr.bf16.mxu0 0
        %5238 = vmatpush1.bf16.msra.mxu0 0
        %5239 = vmatprep.subr.bf16.mxu0 0
        %5240 = vmatpush1.bf16.msra.mxu0 0
        %5241 = vmatprep.subr.bf16.mxu0 0
        %5242 = vmatpush1.bf16.msra.mxu0 0
        %5243 = vmatprep.subr.bf16.mxu0 0
        %5244 = vmatpush1.bf16.msra.mxu0 0
        %5245 = vmatprep.subr.bf16.mxu0 0
        %5246 = vmatpush1.bf16.msra.mxu0 0
        %5247 = vmatprep.subr.bf16.mxu0 0
        %5248 = vmatpush1.bf16.msra.mxu0 0
        %5249 = vmatprep.subr.bf16.mxu0 0
        %5250 = vmatpush1.bf16.msra.mxu0 0
        %5251 = vmatprep.subr.bf16.mxu0 0
        %5252 = vmatpush1.bf16.msra.mxu0 0
        %5253 = vmatprep.mubr.bf16.mxu0 0
        %5254 = vmatmul.mubr.bf16.gmra.mrb[0].mxu0 %v5171
        %v5255 = vpop.f32.mrb[0].mxu0
        %v5256 = vadd.f32 0.0, %v5255
        %v5257 = vpop.f32.mrb[0].mxu0
        %v5258 = vpop.f32.mrb[0].mxu0
        %v5259 = vadd.f32 0.0, %v5258
        %v5260 = vpop.f32.mrb[0].mxu0
        %5261 = vmatprep.mubr.bf16.mxu0 0
        %5262 = vmatmul.mubr.bf16.gmra.mrb[0].mxu0 %v5174
        %v5263 = vpop.f32.mrb[0].mxu0
        %v5264 = vadd.f32 0.0, %v5263
        %v5265 = vpop.f32.mrb[0].mxu0
        %v5266 = vpop.f32.mrb[0].mxu0
        %v5267 = vadd.f32 0.0, %v5266
        %v5268 = vpop.f32.mrb[0].mxu0
        %5269 = vmatprep.mubr.bf16.mxu0 0
        %5270 = vmatmul.mubr.bf16.gmra.mrb[0].mxu0 %v5177
        %v5271 = vpop.f32.mrb[0].mxu0
        %v5272 = vadd.f32 0.0, %v5271
        %v5273 = vpop.f32.mrb[0].mxu0
        %v5274 = vpop.f32.mrb[0].mxu0
        %v5275 = vadd.f32 0.0, %v5274
        %v5276 = vpop.f32.mrb[0].mxu0
        %5277 = vmatprep.mubr.bf16.mxu0 0
        %5278 = vmatmul.mubr.bf16.gmra.mrb[0].mxu0 %v5180
        %v5279 = vpop.f32.mrb[0].mxu0
        %v5280 = vadd.f32 0.0, %v5279
        %v5281 = vpop.f32.mrb[0].mxu0
        %v5282 = vpop.f32.mrb[0].mxu0
        %v5283 = vadd.f32 0.0, %v5282
        %v5284 = vpop.f32.mrb[0].mxu0
        %5285 = vmatprep.mubr.bf16.mxu0 0
        %5286 = vmatmul.mubr.bf16.gmra.mrb[0].mxu0 %v5183
        %v5287 = vpop.f32.mrb[0].mxu0
        %v5288 = vadd.f32 0.0, %v5287
        %v5289 = vpop.f32.mrb[0].mxu0
        %v5290 = vpop.f32.mrb[0].mxu0
        %v5291 = vadd.f32 0.0, %v5290
        %v5292 = vpop.f32.mrb[0].mxu0
        %5293 = vmatprep.mubr.bf16.mxu0 0
        %5294 = vmatmul.mubr.bf16.gmra.mrb[0].mxu0 %v5186
        %v5295 = vpop.f32.mrb[0].mxu0
        %v5296 = vadd.f32 0.0, %v5295
        %v5297 = vpop.f32.mrb[0].mxu0
        %v5298 = vpop.f32.mrb[0].mxu0
        %v5299 = vadd.f32 0.0, %v5298
        %v5300 = vpop.f32.mrb[0].mxu0
        %5301 = vmatprep.mubr.bf16.mxu0 0
        %5302 = vmatmul.mubr.bf16.gmra.mrb[0].mxu0 %v5189
        %v5303 = vpop.f32.mrb[0].mxu0
        %v5304 = vadd.f32 0.0, %v5303
        %v5305 = vpop.f32.mrb[0].mxu0
        %v5306 = vpop.f32.mrb[0].mxu0
        %v5307 = vadd.f32 0.0, %v5306
        %v5308 = vpop.f32.mrb[0].mxu0
        %5309 = vmatprep.mubr.bf16.mxu0 0
        %5310 = vmatmul.mubr.bf16.gmra.mrb[0].mxu0 %v5192
        %v5311 = vpop.f32.mrb[0].mxu0
        %v5312 = vadd.f32 0.0, %v5311
        %v5313 = vpop.f32.mrb[0].mxu0
        %v5314 = vpop.f32.mrb[0].mxu0
        %v5315 = vadd.f32 0.0, %v5314
        %v5316 = vpop.f32.mrb[0].mxu0
        %5317 = vmatprep.mubr.bf16.mxu0 0
        %5318 = vmatmul.mubr.bf16.gmra.mrb[0].mxu0 %v5195
        %v5319 = vpop.f32.mrb[0].mxu0
        %v5320 = vadd.f32 0.0, %v5319
        %v5321 = vpop.f32.mrb[0].mxu0
        %v5322 = vpop.f32.mrb[0].mxu0
        %v5323 = vadd.f32 0.0, %v5322
        %v5324 = vpop.f32.mrb[0].mxu0
        %5325 = vmatprep.mubr.bf16.mxu0 0
        %5326 = vmatmul.mubr.bf16.gmra.mrb[0].mxu0 %v5198
        %v5327 = vpop.f32.mrb[0].mxu0
        %v5328 = vadd.f32 0.0, %v5327
        %v5329 = vpop.f32.mrb[0].mxu0
        %v5330 = vpop.f32.mrb[0].mxu0
        %v5331 = vadd.f32 0.0, %v5330
        %v5332 = vpop.f32.mrb[0].mxu0
        %5333 = vmatprep.mubr.bf16.mxu0 0
        %5334 = vmatmul.mubr.bf16.gmra.mrb[0].mxu0 %v5201
        %v5335 = vpop.f32.mrb[0].mxu0
        %v5336 = vadd.f32 0.0, %v5335
        %v5337 = vpop.f32.mrb[0].mxu0
        %v5338 = vpop.f32.mrb[0].mxu0
        %v5339 = vadd.f32 0.0, %v5338
        %v5340 = vpop.f32.mrb[0].mxu0
        %5341 = vmatprep.mubr.bf16.mxu0 0
        %5342 = vmatmul.mubr.bf16.gmra.mrb[0].mxu0 %v5204
        %v5343 = vpop.f32.mrb[0].mxu0
        %v5344 = vadd.f32 0.0, %v5343
        %v5345 = vpop.f32.mrb[0].mxu0
        %v5346 = vpop.f32.mrb[0].mxu0
        %v5347 = vadd.f32 0.0, %v5346
        %v5348 = vpop.f32.mrb[0].mxu0
        %5349 = vmatprep.mubr.bf16.mxu0 0
        %5350 = vmatmul.mubr.bf16.gmra.mrb[0].mxu0 %v5207
        %v5351 = vpop.f32.mrb[0].mxu0
        %v5352 = vadd.f32 0.0, %v5351
        %v5353 = vpop.f32.mrb[0].mxu0
        %v5354 = vpop.f32.mrb[0].mxu0
        %v5355 = vadd.f32 0.0, %v5354
        %v5356 = vpop.f32.mrb[0].mxu0
        %5357 = vmatprep.mubr.bf16.mxu0 0
        %5358 = vmatmul.mubr.bf16.gmra.mrb[0].mxu0 %v5210
        %v5359 = vpop.f32.mrb[0].mxu0
        %v5360 = vadd.f32 0.0, %v5359
        %v5361 = vpop.f32.mrb[0].mxu0
        %v5362 = vpop.f32.mrb[0].mxu0
        %v5363 = vadd.f32 0.0, %v5362
        %v5364 = vpop.f32.mrb[0].mxu0
        %5365 = vmatprep.mubr.bf16.mxu0 0
        %5366 = vmatmul.mubr.bf16.gmra.mrb[0].mxu0 %v5213
        %v5367 = vpop.f32.mrb[0].mxu0
        %v5368 = vadd.f32 0.0, %v5367
        %v5369 = vpop.f32.mrb[0].mxu0
        %v5370 = vpop.f32.mrb[0].mxu0
        %v5371 = vadd.f32 0.0, %v5370
        %v5372 = vpop.f32.mrb[0].mxu0
        %5373 = vmatprep.mubr.bf16.mxu0 0
        %5374 = vmatmul.mubr.bf16.gmra.mrb[0].mxu0 %v5216
        %v5375 = vpop.f32.mrb[0].mxu0
        %v5376 = vadd.f32 0.0, %v5375
        %v5377 = vpop.f32.mrb[0].mxu0
        %v5378 = vpop.f32.mrb[0].mxu0
        %v5379 = vadd.f32 0.0, %v5378
        %v5380 = vpop.f32.mrb[0].mxu0
        %5381 = vdwg.mxu0
        %v5454 = vunpack.c.l.b16 %v4966
        %v5455 = vunpack.c.l.b16 %v4967
        %v5456 = vunpack.c.l.b16 %v4968
        %v5457 = vunpack.c.l.b16 %v4969
        %v5458 = vunpack.c.l.b16 %v4970
        %v5459 = vunpack.c.l.b16 %v4971
        %v5460 = vunpack.c.l.b16 %v4972
        %v5461 = vunpack.c.l.b16 %v4973
        %v5462 = vunpack.c.l.b16 %v4974
        %v5463 = vunpack.c.l.b16 %v4975
        %v5464 = vunpack.c.l.b16 %v4976
        %v5465 = vunpack.c.l.b16 %v4977
        %v5466 = vunpack.c.l.b16 %v4978
        %v5467 = vunpack.c.l.b16 %v4979
        %v5468 = vunpack.c.l.b16 %v4980
        %v5469 = vunpack.c.l.b16 %v4981
        %v5470 = vunpack.c.l.b16 %v4982
        %v5471 = vunpack.c.l.b16 %v4983
        %v5472 = vunpack.c.l.b16 %v4984
        %v5473 = vunpack.c.l.b16 %v4985
        %v5474 = vunpack.c.l.b16 %v4986
        %v5475 = vunpack.c.l.b16 %v4987
        %v5476 = vunpack.c.l.b16 %v4988
        %v5477 = vunpack.c.l.b16 %v4989
        %v5478 = vunpack.c.l.b16 %v4990
        %v5479 = vunpack.c.l.b16 %v4991
        %v5480 = vunpack.c.l.b16 %v4992
        %v5481 = vunpack.c.l.b16 %v4993
        %v5482 = vunpack.c.l.b16 %v4994
        %v5483 = vunpack.c.l.b16 %v4995
        %v5484 = vunpack.c.l.b16 %v4996
        %v5485 = vunpack.c.l.b16 %v4997
        %v5486 = vunpack.c.l.b16 %v4998
        %v5487 = vunpack.c.l.b16 %v4999
        %v5488 = vunpack.c.l.b16 %v5000
        %v5489 = vunpack.c.l.b16 %v5001
        %v5490 = vunpack.c.l.b16 %v5002
        %v5491 = vunpack.c.l.b16 %v5003
        %v5492 = vunpack.c.l.b16 %v5004
        %v5493 = vunpack.c.l.b16 %v5005
        %v5494 = vunpack.c.l.b16 %v5006
        %v5495 = vunpack.c.l.b16 %v5007
        %v5496 = vunpack.c.l.b16 %v5008
        %v5497 = vunpack.c.l.b16 %v5009
        %v5498 = vunpack.c.l.b16 %v5010
        %v5499 = vunpack.c.l.b16 %v5011
        %v5500 = vunpack.c.l.b16 %v5012
        %v5501 = vunpack.c.l.b16 %v5013
        %v5502 = vunpack.c.l.b16 %v5014
        %v5503 = vunpack.c.l.b16 %v5015
        %v5504 = vunpack.c.l.b16 %v5016
        %v5505 = vunpack.c.l.b16 %v5017
        %v5506 = vunpack.c.l.b16 %v5018
        %v5507 = vunpack.c.l.b16 %v5019
        %v5508 = vunpack.c.l.b16 %v5020
        %v5509 = vunpack.c.l.b16 %v5021
        %v5510 = vunpack.c.l.b16 %v5022
        %v5511 = vunpack.c.l.b16 %v5023
        %v5512 = vunpack.c.l.b16 %v5024
        %v5513 = vunpack.c.l.b16 %v5025
        %v5514 = vunpack.c.l.b16 %v5026
        %v5515 = vunpack.c.l.b16 %v5027
        %v5516 = vunpack.c.l.b16 %v5028
        %v5517 = vunpack.c.l.b16 %v5029
        %v5518 = vunpack.c.l.b16 %v5030
        %v5519 = vunpack.c.l.b16 %v5031
        %v5520 = vunpack.c.l.b16 %v5032
        %v5521 = vunpack.c.l.b16 %v5033
        %v5522 = vunpack.c.l.b16 %v5034
        %v5523 = vunpack.c.l.b16 %v5035
        %v5524 = vunpack.c.l.b16 %v5036
        %v5525 = vunpack.c.l.b16 %v5037
        %v5526 = vpack.c.b16 %v5455, %v5454
        %v5527 = vpack.c.b16 %v5457, %v5456
        %v5528 = vpack.c.b16 %v5459, %v5458
        %v5529 = vpack.c.b16 %v5461, %v5460
        %v5530 = vpack.c.b16 %v5463, %v5462
        %v5531 = vpack.c.b16 %v5465, %v5464
        %v5532 = vpack.c.b16 %v5467, %v5466
        %v5533 = vpack.c.b16 %v5469, %v5468
        %v5534 = vpack.c.b16 %v5471, %v5470
        %v5535 = vpack.c.b16 %v5473, %v5472
        %v5536 = vpack.c.b16 %v5475, %v5474
        %v5537 = vpack.c.b16 %v5477, %v5476
        %v5538 = vpack.c.b16 %v5479, %v5478
        %v5539 = vpack.c.b16 %v5481, %v5480
        %v5540 = vpack.c.b16 %v5483, %v5482
        %v5541 = vpack.c.b16 %v5485, %v5484
        %v5542 = vpack.c.b16 %v5487, %v5486
        %v5543 = vpack.c.b16 %v5489, %v5488
        %v5544 = vpack.c.b16 %v5491, %v5490
        %v5545 = vpack.c.b16 %v5493, %v5492
        %v5546 = vpack.c.b16 %v5495, %v5494
        %v5547 = vpack.c.b16 %v5497, %v5496
        %v5548 = vpack.c.b16 %v5499, %v5498
        %v5549 = vpack.c.b16 %v5501, %v5500
        %v5550 = vpack.c.b16 %v5503, %v5502
        %v5551 = vpack.c.b16 %v5505, %v5504
        %v5552 = vpack.c.b16 %v5507, %v5506
        %v5553 = vpack.c.b16 %v5509, %v5508
        %v5554 = vpack.c.b16 %v5511, %v5510
        %v5555 = vpack.c.b16 %v5513, %v5512
        %v5556 = vpack.c.b16 %v5515, %v5514
        %v5557 = vpack.c.b16 %v5517, %v5516
        %v5558 = vpack.c.b16 %v5519, %v5518
        %v5559 = vpack.c.b16 %v5521, %v5520
        %v5560 = vpack.c.b16 %v5523, %v5522
        %v5561 = vpack.c.b16 %v5525, %v5524
        %v5599 = vsel %vm985, %v4890, 0
        %v5602 = vsel %vm985, %v4895, 0
        %v5605 = vsel %vm985, %v4900, 0
        %v5608 = vsel %vm985, %v4905, 0
        %v5611 = vsel %vm985, %v4910, 0
        %v5614 = vsel %vm985, %v4915, 0
        %v5617 = vsel %vm985, %v4920, 0
        %v5620 = vsel %vm985, %v4925, 0
        %v5623 = vsel %vm985, %v4930, 0
        %v5626 = vsel %vm985, %v4935, 0
        %v5629 = vsel %vm985, %v4940, 0
        %v5632 = vsel %vm985, %v4945, 0
        %v5635 = vsel %vm985, %v4950, 0
        %v5638 = vsel %vm985, %v4955, 0
        %v5641 = vsel %vm985, %v4960, 0
        %v5644 = vsel %vm985, %v4965, 0
        %5646 = vmatprep.subr.bf16.mxu0 0
        %5647 = vmatpush1.bf16.msra.mxu0 %v5526
        %5648 = vmatprep.subr.bf16.mxu0 0
        %5649 = vmatpush1.bf16.msra.mxu0 %v5527
        %5650 = vmatprep.subr.bf16.mxu0 0
        %5651 = vmatpush1.bf16.msra.mxu0 %v5528
        %5652 = vmatprep.subr.bf16.mxu0 0
        %5653 = vmatpush1.bf16.msra.mxu0 %v5529
        %5654 = vmatprep.subr.bf16.mxu0 0
        %5655 = vmatpush1.bf16.msra.mxu0 %v5530
        %5656 = vmatprep.subr.bf16.mxu0 0
        %5657 = vmatpush1.bf16.msra.mxu0 %v5531
        %5658 = vmatprep.subr.bf16.mxu0 0
        %5659 = vmatpush1.bf16.msra.mxu0 %v5532
        %5660 = vmatprep.subr.bf16.mxu0 0
        %5661 = vmatpush1.bf16.msra.mxu0 %v5533
        %5662 = vmatprep.subr.bf16.mxu0 0
        %5663 = vmatpush1.bf16.msra.mxu0 %v5534
        %5664 = vmatprep.subr.bf16.mxu0 0
        %5665 = vmatpush1.bf16.msra.mxu0 %v5535
        %5666 = vmatprep.subr.bf16.mxu0 0
        %5667 = vmatpush1.bf16.msra.mxu0 %v5536
        %5668 = vmatprep.subr.bf16.mxu0 0
        %5669 = vmatpush1.bf16.msra.mxu0 %v5537
        %5670 = vmatprep.subr.bf16.mxu0 0
        %5671 = vmatpush1.bf16.msra.mxu0 %v5538
        %5672 = vmatprep.subr.bf16.mxu0 0
        %5673 = vmatpush1.bf16.msra.mxu0 %v5539
        %5674 = vmatprep.subr.bf16.mxu0 0
        %5675 = vmatpush1.bf16.msra.mxu0 %v5540
        %5676 = vmatprep.subr.bf16.mxu0 0
        %5677 = vmatpush1.bf16.msra.mxu0 %v5541
        %5678 = vmatprep.mubr.bf16.mxu0 %v4887
        %5679 = vmatmul.mubr.bf16.gmra.mrb[0].mxu0 %v4886
        %v5680 = vpop.f32.mrb[0].mxu0
        %v5681 = vadd.f32 %v5256, %v5680
        %v5682 = vpop.f32.mrb[0].mxu0
        %v5683 = vpop.f32.mrb[0].mxu0
        %v5684 = vadd.f32 %v5259, %v5683
        %v5685 = vpop.f32.mrb[0].mxu0
        %5686 = vmatprep.mubr.bf16.mxu0 %v4892
        %5687 = vmatmul.mubr.bf16.gmra.mrb[0].mxu0 %v4891
        %v5688 = vpop.f32.mrb[0].mxu0
        %v5689 = vadd.f32 %v5264, %v5688
        %v5690 = vpop.f32.mrb[0].mxu0
        %v5691 = vpop.f32.mrb[0].mxu0
        %v5692 = vadd.f32 %v5267, %v5691
        %v5693 = vpop.f32.mrb[0].mxu0
        %5694 = vmatprep.mubr.bf16.mxu0 %v4897
        %5695 = vmatmul.mubr.bf16.gmra.mrb[0].mxu0 %v4896
        %v5696 = vpop.f32.mrb[0].mxu0
        %v5697 = vadd.f32 %v5272, %v5696
        %v5698 = vpop.f32.mrb[0].mxu0
        %v5699 = vpop.f32.mrb[0].mxu0
        %v5700 = vadd.f32 %v5275, %v5699
        %v5701 = vpop.f32.mrb[0].mxu0
        %5702 = vmatprep.mubr.bf16.mxu0 %v4902
        %5703 = vmatmul.mubr.bf16.gmra.mrb[0].mxu0 %v4901
        %v5704 = vpop.f32.mrb[0].mxu0
        %v5705 = vadd.f32 %v5280, %v5704
        %v5706 = vpop.f32.mrb[0].mxu0
        %v5707 = vpop.f32.mrb[0].mxu0
        %v5708 = vadd.f32 %v5283, %v5707
        %v5709 = vpop.f32.mrb[0].mxu0
        %5710 = vmatprep.mubr.bf16.mxu0 %v4907
        %5711 = vmatmul.mubr.bf16.gmra.mrb[0].mxu0 %v4906
        %v5712 = vpop.f32.mrb[0].mxu0
        %v5713 = vadd.f32 %v5288, %v5712
        %v5714 = vpop.f32.mrb[0].mxu0
        %v5715 = vpop.f32.mrb[0].mxu0
        %v5716 = vadd.f32 %v5291, %v5715
        %v5717 = vpop.f32.mrb[0].mxu0
        %5718 = vmatprep.mubr.bf16.mxu0 %v4912
        %5719 = vmatmul.mubr.bf16.gmra.mrb[0].mxu0 %v4911
        %v5720 = vpop.f32.mrb[0].mxu0
        %v5721 = vadd.f32 %v5296, %v5720
        %v5722 = vpop.f32.mrb[0].mxu0
        %v5723 = vpop.f32.mrb[0].mxu0
        %v5724 = vadd.f32 %v5299, %v5723
        %v5725 = vpop.f32.mrb[0].mxu0
        %5726 = vmatprep.mubr.bf16.mxu0 %v4917
        %5727 = vmatmul.mubr.bf16.gmra.mrb[0].mxu0 %v4916
        %v5728 = vpop.f32.mrb[0].mxu0
        %v5729 = vadd.f32 %v5304, %v5728
        %v5730 = vpop.f32.mrb[0].mxu0
        %v5731 = vpop.f32.mrb[0].mxu0
        %v5732 = vadd.f32 %v5307, %v5731
        %v5733 = vpop.f32.mrb[0].mxu0
        %5734 = vmatprep.mubr.bf16.mxu0 %v4922
        %5735 = vmatmul.mubr.bf16.gmra.mrb[0].mxu0 %v4921
        %v5736 = vpop.f32.mrb[0].mxu0
        %v5737 = vadd.f32 %v5312, %v5736
        %v5738 = vpop.f32.mrb[0].mxu0
        %v5739 = vpop.f32.mrb[0].mxu0
        %v5740 = vadd.f32 %v5315, %v5739
        %v5741 = vpop.f32.mrb[0].mxu0
        %5742 = vmatprep.mubr.bf16.mxu0 %v4927
        %5743 = vmatmul.mubr.bf16.gmra.mrb[0].mxu0 %v4926
        %v5744 = vpop.f32.mrb[0].mxu0
        %v5745 = vadd.f32 %v5320, %v5744
        %v5746 = vpop.f32.mrb[0].mxu0
        %v5747 = vpop.f32.mrb[0].mxu0
        %v5748 = vadd.f32 %v5323, %v5747
        %v5749 = vpop.f32.mrb[0].mxu0
        %5750 = vmatprep.mubr.bf16.mxu0 %v4932
        %5751 = vmatmul.mubr.bf16.gmra.mrb[0].mxu0 %v4931
        %v5752 = vpop.f32.mrb[0].mxu0
        %v5753 = vadd.f32 %v5328, %v5752
        %v5754 = vpop.f32.mrb[0].mxu0
        %v5755 = vpop.f32.mrb[0].mxu0
        %v5756 = vadd.f32 %v5331, %v5755
        %v5757 = vpop.f32.mrb[0].mxu0
        %5758 = vmatprep.mubr.bf16.mxu0 %v4937
        %5759 = vmatmul.mubr.bf16.gmra.mrb[0].mxu0 %v4936
        %v5760 = vpop.f32.mrb[0].mxu0
        %v5761 = vadd.f32 %v5336, %v5760
        %v5762 = vpop.f32.mrb[0].mxu0
        %v5763 = vpop.f32.mrb[0].mxu0
        %v5764 = vadd.f32 %v5339, %v5763
        %v5765 = vpop.f32.mrb[0].mxu0
        %5766 = vmatprep.mubr.bf16.mxu0 %v4942
        %5767 = vmatmul.mubr.bf16.gmra.mrb[0].mxu0 %v4941
        %v5768 = vpop.f32.mrb[0].mxu0
        %v5769 = vadd.f32 %v5344, %v5768
        %v5770 = vpop.f32.mrb[0].mxu0
        %v5771 = vpop.f32.mrb[0].mxu0
        %v5772 = vadd.f32 %v5347, %v5771
        %v5773 = vpop.f32.mrb[0].mxu0
        %5774 = vmatprep.mubr.bf16.mxu0 %v4947
        %5775 = vmatmul.mubr.bf16.gmra.mrb[0].mxu0 %v4946
        %v5776 = vpop.f32.mrb[0].mxu0
        %v5777 = vadd.f32 %v5352, %v5776
        %v5778 = vpop.f32.mrb[0].mxu0
        %v5779 = vpop.f32.mrb[0].mxu0
        %v5780 = vadd.f32 %v5355, %v5779
        %v5781 = vpop.f32.mrb[0].mxu0
        %5782 = vmatprep.mubr.bf16.mxu0 %v4952
        %5783 = vmatmul.mubr.bf16.gmra.mrb[0].mxu0 %v4951
        %v5784 = vpop.f32.mrb[0].mxu0
        %v5785 = vadd.f32 %v5360, %v5784
        %v5786 = vpop.f32.mrb[0].mxu0
        %v5787 = vpop.f32.mrb[0].mxu0
        %v5788 = vadd.f32 %v5363, %v5787
        %v5789 = vpop.f32.mrb[0].mxu0
        %5790 = vmatprep.mubr.bf16.mxu0 %v4957
        %5791 = vmatmul.mubr.bf16.gmra.mrb[0].mxu0 %v4956
        %v5792 = vpop.f32.mrb[0].mxu0
        %v5793 = vadd.f32 %v5368, %v5792
        %v5794 = vpop.f32.mrb[0].mxu0
        %v5795 = vpop.f32.mrb[0].mxu0
        %v5796 = vadd.f32 %v5371, %v5795
        %v5797 = vpop.f32.mrb[0].mxu0
        %5798 = vmatprep.mubr.bf16.mxu0 %v4962
        %5799 = vmatmul.mubr.bf16.gmra.mrb[0].mxu0 %v4961
        %v5800 = vpop.f32.mrb[0].mxu0
        %v5801 = vadd.f32 %v5376, %v5800
        %v5802 = vpop.f32.mrb[0].mxu0
        %v5803 = vpop.f32.mrb[0].mxu0
        %v5804 = vadd.f32 %v5379, %v5803
        %v5805 = vpop.f32.mrb[0].mxu0
        %5806 = vdwg.mxu0
        %5807 = vmatprep.subr.bf16.mxu0 0
        %5808 = vmatpush1.bf16.msra.mxu0 %v5542
        %5809 = vmatprep.subr.bf16.mxu0 0
        %5810 = vmatpush1.bf16.msra.mxu0 %v5543
        %5811 = vmatprep.subr.bf16.mxu0 0
        %5812 = vmatpush1.bf16.msra.mxu0 %v5544
        %5813 = vmatprep.subr.bf16.mxu0 0
        %5814 = vmatpush1.bf16.msra.mxu0 %v5545
        %5815 = vmatprep.subr.bf16.mxu0 0
        %5816 = vmatpush1.bf16.msra.mxu0 %v5546
        %5817 = vmatprep.subr.bf16.mxu0 0
        %5818 = vmatpush1.bf16.msra.mxu0 %v5547
        %5819 = vmatprep.subr.bf16.mxu0 0
        %5820 = vmatpush1.bf16.msra.mxu0 %v5548
        %5821 = vmatprep.subr.bf16.mxu0 0
        %5822 = vmatpush1.bf16.msra.mxu0 %v5549
        %5823 = vmatprep.subr.bf16.mxu0 0
        %5824 = vmatpush1.bf16.msra.mxu0 %v5550
        %5825 = vmatprep.subr.bf16.mxu0 0
        %5826 = vmatpush1.bf16.msra.mxu0 %v5551
        %5827 = vmatprep.subr.bf16.mxu0 0
        %5828 = vmatpush1.bf16.msra.mxu0 %v5552
        %5829 = vmatprep.subr.bf16.mxu0 0
        %5830 = vmatpush1.bf16.msra.mxu0 %v5553
        %5831 = vmatprep.subr.bf16.mxu0 0
        %5832 = vmatpush1.bf16.msra.mxu0 %v5554
        %5833 = vmatprep.subr.bf16.mxu0 0
        %5834 = vmatpush1.bf16.msra.mxu0 %v5555
        %5835 = vmatprep.subr.bf16.mxu0 0
        %5836 = vmatpush1.bf16.msra.mxu0 %v5556
        %5837 = vmatprep.subr.bf16.mxu0 0
        %5838 = vmatpush1.bf16.msra.mxu0 %v5557
        %5839 = vmatprep.mubr.bf16.mxu0 %v4889
        %5840 = vmatmul.mubr.bf16.gmra.mrb[0].mxu0 %v4888
        %v5841 = vpop.f32.mrb[0].mxu0
        %v5842 = vadd.f32 %v5681, %v5841
        %v5843 = vpop.f32.mrb[0].mxu0
        %v5844 = vpop.f32.mrb[0].mxu0
        %v5845 = vadd.f32 %v5684, %v5844
        %v5846 = vpop.f32.mrb[0].mxu0
        %5847 = vmatprep.mubr.bf16.mxu0 %v4894
        %5848 = vmatmul.mubr.bf16.gmra.mrb[0].mxu0 %v4893
        %v5849 = vpop.f32.mrb[0].mxu0
        %v5850 = vadd.f32 %v5689, %v5849
        %v5851 = vpop.f32.mrb[0].mxu0
        %v5852 = vpop.f32.mrb[0].mxu0
        %v5853 = vadd.f32 %v5692, %v5852
        %v5854 = vpop.f32.mrb[0].mxu0
        %5855 = vmatprep.mubr.bf16.mxu0 %v4899
        %5856 = vmatmul.mubr.bf16.gmra.mrb[0].mxu0 %v4898
        %v5857 = vpop.f32.mrb[0].mxu0
        %v5858 = vadd.f32 %v5697, %v5857
        %v5859 = vpop.f32.mrb[0].mxu0
        %v5860 = vpop.f32.mrb[0].mxu0
        %v5861 = vadd.f32 %v5700, %v5860
        %v5862 = vpop.f32.mrb[0].mxu0
        %5863 = vmatprep.mubr.bf16.mxu0 %v4904
        %5864 = vmatmul.mubr.bf16.gmra.mrb[0].mxu0 %v4903
        %v5865 = vpop.f32.mrb[0].mxu0
        %v5866 = vadd.f32 %v5705, %v5865
        %v5867 = vpop.f32.mrb[0].mxu0
        %v5868 = vpop.f32.mrb[0].mxu0
        %v5869 = vadd.f32 %v5708, %v5868
        %v5870 = vpop.f32.mrb[0].mxu0
        %5871 = vmatprep.mubr.bf16.mxu0 %v4909
        %5872 = vmatmul.mubr.bf16.gmra.mrb[0].mxu0 %v4908
        %v5873 = vpop.f32.mrb[0].mxu0
        %v5874 = vadd.f32 %v5713, %v5873
        %v5875 = vpop.f32.mrb[0].mxu0
        %v5876 = vpop.f32.mrb[0].mxu0
        %v5877 = vadd.f32 %v5716, %v5876
        %v5878 = vpop.f32.mrb[0].mxu0
        %5879 = vmatprep.mubr.bf16.mxu0 %v4914
        %5880 = vmatmul.mubr.bf16.gmra.mrb[0].mxu0 %v4913
        %v5881 = vpop.f32.mrb[0].mxu0
        %v5882 = vadd.f32 %v5721, %v5881
        %v5883 = vpop.f32.mrb[0].mxu0
        %v5884 = vpop.f32.mrb[0].mxu0
        %v5885 = vadd.f32 %v5724, %v5884
        %v5886 = vpop.f32.mrb[0].mxu0
        %5887 = vmatprep.mubr.bf16.mxu0 %v4919
        %5888 = vmatmul.mubr.bf16.gmra.mrb[0].mxu0 %v4918
        %v5889 = vpop.f32.mrb[0].mxu0
        %v5890 = vadd.f32 %v5729, %v5889
        %v5891 = vpop.f32.mrb[0].mxu0
        %v5892 = vpop.f32.mrb[0].mxu0
        %v5893 = vadd.f32 %v5732, %v5892
        %v5894 = vpop.f32.mrb[0].mxu0
        %5895 = vmatprep.mubr.bf16.mxu0 %v4924
        %5896 = vmatmul.mubr.bf16.gmra.mrb[0].mxu0 %v4923
        %v5897 = vpop.f32.mrb[0].mxu0
        %v5898 = vadd.f32 %v5737, %v5897
        %v5899 = vpop.f32.mrb[0].mxu0
        %v5900 = vpop.f32.mrb[0].mxu0
        %v5901 = vadd.f32 %v5740, %v5900
        %v5902 = vpop.f32.mrb[0].mxu0
        %5903 = vmatprep.mubr.bf16.mxu0 %v4929
        %5904 = vmatmul.mubr.bf16.gmra.mrb[0].mxu0 %v4928
        %v5905 = vpop.f32.mrb[0].mxu0
        %v5906 = vadd.f32 %v5745, %v5905
        %v5907 = vpop.f32.mrb[0].mxu0
        %v5908 = vpop.f32.mrb[0].mxu0
        %v5909 = vadd.f32 %v5748, %v5908
        %v5910 = vpop.f32.mrb[0].mxu0
        %5911 = vmatprep.mubr.bf16.mxu0 %v4934
        %5912 = vmatmul.mubr.bf16.gmra.mrb[0].mxu0 %v4933
        %v5913 = vpop.f32.mrb[0].mxu0
        %v5914 = vadd.f32 %v5753, %v5913
        %v5915 = vpop.f32.mrb[0].mxu0
        %v5916 = vpop.f32.mrb[0].mxu0
        %v5917 = vadd.f32 %v5756, %v5916
        %v5918 = vpop.f32.mrb[0].mxu0
        %5919 = vmatprep.mubr.bf16.mxu0 %v4939
        %5920 = vmatmul.mubr.bf16.gmra.mrb[0].mxu0 %v4938
        %v5921 = vpop.f32.mrb[0].mxu0
        %v5922 = vadd.f32 %v5761, %v5921
        %v5923 = vpop.f32.mrb[0].mxu0
        %v5924 = vpop.f32.mrb[0].mxu0
        %v5925 = vadd.f32 %v5764, %v5924
        %v5926 = vpop.f32.mrb[0].mxu0
        %5927 = vmatprep.mubr.bf16.mxu0 %v4944
        %5928 = vmatmul.mubr.bf16.gmra.mrb[0].mxu0 %v4943
        %v5929 = vpop.f32.mrb[0].mxu0
        %v5930 = vadd.f32 %v5769, %v5929
        %v5931 = vpop.f32.mrb[0].mxu0
        %v5932 = vpop.f32.mrb[0].mxu0
        %v5933 = vadd.f32 %v5772, %v5932
        %v5934 = vpop.f32.mrb[0].mxu0
        %5935 = vmatprep.mubr.bf16.mxu0 %v4949
        %5936 = vmatmul.mubr.bf16.gmra.mrb[0].mxu0 %v4948
        %v5937 = vpop.f32.mrb[0].mxu0
        %v5938 = vadd.f32 %v5777, %v5937
        %v5939 = vpop.f32.mrb[0].mxu0
        %v5940 = vpop.f32.mrb[0].mxu0
        %v5941 = vadd.f32 %v5780, %v5940
        %v5942 = vpop.f32.mrb[0].mxu0
        %5943 = vmatprep.mubr.bf16.mxu0 %v4954
        %5944 = vmatmul.mubr.bf16.gmra.mrb[0].mxu0 %v4953
        %v5945 = vpop.f32.mrb[0].mxu0
        %v5946 = vadd.f32 %v5785, %v5945
        %v5947 = vpop.f32.mrb[0].mxu0
        %v5948 = vpop.f32.mrb[0].mxu0
        %v5949 = vadd.f32 %v5788, %v5948
        %v5950 = vpop.f32.mrb[0].mxu0
        %5951 = vmatprep.mubr.bf16.mxu0 %v4959
        %5952 = vmatmul.mubr.bf16.gmra.mrb[0].mxu0 %v4958
        %v5953 = vpop.f32.mrb[0].mxu0
        %v5954 = vadd.f32 %v5793, %v5953
        %v5955 = vpop.f32.mrb[0].mxu0
        %v5956 = vpop.f32.mrb[0].mxu0
        %v5957 = vadd.f32 %v5796, %v5956
        %v5958 = vpop.f32.mrb[0].mxu0
        %5959 = vmatprep.mubr.bf16.mxu0 %v4964
        %5960 = vmatmul.mubr.bf16.gmra.mrb[0].mxu0 %v4963
        %v5961 = vpop.f32.mrb[0].mxu0
        %v5962 = vadd.f32 %v5801, %v5961
        %v5963 = vpop.f32.mrb[0].mxu0
        %v5964 = vpop.f32.mrb[0].mxu0
        %v5965 = vadd.f32 %v5804, %v5964
        %v5966 = vpop.f32.mrb[0].mxu0
        %5967 = vdwg.mxu0
        %5968 = vmatprep.subr.bf16.mxu0 0
        %5969 = vmatpush1.bf16.msra.mxu0 %v5558
        %5970 = vmatprep.subr.bf16.mxu0 0
        %5971 = vmatpush1.bf16.msra.mxu0 %v5559
        %5972 = vmatprep.subr.bf16.mxu0 0
        %5973 = vmatpush1.bf16.msra.mxu0 %v5560
        %5974 = vmatprep.subr.bf16.mxu0 0
        %5975 = vmatpush1.bf16.msra.mxu0 %v5561
        %5976 = vmatprep.subr.bf16.mxu0 0
        %5977 = vmatpush1.bf16.msra.mxu0 0
        %5978 = vmatprep.subr.bf16.mxu0 0
        %5979 = vmatpush1.bf16.msra.mxu0 0
        %5980 = vmatprep.subr.bf16.mxu0 0
        %5981 = vmatpush1.bf16.msra.mxu0 0
        %5982 = vmatprep.subr.bf16.mxu0 0
        %5983 = vmatpush1.bf16.msra.mxu0 0
        %5984 = vmatprep.subr.bf16.mxu0 0
        %5985 = vmatpush1.bf16.msra.mxu0 0
        %5986 = vmatprep.subr.bf16.mxu0 0
        %5987 = vmatpush1.bf16.msra.mxu0 0
        %5988 = vmatprep.subr.bf16.mxu0 0
        %5989 = vmatpush1.bf16.msra.mxu0 0
        %5990 = vmatprep.subr.bf16.mxu0 0
        %5991 = vmatpush1.bf16.msra.mxu0 0
        %5992 = vmatprep.subr.bf16.mxu0 0
        %5993 = vmatpush1.bf16.msra.mxu0 0
        %5994 = vmatprep.subr.bf16.mxu0 0
        %5995 = vmatpush1.bf16.msra.mxu0 0
        %5996 = vmatprep.subr.bf16.mxu0 0
        %5997 = vmatpush1.bf16.msra.mxu0 0
        %5998 = vmatprep.subr.bf16.mxu0 0
        %5999 = vmatpush1.bf16.msra.mxu0 0
        %6000 = vmatprep.mubr.bf16.mxu0 0
        %6001 = vmatmul.mubr.bf16.gmra.mrb[0].mxu0 %v5599
        %v6002 = vpop.f32.mrb[0].mxu0
        %v6003 = vadd.f32 %v5842, %v6002
        %v6004 = vpop.f32.mrb[0].mxu0
        %v6005 = vpop.f32.mrb[0].mxu0
        %v6006 = vadd.f32 %v5845, %v6005
        %v6007 = vpop.f32.mrb[0].mxu0
        %6008 = vmatprep.mubr.bf16.mxu0 0
        %6009 = vmatmul.mubr.bf16.gmra.mrb[0].mxu0 %v5602
        %v6010 = vpop.f32.mrb[0].mxu0
        %v6011 = vadd.f32 %v5850, %v6010
        %v6012 = vpop.f32.mrb[0].mxu0
        %v6013 = vpop.f32.mrb[0].mxu0
        %v6014 = vadd.f32 %v5853, %v6013
        %v6015 = vpop.f32.mrb[0].mxu0
        %6016 = vmatprep.mubr.bf16.mxu0 0
        %6017 = vmatmul.mubr.bf16.gmra.mrb[0].mxu0 %v5605
        %v6018 = vpop.f32.mrb[0].mxu0
        %v6019 = vadd.f32 %v5858, %v6018
        %v6020 = vpop.f32.mrb[0].mxu0
        %v6021 = vpop.f32.mrb[0].mxu0
        %v6022 = vadd.f32 %v5861, %v6021
        %v6023 = vpop.f32.mrb[0].mxu0
        %6024 = vmatprep.mubr.bf16.mxu0 0
        %6025 = vmatmul.mubr.bf16.gmra.mrb[0].mxu0 %v5608
        %v6026 = vpop.f32.mrb[0].mxu0
        %v6027 = vadd.f32 %v5866, %v6026
        %v6028 = vpop.f32.mrb[0].mxu0
        %v6029 = vpop.f32.mrb[0].mxu0
        %v6030 = vadd.f32 %v5869, %v6029
        %v6031 = vpop.f32.mrb[0].mxu0
        %6032 = vmatprep.mubr.bf16.mxu0 0
        %6033 = vmatmul.mubr.bf16.gmra.mrb[0].mxu0 %v5611
        %v6034 = vpop.f32.mrb[0].mxu0
        %v6035 = vadd.f32 %v5874, %v6034
        %v6036 = vpop.f32.mrb[0].mxu0
        %v6037 = vpop.f32.mrb[0].mxu0
        %v6038 = vadd.f32 %v5877, %v6037
        %v6039 = vpop.f32.mrb[0].mxu0
        %6040 = vmatprep.mubr.bf16.mxu0 0
        %6041 = vmatmul.mubr.bf16.gmra.mrb[0].mxu0 %v5614
        %v6042 = vpop.f32.mrb[0].mxu0
        %v6043 = vadd.f32 %v5882, %v6042
        %v6044 = vpop.f32.mrb[0].mxu0
        %v6045 = vpop.f32.mrb[0].mxu0
        %v6046 = vadd.f32 %v5885, %v6045
        %v6047 = vpop.f32.mrb[0].mxu0
        %6048 = vmatprep.mubr.bf16.mxu0 0
        %6049 = vmatmul.mubr.bf16.gmra.mrb[0].mxu0 %v5617
        %v6050 = vpop.f32.mrb[0].mxu0
        %v6051 = vadd.f32 %v5890, %v6050
        %v6052 = vpop.f32.mrb[0].mxu0
        %v6053 = vpop.f32.mrb[0].mxu0
        %v6054 = vadd.f32 %v5893, %v6053
        %v6055 = vpop.f32.mrb[0].mxu0
        %6056 = vmatprep.mubr.bf16.mxu0 0
        %6057 = vmatmul.mubr.bf16.gmra.mrb[0].mxu0 %v5620
        %v6058 = vpop.f32.mrb[0].mxu0
        %v6059 = vadd.f32 %v5898, %v6058
        %v6060 = vpop.f32.mrb[0].mxu0
        %v6061 = vpop.f32.mrb[0].mxu0
        %v6062 = vadd.f32 %v5901, %v6061
        %v6063 = vpop.f32.mrb[0].mxu0
        %6064 = vmatprep.mubr.bf16.mxu0 0
        %6065 = vmatmul.mubr.bf16.gmra.mrb[0].mxu0 %v5623
        %v6066 = vpop.f32.mrb[0].mxu0
        %v6067 = vadd.f32 %v5906, %v6066
        %v6068 = vpop.f32.mrb[0].mxu0
        %v6069 = vpop.f32.mrb[0].mxu0
        %v6070 = vadd.f32 %v5909, %v6069
        %v6071 = vpop.f32.mrb[0].mxu0
        %6072 = vmatprep.mubr.bf16.mxu0 0
        %6073 = vmatmul.mubr.bf16.gmra.mrb[0].mxu0 %v5626
        %v6074 = vpop.f32.mrb[0].mxu0
        %v6075 = vadd.f32 %v5914, %v6074
        %v6076 = vpop.f32.mrb[0].mxu0
        %v6077 = vpop.f32.mrb[0].mxu0
        %v6078 = vadd.f32 %v5917, %v6077
        %v6079 = vpop.f32.mrb[0].mxu0
        %6080 = vmatprep.mubr.bf16.mxu0 0
        %6081 = vmatmul.mubr.bf16.gmra.mrb[0].mxu0 %v5629
        %v6082 = vpop.f32.mrb[0].mxu0
        %v6083 = vadd.f32 %v5922, %v6082
        %v6084 = vpop.f32.mrb[0].mxu0
        %v6085 = vpop.f32.mrb[0].mxu0
        %v6086 = vadd.f32 %v5925, %v6085
        %v6087 = vpop.f32.mrb[0].mxu0
        %6088 = vmatprep.mubr.bf16.mxu0 0
        %6089 = vmatmul.mubr.bf16.gmra.mrb[0].mxu0 %v5632
        %v6090 = vpop.f32.mrb[0].mxu0
        %v6091 = vadd.f32 %v5930, %v6090
        %v6092 = vpop.f32.mrb[0].mxu0
        %v6093 = vpop.f32.mrb[0].mxu0
        %v6094 = vadd.f32 %v5933, %v6093
        %v6095 = vpop.f32.mrb[0].mxu0
        %6096 = vmatprep.mubr.bf16.mxu0 0
        %6097 = vmatmul.mubr.bf16.gmra.mrb[0].mxu0 %v5635
        %v6098 = vpop.f32.mrb[0].mxu0
        %v6099 = vadd.f32 %v5938, %v6098
        %v6100 = vpop.f32.mrb[0].mxu0
        %v6101 = vpop.f32.mrb[0].mxu0
        %v6102 = vadd.f32 %v5941, %v6101
        %v6103 = vpop.f32.mrb[0].mxu0
        %6104 = vmatprep.mubr.bf16.mxu0 0
        %6105 = vmatmul.mubr.bf16.gmra.mrb[0].mxu0 %v5638
        %v6106 = vpop.f32.mrb[0].mxu0
        %v6107 = vadd.f32 %v5946, %v6106
        %v6108 = vpop.f32.mrb[0].mxu0
        %v6109 = vpop.f32.mrb[0].mxu0
        %v6110 = vadd.f32 %v5949, %v6109
        %v6111 = vpop.f32.mrb[0].mxu0
        %6112 = vmatprep.mubr.bf16.mxu0 0
        %6113 = vmatmul.mubr.bf16.gmra.mrb[0].mxu0 %v5641
        %v6114 = vpop.f32.mrb[0].mxu0
        %v6115 = vadd.f32 %v5954, %v6114
        %v6116 = vpop.f32.mrb[0].mxu0
        %v6117 = vpop.f32.mrb[0].mxu0
        %v6118 = vadd.f32 %v5957, %v6117
        %v6119 = vpop.f32.mrb[0].mxu0
        %6120 = vmatprep.mubr.bf16.mxu0 0
        %6121 = vmatmul.mubr.bf16.gmra.mrb[0].mxu0 %v5644
        %v6122 = vpop.f32.mrb[0].mxu0
        %v6123 = vadd.f32 %v5962, %v6122
        %v6124 = vpop.f32.mrb[0].mxu0
        %v6125 = vpop.f32.mrb[0].mxu0
        %v6126 = vadd.f32 %v5965, %v6125
        %v6127 = vpop.f32.mrb[0].mxu0
        %6128 = vdwg.mxu0
        %v6129 = vld [vmem:[#allocation16] sm:$0x1]
        %v6131 = vlaneseq
        %v6132 = vshrl.u32 %v6131, 7
        %v6133 = vsub.s32 0, %v6132
        %v6134 = vrot.slane %v6129, %v6133
        %v6136 = vadd.f32 %v6003, %v6134
        %v6137 = vadd.f32 %v6006, %v6134
        %v6138 = vadd.f32 %v6011, %v6134
        %v6139 = vadd.f32 %v6014, %v6134
        %v6140 = vadd.f32 %v6019, %v6134
        %v6141 = vadd.f32 %v6022, %v6134
        %v6142 = vadd.f32 %v6027, %v6134
        %v6143 = vadd.f32 %v6030, %v6134
        %v6144 = vadd.f32 %v6035, %v6134
        %v6145 = vadd.f32 %v6038, %v6134
        %v6146 = vadd.f32 %v6043, %v6134
        %v6147 = vadd.f32 %v6046, %v6134
        %v6148 = vadd.f32 %v6051, %v6134
        %v6149 = vadd.f32 %v6054, %v6134
        %v6150 = vadd.f32 %v6059, %v6134
        %v6151 = vadd.f32 %v6062, %v6134
        %v6152 = vadd.f32 %v6067, %v6134
        %v6153 = vadd.f32 %v6070, %v6134
        %v6154 = vadd.f32 %v6075, %v6134
        %v6155 = vadd.f32 %v6078, %v6134
        %v6156 = vadd.f32 %v6083, %v6134
        %v6157 = vadd.f32 %v6086, %v6134
        %v6158 = vadd.f32 %v6091, %v6134
        %v6159 = vadd.f32 %v6094, %v6134
        %v6160 = vadd.f32 %v6099, %v6134
        %v6161 = vadd.f32 %v6102, %v6134
        %v6162 = vadd.f32 %v6107, %v6134
        %v6163 = vadd.f32 %v6110, %v6134
        %v6164 = vadd.f32 %v6115, %v6134
        %v6165 = vadd.f32 %v6118, %v6134
        %v6166 = vadd.f32 %v6123, %v6134
        %v6167 = vadd.f32 %v6126, %v6134
        %6168 = vst [vmem:[%s437] sm:$0xff] %v6136
        %6169 = vst [vmem:[%s437 + $0x8] sm:$0xff] %v6137
        %6170 = vst [vmem:[%s437 + $0x10] sm:$0xff] %v6138
        %6171 = vst [vmem:[%s437 + $0x18] sm:$0xff] %v6139
        %6172 = vst [vmem:[%s437 + $0x20] sm:$0xff] %v6140
        %6173 = vst [vmem:[%s437 + $0x28] sm:$0xff] %v6141
        %6174 = vst [vmem:[%s437 + $0x30] sm:$0xff] %v6142
        %6175 = vst [vmem:[%s437 + $0x38] sm:$0xff] %v6143
        %6176 = vst [vmem:[%s437 + $0x40] sm:$0xff] %v6144
        %6177 = vst [vmem:[%s437 + $0x48] sm:$0xff] %v6145
        %6178 = vst [vmem:[%s437 + $0x50] sm:$0xff] %v6146
        %6179 = vst [vmem:[%s437 + $0x58] sm:$0xff] %v6147
        %6180 = vst [vmem:[%s437 + $0x60] sm:$0xff] %v6148
        %6181 = vst [vmem:[%s437 + $0x68] sm:$0xff] %v6149
        %6182 = vst [vmem:[%s437 + $0x70] sm:$0xff] %v6150
        %6183 = vst [vmem:[%s437 + $0x78] sm:$0xff] %v6151
        %6184 = vst [vmem:[%s437 + $0x80] sm:$0xff] %v6152
        %6185 = vst [vmem:[%s437 + $0x88] sm:$0xff] %v6153
        %6186 = vst [vmem:[%s437 + $0x90] sm:$0xff] %v6154
        %6187 = vst [vmem:[%s437 + $0x98] sm:$0xff] %v6155
        %6188 = vst [vmem:[%s437 + $0xa0] sm:$0xff] %v6156
        %6189 = vst [vmem:[%s437 + $0xa8] sm:$0xff] %v6157
        %6190 = vst [vmem:[%s437 + $0xb0] sm:$0xff] %v6158
        %6191 = vst [vmem:[%s437 + $0xb8] sm:$0xff] %v6159
        %6192 = vst [vmem:[%s437 + $0xc0] sm:$0xff] %v6160
        %6193 = vst [vmem:[%s437 + $0xc8] sm:$0xff] %v6161
        %6194 = vst [vmem:[%s437 + $0xd0] sm:$0xff] %v6162
        %6195 = vst [vmem:[%s437 + $0xd8] sm:$0xff] %v6163
        %6196 = vst [vmem:[%s437 + $0xe0] sm:$0xff] %v6164
        %6197 = vst [vmem:[%s437 + $0xe8] sm:$0xff] %v6165
        %6198 = vst [vmem:[%s437 + $0xf0] sm:$0xff] %v6166
        %6199 = vst [vmem:[%s437 + $0xf8] sm:$0xff] %v6167
        %s6200 = sand.u32 %s226, 1
        %s6201 = scalar_lea.sflag [#allocation6], %s6200
        %s6202 = sand.u32 %s226, 1
        %s6203 = smul.addr %s6202, 256
        %s6204 = scalar_lea.vmem [#allocation18], %s6203
        // Predicated region
        $region93: #{resblock_pallas.1} parent=51 // pred_check
          %p6205 = pneg %p236
        $region94: #{resblock_pallas.1} parent=51 // pred_check_branch
          %6207 = sbr.rel (%p6205) target = $region96
        $region95: #{resblock_pallas.1} parent=51 // pred_region
          %s6208 = smul.u32 32, %s34
          %s6210 = ssub.s32 4096, 4096
          %6211 = vsyncadd %s6201, %s6210
          %s6212 = smul.addr %s33, 32
          %s6213 = sadd.s32 %s6208, %s6212
          %s6214 = smul.addr %s6213, 128
          %s6215 = scalar_lea.hbm %s8, %s6214
          %s6216 = sshll.u32 %s6204, 4
          %s6217 = int_to_ptr.vmem [resolvable:$true] %s6216
          %6222 = dma.vmem_to_hbm [thread:$0]  %s6217, 4096, %s6215, %s6201, 128, 128, 8
        $region96: #{resblock_pallas.1} parent=51 // pred_fallthru
          _
      $region52: #{resblock_pallas.1} parent=5 // pred_fallthru
        _
      %p6223 = scmp.le.s32.totalorder 2, %s24
      // Predicated region
      $region97: #{resblock_pallas.1} parent=5 // pred_check
        %p6224 = pneg %p6223
      $region98: #{resblock_pallas.1} parent=5 // pred_check_branch
        %6226 = sbr.rel (%p6224) target = $region100
      $region99: #{resblock_pallas.1} parent=5 // pred_region
        %s6227 = ssub.s32 %s24, 2
        // Predicated region
        $region101: #{resblock_pallas.1} parent=99 // pred_check
          %p6228 = pneg %p242
        $region102: #{resblock_pallas.1} parent=99 // pred_check_branch
          %6230 = sbr.rel (%p6228) target = $region104
        $region103: #{resblock_pallas.1} parent=99 // pred_region
          %s6231 = sand.u32 %s227, 1
          %s6232 = scalar_lea.sflag [#allocation6], %s6231
          %s6233 = sand.u32 %s227, 1
          %s6234 = smul.addr %s6233, 256
          %s6235 = scalar_lea.vmem [#allocation18], %s6234
          %6236 = dma.done %s6232, 4096
        $region104: #{resblock_pallas.1} parent=99 // pred_fallthru
          _
      $region100: #{resblock_pallas.1} parent=5 // pred_fallthru
        _
    $region6: #{resblock_pallas.1} parent=1 // loop_footer
      %s28 = sadd.s32 1, %s24
    $region7: #{resblock_pallas.1} parent=1 // loop_footer_branch
      %23 = sbr.rel target = $region3
    $region8: #{resblock_pallas.1} parent=1 // loop_exit
      _
    %6237 = vsyncpa [#allocation5], 1
    %s6238 = scalar_lea.sflag [#allocation5], 1
    %6239 = vsyncpa %s6238, 1
    %6240 = vsyncpa [#allocation8], 1
    %6241 = vsyncpa [#allocation11], 1
    %6242 = vsyncpa [#allocation14], 1
    %6243 = vsyncpa [#allocation17], 1
    %6244 = vsyncpa [#allocation6], 1
    %s6245 = scalar_lea.sflag [#allocation6], 1
    %6246 = vsyncpa %s6245, 1

</llo_original>
